<compile_context>
chip_gen: v7x
topology: tpu7x:2x2x1
jax: 0.10.0
libtpu: 0.0.40
codegen_flags: <defaults>
</compile_context>

<pallas_src>
import functools

import jax
import jax.numpy as jnp
from jax import lax
from jax.experimental import pallas as pl
from jax.experimental.pallas import tpu as pltpu

LANE = 128
SUBLANE = 8


def _round_up(x, m):
    return ((x + m - 1) // m) * m


def _largest_divisor_leq(n, cap):
    best = 1
    for d in range(1, n + 1):
        if n % d == 0 and d <= cap:
            best = d
    return best


def _pick_tile_rows(H, W, target_rows=2048):
    # largest divisor of H with TH*W <= target_rows (keeps tiles VMEM-friendly)
    return _largest_divisor_leq(H, max(1, target_rows // max(W, 1)))


def _pick_row_chunk(TH, W, Kp, target_rows=512, budget_bytes=6 << 20):
    cap_budget = max(1, budget_bytes // max(4 * W * Kp, 1))
    desired = max(1, (target_rows + W - 1) // W)           # ~512 M-rows per matmul
    return _largest_divisor_leq(TH, max(1, min(cap_budget, desired)))


def _vmem_limit(est_bytes):
    # explicit scoped-VMEM limit: estimate + margin, capped at v7x physical.
    return int(min(max(est_bytes * 5 // 4 + (4 << 20), 16 << 20), 64 << 20))


# -----------------------------------------------------------------------------
# Conv3x3 ("same", no bias) on one (batch, H-tile) block + partial BN stats.
# Optionally applies the *previous* layer's BN affine + ReLU to the input tile
# right after load (fusion of bn_relu into the next conv's input path).
# -----------------------------------------------------------------------------
def _conv3x3_kernel(*refs, cin, row_chunk, apply_input_act):
    if apply_input_act:
        (x_ref, top_ref, bot_ref, sc_ref, sh_ref, w_ref,
         y_ref, sum_ref, sumsq_ref, xpad_ref, patch_ref) = refs
    else:
        (x_ref, top_ref, bot_ref, w_ref,
         y_ref, sum_ref, sumsq_ref, xpad_ref, patch_ref) = refs
        sc_ref = sh_ref = None

    _, TH, W, C = x_ref.shape                     # H-tile rows, width, channels
    Kp, coutp = w_ref.shape

    x = x_ref[0]                                   # (TH, W, C)
    if apply_input_act:
        scale = sc_ref[...].reshape(1, 1, C)
        shift = sh_ref[...].reshape(1, 1, C)
        x = jnp.maximum(x * scale + shift, 0.0)    # fused prev-layer BN + ReLU

    # ---- assemble zero-padded halo tile in VMEM --------------------------------
    # Halo rows arrive pre-activated (or exactly zero at the image boundary)
    # from the wrapper, so only the two 1-px W-border columns need zero fills.
    zcol = jnp.zeros((TH + 2, 1, C), jnp.float32)
    xpad_ref[:, 0:1, :] = zcol
    xpad_ref[:, W + 1:W + 2, :] = zcol
    xpad_ref[0:1, 1:W + 1, :] = top_ref[0]
    xpad_ref[TH + 1:TH + 2, 1:W + 1, :] = bot_ref[0]
    xpad_ref[1:TH + 1, 1:W + 1, :] = x

    # Patch K-columns beyond 9*cin line up with all-zero weight rows; zero them
    # once so uninitialized scratch cannot leak NaNs into the matmul.
    k_real = 9 * cin
    if Kp > k_real:
        patch_ref[:, k_real:] = jnp.zeros(
            (patch_ref.shape[0], Kp - k_real), patch_ref.dtype)

    w = w_ref[...]
    n_chunks = TH // row_chunk
    m = row_chunk * W
    s_tot = jnp.zeros((coutp,), jnp.float32)
    ss_tot = jnp.zeros((coutp,), jnp.float32)

    # Static chunk loop: patch scratch stays small and the im2col stores of
    # chunk c+1 can overlap the MXU pushes of chunk c (different VLIW slots).
    # TODO(synk): replace the per-tap slice+reshape with pltpu.roll-based kx
    # shifts if the vst slot shows up as the bottleneck in bundle dumps.
    for c in range(n_chunks):
        r = c * row_chunk
        for t in range(9):
            ky, kx = divmod(t, 3)
            win = xpad_ref[r + ky:r + ky + row_chunk, kx:kx + W, :cin]
            patch_ref[:, t * cin:(t + 1) * cin] = (
                win.reshape(m, cin).astype(patch_ref.dtype))
        acc = jnp.dot(patch_ref[...], w, preferred_element_type=jnp.float32)
        y_ref[0, r:r + row_chunk] = (
            acc.reshape(row_chunk, W, coutp).astype(y_ref.dtype))
        s_tot = s_tot + jnp.sum(acc, axis=0)
        ss_tot = ss_tot + jnp.sum(acc * acc, axis=0)

    # Per-grid-point partial BN statistics (only sublane row 0 is meaningful;
    # the wrapper reduces over row 0) -> both grid axes stay "parallel".
    sum_ref[0, 0, 0:1, :] = s_tot[None, :]
    sumsq_ref[0, 0, 0:1, :] = ss_tot[None, :]


def conv3x3_stats(x_nhwc, halo_top, halo_bot, w_mat, *, cin, cout,
                  tile_rows, row_chunk=None, in_scale=None, in_shift=None):
    N, H, W, C = x_nhwc.shape
    Kp, coutp = w_mat.shape
    TH = tile_rows
    assert H % TH == 0, "tile_rows must divide H"
    HT = H // TH
    assert halo_top.shape == (N, HT, W, C) and halo_bot.shape == (N, HT, W, C)
    CR = row_chunk if row_chunk is not None else _pick_row_chunk(TH, W, Kp)
    assert TH % CR == 0, "row_chunk must divide tile_rows"
    apply_act = in_scale is not None
    Wp2 = _round_up(W + 2, SUBLANE)       # sublane-aligned halo scratch rows

    kernel = functools.partial(_conv3x3_kernel, cin=cin, row_chunk=CR,
                               apply_input_act=apply_act)

    in_specs = [
        pl.BlockSpec((1, TH, W, C), lambda n, h: (n, h, 0, 0)),
        pl.BlockSpec((1, 1, W, C), lambda n, h: (n, h, 0, 0)),
        pl.BlockSpec((1, 1, W, C), lambda n, h: (n, h, 0, 0)),
    ]
    args = [x_nhwc, halo_top, halo_bot]
    if apply_act:
        in_specs += [pl.BlockSpec((1, C), lambda n, h: (0, 0)),
                     pl.BlockSpec((1, C), lambda n, h: (0, 0))]
        args += [in_scale, in_shift]
    # TODO(synk): single-buffer this grid-constant weight block
    # (pipeline_mode=pl.Buffered(1)) once verified on the target jax version.
    in_specs.append(pl.BlockSpec((Kp, coutp), lambda n, h: (0, 0)))
    args.append(w_mat)

    out_shapes = (
        jax.ShapeDtypeStruct((N, H, W, coutp), jnp.float32),
        jax.ShapeDtypeStruct((N, HT, SUBLANE, coutp), jnp.float32),  # partial sum
        jax.ShapeDtypeStruct((N, HT, SUBLANE, coutp), jnp.float32),  # partial sumsq
    )
    out_specs = (
        pl.BlockSpec((1, TH, W, coutp), lambda n, h: (n, h, 0, 0)),
        pl.BlockSpec((1, 1, SUBLANE, coutp), lambda n, h: (n, h, 0, 0)),
        pl.BlockSpec((1, 1, SUBLANE, coutp), lambda n, h: (n, h, 0, 0)),
    )
    scratch = [
        pltpu.VMEM((TH + 2, Wp2, C), jnp.float32),   # zero-bordered halo tile
        pltpu.VMEM((CR * W, Kp), w_mat.dtype),       # per-chunk im2col patch
    ]

    # Cost hints with REAL (unpadded) channel counts.
    flops = 2 * N * H * W * 9 * cin * cout
    bytes_accessed = 4 * (N * H * W * cin + 9 * cin * cout + N * H * W * cout)

    w_item = jnp.dtype(w_mat.dtype).itemsize
    est = (2 * TH * W * C * 4              # double-buffered input tile
           + 2 * TH * W * coutp * 4        # double-buffered output tile
           + 4 * W * C * 4                 # halo rows (x2 buffers)
           + 2 * Kp * coutp * w_item       # weights (double-buffered)
           + (TH + 2) * Wp2 * C * 4        # xpad scratch
           + CR * W * Kp * w_item          # patch scratch
           + 4 * SUBLANE * coutp * 4)      # stats blocks

    return pl.pallas_call(
        kernel,
        out_shape=out_shapes,
        grid_spec=pltpu.PrefetchScalarGridSpec(
            num_scalar_prefetch=0,
            grid=(N, HT),
            in_specs=in_specs,
            out_specs=out_specs,
            scratch_shapes=scratch,
        ),
        compiler_params=pltpu.CompilerParams(
            dimension_semantics=("parallel", "parallel"),
            vmem_limit_bytes=_vmem_limit(est)),
        cost_estimate=pl.CostEstimate(flops=flops, transcendentals=0,
                                      bytes_accessed=bytes_accessed),
    )(*args)


# -----------------------------------------------------------------------------
# Standalone fused BN-affine + ReLU (only needed after the last conv).
# Writes in place over its input (input_output_aliases) to save one HBM pass.
# -----------------------------------------------------------------------------
def _bn_relu_kernel(y_ref, scale_ref, shift_ref, o_ref):
    c = scale_ref.shape[-1]
    scale = scale_ref[...].reshape(1, 1, 1, c)
    shift = shift_ref[...].reshape(1, 1, 1, c)
    o_ref[...] = jnp.maximum(y_ref[...] * scale + shift, 0.0).astype(o_ref.dtype)


def bn_relu(y_nhwc, scale, shift, *, tile_rows):
    N, H, W, c = y_nhwc.shape
    TH = tile_rows
    HT = H // TH
    est = 4 * TH * W * c * 4 + 4 * c * 4
    return pl.pallas_call(
        _bn_relu_kernel,
        out_shape=jax.ShapeDtypeStruct((N, H, W, c), jnp.float32),
        grid_spec=pltpu.PrefetchScalarGridSpec(
            num_scalar_prefetch=0,
            grid=(N, HT),
            in_specs=[
                pl.BlockSpec((1, TH, W, c), lambda n, h: (n, h, 0, 0)),
                pl.BlockSpec((1, c), lambda n, h: (0, 0)),
                pl.BlockSpec((1, c), lambda n, h: (0, 0)),
            ],
            out_specs=pl.BlockSpec((1, TH, W, c), lambda n, h: (n, h, 0, 0)),
        ),
        input_output_aliases={0: 0},          # overwrite y2 in place
        compiler_params=pltpu.CompilerParams(
            dimension_semantics=("parallel", "parallel"),
            vmem_limit_bytes=_vmem_limit(est)),
        cost_estimate=pl.CostEstimate(flops=2 * N * H * W * c, transcendentals=0,
                                      bytes_accessed=4 * (2 * N * H * W * c + 2 * c)),
    )(y_nhwc, scale, shift)


# -----------------------------------------------------------------------------
# Parameter packing (PyTorch layout -> once-padded-K Pallas layout) and wrapper.
# -----------------------------------------------------------------------------
def prepare_params(w1_pt, g1, b1, w2_pt, g2, b2, *, mxu_bf16=False):
    # mxu_bf16=True casts matmul operands to bf16 (f32 accumulation) for MXU
    # throughput; default False keeps exact f32 parity with the PyTorch module.
    cout, cin = int(w1_pt.shape[0]), int(w1_pt.shape[1])
    coutp = _round_up(cout, LANE)
    wdt = jnp.bfloat16 if mxu_bf16 else jnp.float32

    def pack_w(w_pt):
        co, ci = int(w_pt.shape[0]), int(w_pt.shape[1])
        # (Cout, Cin, 3, 3) -> (ky, kx, Cin, Cout) -> (9*Cin, Cout); row t*Cin+c.
        w = jnp.transpose(w_pt, (2, 3, 1, 0)).reshape(9 * ci, co)
        kp = _round_up(9 * ci, LANE)                 # pad K once (not per tap)
        w = jnp.pad(w, ((0, kp - 9 * ci), (0, coutp - co)))
        return w.astype(wdt)

    def pad_vec(v):
        # zero-padded gamma/beta keep padded channels exactly zero downstream.
        return jnp.pad(v, (0, coutp - v.shape[0])).astype(jnp.float32)

    return dict(
        cin=cin, cout=cout, coutp=coutp,
        w1=pack_w(w1_pt), w2=pack_w(w2_pt),
        g1=pad_vec(g1), b1=pad_vec(b1),
        g2=pad_vec(g2), b2=pad_vec(b2),
    )


def _bn_affine(sum_p, sumsq_p, gamma, beta, cnt, eps):
    s = jnp.sum(sum_p[:, :, 0, :], axis=(0, 1))      # reduce per-(n,h) partials
    ss = jnp.sum(sumsq_p[:, :, 0, :], axis=(0, 1))
    mean = s / cnt
    # TODO(synk): single-pass E[x^2]-E[x]^2 can lose precision for very large
    # N*H*W; switch to a shifted/two-pass accumulation if tighter BN accuracy
    # is needed.
    var = jnp.maximum(ss / cnt - mean * mean, 0.0)    # biased var (PyTorch train BN)
    scale = gamma * lax.rsqrt(var + eps)
    shift = beta - mean * scale
    return scale.reshape(1, -1), shift.reshape(1, -1)


def _make_halos(x, tile_rows, act_fn=None):
    """Per-tile 1-row halos: (N, HT, W, C) top and bottom rows (zeros at the
    image boundary). Only 2 rows per tile are gathered -> negligible HBM cost."""
    N, H, W, C = x.shape
    TH = tile_rows
    HT = H // TH
    zero = jnp.zeros((N, 1, W, C), jnp.float32)
    if HT == 1:
        return zero, zero
    t = x[:, TH - 1:H - 1:TH]            # row h*TH-1   for tiles h = 1..HT-1
    b = x[:, TH:H:TH]                    # row (h+1)*TH for tiles h = 0..HT-2
    if act_fn is not None:
        t, b = act_fn(t), act_fn(b)
    top = jnp.concatenate([zero, t], axis=1)
    bot = jnp.concatenate([b, zero], axis=1)
    return top, bot


def double_conv(x_nchw, params, *, eps=1e-5, tile_rows=None, row_chunk=None):
    cin, cout, coutp = params["cin"], params["cout"], params["coutp"]
    x = jnp.transpose(x_nchw, (0, 2, 3, 1)).astype(jnp.float32)   # NCHW -> NHWC
    N, H, W, xc = x.shape
    assert xc == cin
    cnt = N * H * W

    TH = tile_rows if tile_rows is not None else _pick_tile_rows(H, W)
    assert H % TH == 0, "tile_rows must divide H"

    # conv1 + partial batch stats
    top0, bot0 = _make_halos(x, TH)
    y1, s1, ss1 = conv3x3_stats(x, top0, bot0, params["w1"], cin=cin, cout=cout,
                                tile_rows=TH, row_chunk=row_chunk)
    sc1, sh1 = _bn_affine(s1, ss1, params["g1"], params["b1"], cnt, eps)

    # BN1-apply + ReLU fused into conv2's input path (z1 never hits HBM).
    # Halo rows (2/TH fraction of the activation) get the same affine+ReLU in
    # XLA so out-of-image rows stay exactly zero.
    act1 = lambda v: jnp.maximum(
        v * sc1.reshape(1, 1, 1, -1) + sh1.reshape(1, 1, 1, -1), 0.0)
    top1, bot1 = _make_halos(y1, TH, act_fn=act1)
    y2, s2, ss2 = conv3x3_stats(y1, top1, bot1, params["w2"], cin=cout, cout=cout,
                                tile_rows=TH, row_chunk=row_chunk,
                                in_scale=sc1, in_shift=sh1)
    sc2, sh2 = _bn_affine(s2, ss2, params["g2"], params["b2"], cnt, eps)

    z2 = bn_relu(y2, sc2, sh2, tile_rows=TH)          # in-place over y2
    return jnp.transpose(z2[..., :cout], (0, 3, 1, 2))   # NHWC -> NCHW


# -----------------------------------------------------------------------------
# Pure-JAX reference (PyTorch semantics: train-mode BN with biased variance).
# -----------------------------------------------------------------------------
def reference(x, w1, g1, b1, w2, g2, b2, eps=1e-5):
    def conv(xx, w):
        return lax.conv_general_dilated(
            xx, w, (1, 1), 'SAME', dimension_numbers=('NCHW', 'OIHW', 'NCHW'))

    def bnrelu(y, g, b):
        mean = y.mean(axis=(0, 2, 3), keepdims=True)
        var = y.var(axis=(0, 2, 3), keepdims=True)
        yn = (y - mean) * lax.rsqrt(var + eps)
        return jnp.maximum(yn * g.reshape(1, -1, 1, 1) + b.reshape(1, -1, 1, 1), 0.0)

    y = bnrelu(conv(x, w1), g1, b1)
    return bnrelu(conv(y, w2), g2, b2)


if __name__ == "__main__":
    N, Cin, Cout, H, W = 2, 4, 8, 16, 16
    key = jax.random.PRNGKey(0)
    k1, k2, k3, k4, kx = jax.random.split(key, 5)

    # Deterministic synthetic parameters (matching module __init__ shapes).
    w1_pt = jax.random.normal(k1, (Cout, Cin, 3, 3), jnp.float32) * 0.1
    w2_pt = jax.random.normal(k2, (Cout, Cout, 3, 3), jnp.float32) * 0.1
    g1 = 1.0 + 0.1 * jax.random.normal(k3, (Cout,), jnp.float32)
    b1 = 0.1 * jax.random.normal(k4, (Cout,), jnp.float32)
    g2 = jnp.ones((Cout,), jnp.float32)
    b2 = jnp.zeros((Cout,), jnp.float32)

    x = jax.random.normal(kx, (N, Cin, H, W), jnp.float32)

    params = prepare_params(w1_pt, g1, b1, w2_pt, g2, b2)   # mxu_bf16=False (exact f32)
    # tile_rows=8 -> 2 H-tiles (exercises the halo path);
    # row_chunk=4 -> 2 M-chunks per tile (exercises the chunk loop).
    fwd = jax.jit(lambda xx: double_conv(xx, params, tile_rows=8, row_chunk=4))
    out = jax.block_until_ready(fwd(x))

    ref = reference(x, w1_pt, g1, b1, w2_pt, g2, b2)
    assert out.shape == (N, Cout, H, W)
    assert jnp.allclose(out, ref, atol=1e-4, rtol=1e-4), "mismatch vs JAX reference"

    print("KERNEL_OK")
</pallas_src>

<mosaic_0001>
module attributes {stable_mosaic.version = 11 : i64} {
  func.func @_bn_relu_kernel(%arg0: i32, %arg1: i32, %arg2: memref<1x8x16x128xf32, #tpu.memory_space<vmem>>, %arg3: memref<1x128xf32, #tpu.memory_space<vmem>>, %arg4: memref<1x128xf32, #tpu.memory_space<vmem>>, %arg5: memref<1x8x16x128xf32, #tpu.memory_space<vmem>>) attributes {dimension_semantics = [#tpu.dimension_semantics<parallel>, #tpu.dimension_semantics<parallel>], iteration_bounds = array<i64: 2, 2>, scalar_prefetch = 0 : i64, scratch_operands = 0 : i64, tpu.core_type = #tpu.core_type<tc>, window_params = [{transform_indices = @transform_0, window_bounds = array<i64: 1, 8, 16, 128>}, {pipeline_mode = #tpu.pipeline_mode<synchronous>, transform_indices = @transform_1, window_bounds = array<i64: 1, 128>}, {pipeline_mode = #tpu.pipeline_mode<synchronous>, transform_indices = @transform_2, window_bounds = array<i64: 1, 128>}, {transform_indices = @transform_3, window_bounds = array<i64: 1, 8, 16, 128>}]} {
    %c0 = arith.constant 0 : index
    %c0_0 = arith.constant 0 : index
    %0 = vector.load %arg3[%c0, %c0_0] : memref<1x128xf32, #tpu.memory_space<vmem>>, vector<1x128xf32>
    %1 = vector.shape_cast %0 : vector<1x128xf32> to vector<1x1x1x128xf32>
    %c0_1 = arith.constant 0 : index
    %c0_2 = arith.constant 0 : index
    %2 = vector.load %arg4[%c0_1, %c0_2] : memref<1x128xf32, #tpu.memory_space<vmem>>, vector<1x128xf32>
    %3 = vector.shape_cast %2 : vector<1x128xf32> to vector<1x1x1x128xf32>
    %c0_3 = arith.constant 0 : index
    %c0_4 = arith.constant 0 : index
    %c0_5 = arith.constant 0 : index
    %c0_6 = arith.constant 0 : index
    %4 = vector.load %arg2[%c0_3, %c0_4, %c0_5, %c0_6] : memref<1x8x16x128xf32, #tpu.memory_space<vmem>>, vector<1x8x16x128xf32>
    %5 = vector.broadcast %1 : vector<1x1x1x128xf32> to vector<1x8x16x128xf32>
    %6 = arith.mulf %4, %5 : vector<1x8x16x128xf32>
    %7 = vector.broadcast %3 : vector<1x1x1x128xf32> to vector<1x8x16x128xf32>
    %8 = arith.addf %6, %7 : vector<1x8x16x128xf32>
    %cst = arith.constant 0.000000e+00 : f32
    %9 = vector.broadcast %cst : f32 to vector<1x8x16x128xf32>
    %10 = arith.maximumf %8, %9 : vector<1x8x16x128xf32>
    %c0_7 = arith.constant 0 : index
    %c0_8 = arith.constant 0 : index
    %c0_9 = arith.constant 0 : index
    %c0_10 = arith.constant 0 : index
    %11 = vector.load %arg5[%c0_7, %c0_8, %c0_9, %c0_10] : memref<1x8x16x128xf32, #tpu.memory_space<vmem>>, vector<1x8x16x128xf32>
    tpu.vector_store %arg5[%c0_7, %c0_8, %c0_9, %c0_10], %10 {strides = array<i32>} : memref<1x8x16x128xf32, #tpu.memory_space<vmem>>, vector<1x8x16x128xf32>,
    return
  }
  func.func @transform_0(%arg0: i32, %arg1: i32) -> (i32, i32, i32, i32) {
    %c0_i32 = arith.constant 0 : i32
    %c0_i32_0 = arith.constant 0 : i32
    %c0_i32_1 = arith.constant 0 : i32
    return %arg0, %arg1, %c0_i32, %c0_i32_0 : i32, i32, i32, i32
  }
  func.func @transform_1(%arg0: i32, %arg1: i32) -> (i32, i32) {
    %c0_i32 = arith.constant 0 : i32
    %c0_i32_0 = arith.constant 0 : i32
    %c0_i32_1 = arith.constant 0 : i32
    return %c0_i32, %c0_i32_0 : i32, i32
  }
  func.func @transform_2(%arg0: i32, %arg1: i32) -> (i32, i32) {
    %c0_i32 = arith.constant 0 : i32
    %c0_i32_0 = arith.constant 0 : i32
    %c0_i32_1 = arith.constant 0 : i32
    return %c0_i32, %c0_i32_0 : i32, i32
  }
  func.func @transform_3(%arg0: i32, %arg1: i32) -> (i32, i32, i32, i32) {
    %c0_i32 = arith.constant 0 : i32
    %c0_i32_0 = arith.constant 0 : i32
    %c0_i32_1 = arith.constant 0 : i32
    return %arg0, %arg1, %c0_i32, %c0_i32_0 : i32, i32, i32, i32
  }
}

module attributes {stable_mosaic.version = 11 : i64} {
  func.func @_conv3x3_kernel(%arg0: i32, %arg1: i32, %arg2: memref<1x8x16x4xf32, #tpu.memory_space<vmem>>, %arg3: memref<1x1x16x4xf32, #tpu.memory_space<vmem>>, %arg4: memref<1x1x16x4xf32, #tpu.memory_space<vmem>>, %arg5: memref<128x128xf32, #tpu.memory_space<vmem>>, %arg6: memref<1x8x16x128xf32, #tpu.memory_space<vmem>>, %arg7: memref<1x1x8x128xf32, #tpu.memory_space<vmem>>, %arg8: memref<1x1x8x128xf32, #tpu.memory_space<vmem>>, %arg9: memref<10x24x4xf32, #tpu.memory_space<vmem>>, %arg10: memref<64x128xf32, #tpu.memory_space<vmem>>) attributes {dimension_semantics = [#tpu.dimension_semantics<parallel>, #tpu.dimension_semantics<parallel>], iteration_bounds = array<i64: 2, 2>, scalar_prefetch = 0 : i64, scratch_operands = 2 : i64, tpu.core_type = #tpu.core_type<tc>, window_params = [{transform_indices = @transform_0, window_bounds = array<i64: 1, 8, 16, 4>}, {transform_indices = @transform_1, window_bounds = array<i64: 1, 1, 16, 4>}, {transform_indices = @transform_2, window_bounds = array<i64: 1, 1, 16, 4>}, {pipeline_mode = #tpu.pipeline_mode<synchronous>, transform_indices = @transform_3, window_bounds = array<i64: 128, 128>}, {transform_indices = @transform_4, window_bounds = array<i64: 1, 8, 16, 128>}, {transform_indices = @transform_5, window_bounds = array<i64: 1, 1, 8, 128>}, {transform_indices = @transform_6, window_bounds = array<i64: 1, 1, 8, 128>}]} {
    %c0 = arith.constant 0 : index
    %c0_0 = arith.constant 0 : index
    %c0_1 = arith.constant 0 : index
    %c0_2 = arith.constant 0 : index
    %0 = vector.load %arg2[%c0, %c0_0, %c0_1, %c0_2] : memref<1x8x16x4xf32, #tpu.memory_space<vmem>>, vector<1x8x16x4xf32>
    %1 = vector.shape_cast %0 : vector<1x8x16x4xf32> to vector<8x16x4xf32>
    %cst = arith.constant 0.000000e+00 : f32
    %2 = vector.broadcast %cst : f32 to vector<10x1x4xf32>
    %c0_3 = arith.constant 0 : index
    %c0_4 = arith.constant 0 : index
    %c0_5 = arith.constant 0 : index
    %3 = vector.load %arg9[%c0_3, %c0_4, %c0_5] : memref<10x24x4xf32, #tpu.memory_space<vmem>>, vector<10x1x4xf32>
    tpu.vector_store %arg9[%c0_3, %c0_4, %c0_5], %2 {strides = array<i32>} : memref<10x24x4xf32, #tpu.memory_space<vmem>>, vector<10x1x4xf32>,
    %c0_6 = arith.constant 0 : index
    %c17 = arith.constant 17 : index
    %c0_7 = arith.constant 0 : index
    %4 = vector.load %arg9[%c0_6, %c17, %c0_7] : memref<10x24x4xf32, #tpu.memory_space<vmem>>, vector<10x1x4xf32>
    tpu.vector_store %arg9[%c0_6, %c17, %c0_7], %2 {strides = array<i32>} : memref<10x24x4xf32, #tpu.memory_space<vmem>>, vector<10x1x4xf32>,
    %c0_8 = arith.constant 0 : index
    %c0_9 = arith.constant 0 : index
    %c0_10 = arith.constant 0 : index
    %c0_11 = arith.constant 0 : index
    %5 = vector.load %arg3[%c0_8, %c0_9, %c0_10, %c0_11] : memref<1x1x16x4xf32, #tpu.memory_space<vmem>>, vector<1x1x16x4xf32>
    %6 = vector.shape_cast %5 : vector<1x1x16x4xf32> to vector<1x16x4xf32>
    %c0_12 = arith.constant 0 : index
    %c1 = arith.constant 1 : index
    %c0_13 = arith.constant 0 : index
    %7 = vector.load %arg9[%c0_12, %c1, %c0_13] : memref<10x24x4xf32, #tpu.memory_space<vmem>>, vector<1x16x4xf32>
    tpu.vector_store %arg9[%c0_12, %c1, %c0_13], %6 {strides = array<i32>} : memref<10x24x4xf32, #tpu.memory_space<vmem>>, vector<1x16x4xf32>,
    %c0_14 = arith.constant 0 : index
    %c0_15 = arith.constant 0 : index
    %c0_16 = arith.constant 0 : index
    %c0_17 = arith.constant 0 : index
    %8 = vector.load %arg4[%c0_14, %c0_15, %c0_16, %c0_17] : memref<1x1x16x4xf32, #tpu.memory_space<vmem>>, vector<1x1x16x4xf32>
    %9 = vector.shape_cast %8 : vector<1x1x16x4xf32> to vector<1x16x4xf32>
    %c9 = arith.constant 9 : index
    %c1_18 = arith.constant 1 : index
    %c0_19 = arith.constant 0 : index
    %10 = vector.load %arg9[%c9, %c1_18, %c0_19] : memref<10x24x4xf32, #tpu.memory_space<vmem>>, vector<1x16x4xf32>
    tpu.vector_store %arg9[%c9, %c1_18, %c0_19], %9 {strides = array<i32>} : memref<10x24x4xf32, #tpu.memory_space<vmem>>, vector<1x16x4xf32>,
    %c1_20 = arith.constant 1 : index
    %c1_21 = arith.constant 1 : index
    %c0_22 = arith.constant 0 : index
    %11 = vector.load %arg9[%c1_20, %c1_21, %c0_22] : memref<10x24x4xf32, #tpu.memory_space<vmem>>, vector<8x16x4xf32>
    tpu.vector_store %arg9[%c1_20, %c1_21, %c0_22], %1 {strides = array<i32>} : memref<10x24x4xf32, #tpu.memory_space<vmem>>, vector<8x16x4xf32>,
    %cst_23 = arith.constant 0.000000e+00 : f32
    %12 = vector.broadcast %cst_23 : f32 to vector<64x92xf32>
    %c0_24 = arith.constant 0 : index
    %c36 = arith.constant 36 : index
    %13 = vector.load %arg10[%c0_24, %c36] : memref<64x128xf32, #tpu.memory_space<vmem>>, vector<64x92xf32>
    tpu.vector_store %arg10[%c0_24, %c36], %12 {strides = array<i32>} : memref<64x128xf32, #tpu.memory_space<vmem>>, vector<64x92xf32>,
    %c0_25 = arith.constant 0 : index
    %c0_26 = arith.constant 0 : index
    %14 = vector.load %arg5[%c0_25, %c0_26] : memref<128x128xf32, #tpu.memory_space<vmem>>, vector<128x128xf32>
    %cst_27 = arith.constant 0.000000e+00 : f32
    %15 = vector.broadcast %cst_27 : f32 to vector<128xf32>
    %cst_28 = arith.constant 0.000000e+00 : f32
    %16 = vector.broadcast %cst_28 : f32 to vector<128xf32>
    %c0_29 = arith.constant 0 : index
    %c0_30 = arith.constant 0 : index
    %c0_31 = arith.constant 0 : index
    %17 = vector.load %arg9[%c0_29, %c0_30, %c0_31] : memref<10x24x4xf32, #tpu.memory_space<vmem>>, vector<4x16x4xf32>
    %18 = vector.shape_cast %17 : vector<4x16x4xf32> to vector<64x4xf32>
    %c0_32 = arith.constant 0 : index
    %c0_33 = arith.constant 0 : index
    %19 = vector.load %arg10[%c0_32, %c0_33] : memref<64x128xf32, #tpu.memory_space<vmem>>, vector<64x4xf32>
    tpu.vector_store %arg10[%c0_32, %c0_33], %18 {strides = array<i32>} : memref<64x128xf32, #tpu.memory_space<vmem>>, vector<64x4xf32>,
    %c0_34 = arith.constant 0 : index
    %c1_35 = arith.constant 1 : index
    %c0_36 = arith.constant 0 : index
    %20 = vector.load %arg9[%c0_34, %c1_35, %c0_36] : memref<10x24x4xf32, #tpu.memory_space<vmem>>, vector<4x16x4xf32>
    %21 = vector.shape_cast %20 : vector<4x16x4xf32> to vector<64x4xf32>
    %c0_37 = arith.constant 0 : index
    %c4 = arith.constant 4 : index
    %22 = vector.load %arg10[%c0_37, %c4] : memref<64x128xf32, #tpu.memory_space<vmem>>, vector<64x4xf32>
    tpu.vector_store %arg10[%c0_37, %c4], %21 {strides = array<i32>} : memref<64x128xf32, #tpu.memory_space<vmem>>, vector<64x4xf32>,
    %c0_38 = arith.constant 0 : index
    %c2 = arith.constant 2 : index
    %c0_39 = arith.constant 0 : index
    %23 = vector.load %arg9[%c0_38, %c2, %c0_39] : memref<10x24x4xf32, #tpu.memory_space<vmem>>, vector<4x16x4xf32>
    %24 = vector.shape_cast %23 : vector<4x16x4xf32> to vector<64x4xf32>
    %c0_40 = arith.constant 0 : index
    %c8 = arith.constant 8 : index
    %25 = vector.load %arg10[%c0_40, %c8] : memref<64x128xf32, #tpu.memory_space<vmem>>, vector<64x4xf32>
    tpu.vector_store %arg10[%c0_40, %c8], %24 {strides = array<i32>} : memref<64x128xf32, #tpu.memory_space<vmem>>, vector<64x4xf32>,
    %c1_41 = arith.constant 1 : index
    %c0_42 = arith.constant 0 : index
    %c0_43 = arith.constant 0 : index
    %26 = vector.load %arg9[%c1_41, %c0_42, %c0_43] : memref<10x24x4xf32, #tpu.memory_space<vmem>>, vector<4x16x4xf32>
    %27 = vector.shape_cast %26 : vector<4x16x4xf32> to vector<64x4xf32>
    %c0_44 = arith.constant 0 : index
    %c12 = arith.constant 12 : index
    %28 = vector.load %arg10[%c0_44, %c12] : memref<64x128xf32, #tpu.memory_space<vmem>>, vector<64x4xf32>
    tpu.vector_store %arg10[%c0_44, %c12], %27 {strides = array<i32>} : memref<64x128xf32, #tpu.memory_space<vmem>>, vector<64x4xf32>,
    %c1_45 = arith.constant 1 : index
    %c1_46 = arith.constant 1 : index
    %c0_47 = arith.constant 0 : index
    %29 = vector.load %arg9[%c1_45, %c1_46, %c0_47] : memref<10x24x4xf32, #tpu.memory_space<vmem>>, vector<4x16x4xf32>
    %30 = vector.shape_cast %29 : vector<4x16x4xf32> to vector<64x4xf32>
    %c0_48 = arith.constant 0 : index
    %c16 = arith.constant 16 : index
    %31 = vector.load %arg10[%c0_48, %c16] : memref<64x128xf32, #tpu.memory_space<vmem>>, vector<64x4xf32>
    tpu.vector_store %arg10[%c0_48, %c16], %30 {strides = array<i32>} : memref<64x128xf32, #tpu.memory_space<vmem>>, vector<64x4xf32>,
    %c1_49 = arith.constant 1 : index
    %c2_50 = arith.constant 2 : index
    %c0_51 = arith.constant 0 : index
    %32 = vector.load %arg9[%c1_49, %c2_50, %c0_51] : memref<10x24x4xf32, #tpu.memory_space<vmem>>, vector<4x16x4xf32>
    %33 = vector.shape_cast %32 : vector<4x16x4xf32> to vector<64x4xf32>
    %c0_52 = arith.constant 0 : index
    %c20 = arith.constant 20 : index
    %34 = vector.load %arg10[%c0_52, %c20] : memref<64x128xf32, #tpu.memory_space<vmem>>, vector<64x4xf32>
    tpu.vector_store %arg10[%c0_52, %c20], %33 {strides = array<i32>} : memref<64x128xf32, #tpu.memory_space<vmem>>, vector<64x4xf32>,
    %c2_53 = arith.constant 2 : index
    %c0_54 = arith.constant 0 : index
    %c0_55 = arith.constant 0 : index
    %35 = vector.load %arg9[%c2_53, %c0_54, %c0_55] : memref<10x24x4xf32, #tpu.memory_space<vmem>>, vector<4x16x4xf32>
    %36 = vector.shape_cast %35 : vector<4x16x4xf32> to vector<64x4xf32>
    %c0_56 = arith.constant 0 : index
    %c24 = arith.constant 24 : index
    %37 = vector.load %arg10[%c0_56, %c24] : memref<64x128xf32, #tpu.memory_space<vmem>>, vector<64x4xf32>
    tpu.vector_store %arg10[%c0_56, %c24], %36 {strides = array<i32>} : memref<64x128xf32, #tpu.memory_space<vmem>>, vector<64x4xf32>,
    %c2_57 = arith.constant 2 : index
    %c1_58 = arith.constant 1 : index
    %c0_59 = arith.constant 0 : index
    %38 = vector.load %arg9[%c2_57, %c1_58, %c0_59] : memref<10x24x4xf32, #tpu.memory_space<vmem>>, vector<4x16x4xf32>
    %39 = vector.shape_cast %38 : vector<4x16x4xf32> to vector<64x4xf32>
    %c0_60 = arith.constant 0 : index
    %c28 = arith.constant 28 : index
    %40 = vector.load %arg10[%c0_60, %c28] : memref<64x128xf32, #tpu.memory_space<vmem>>, vector<64x4xf32>
    tpu.vector_store %arg10[%c0_60, %c28], %39 {strides = array<i32>} : memref<64x128xf32, #tpu.memory_space<vmem>>, vector<64x4xf32>,
    %c2_61 = arith.constant 2 : index
    %c2_62 = arith.constant 2 : index
    %c0_63 = arith.constant 0 : index
    %41 = vector.load %arg9[%c2_61, %c2_62, %c0_63] : memref<10x24x4xf32, #tpu.memory_space<vmem>>, vector<4x16x4xf32>
    %42 = vector.shape_cast %41 : vector<4x16x4xf32> to vector<64x4xf32>
    %c0_64 = arith.constant 0 : index
    %c32 = arith.constant 32 : index
    %43 = vector.load %arg10[%c0_64, %c32] : memref<64x128xf32, #tpu.memory_space<vmem>>, vector<64x4xf32>
    tpu.vector_store %arg10[%c0_64, %c32], %42 {strides = array<i32>} : memref<64x128xf32, #tpu.memory_space<vmem>>, vector<64x4xf32>,
    %c0_65 = arith.constant 0 : index
    %c0_66 = arith.constant 0 : index
    %44 = vector.load %arg10[%c0_65, %c0_66] : memref<64x128xf32, #tpu.memory_space<vmem>>, vector<64x128xf32>
    %cst_67 = arith.constant dense<0.000000e+00> : vector<64x128xf32>
    %45 = tpu.matmul %44, %14, %cst_67 {dimension_numbers = #tpu.dot_dimension_numbers<[1], [0], [0], [1], [0, 0, 1, 1], [], []>} : vector<64x128xf32>, vector<128x128xf32>, vector<64x128xf32> -> vector<64x128xf32>
    %46 = vector.shape_cast %45 : vector<64x128xf32> to vector<4x16x128xf32>
    %c0_68 = arith.constant 0 : index
    %c0_69 = arith.constant 0 : index
    %c0_70 = arith.constant 0 : index
    %c0_71 = arith.constant 0 : index
    %47 = vector.load %arg6[%c0_68, %c0_69, %c0_70, %c0_71] : memref<1x8x16x128xf32, #tpu.memory_space<vmem>>, vector<1x4x16x128xf32>
    %48 = vector.shape_cast %47 : vector<1x4x16x128xf32> to vector<4x16x128xf32>
    %49 = vector.shape_cast %46 : vector<4x16x128xf32> to vector<1x4x16x128xf32>
    tpu.vector_store %arg6[%c0_68, %c0_69, %c0_70, %c0_71], %49 {strides = array<i32>} : memref<1x8x16x128xf32, #tpu.memory_space<vmem>>, vector<1x4x16x128xf32>,
    %cst_72 = arith.constant dense<0.000000e+00> : vector<128xf32>
    %50 = vector.multi_reduction <add>, %45, %cst_72 [0] : vector<64x128xf32> to vector<128xf32>
    %51 = arith.addf %15, %50 : vector<128xf32>
    %52 = arith.mulf %45, %45 : vector<64x128xf32>
    %cst_73 = arith.constant dense<0.000000e+00> : vector<128xf32>
    %53 = vector.multi_reduction <add>, %52, %cst_73 [0] : vector<64x128xf32> to vector<128xf32>
    %54 = arith.addf %16, %53 : vector<128xf32>
    %c4_74 = arith.constant 4 : index
    %c0_75 = arith.constant 0 : index
    %c0_76 = arith.constant 0 : index
    %55 = vector.load %arg9[%c4_74, %c0_75, %c0_76] : memref<10x24x4xf32, #tpu.memory_space<vmem>>, vector<4x16x4xf32>
    %56 = vector.shape_cast %55 : vector<4x16x4xf32> to vector<64x4xf32>
    %c0_77 = arith.constant 0 : index
    %c0_78 = arith.constant 0 : index
    %57 = vector.load %arg10[%c0_77, %c0_78] : memref<64x128xf32, #tpu.memory_space<vmem>>, vector<64x4xf32>
    tpu.vector_store %arg10[%c0_77, %c0_78], %56 {strides = array<i32>} : memref<64x128xf32, #tpu.memory_space<vmem>>, vector<64x4xf32>,
    %c4_79 = arith.constant 4 : index
    %c1_80 = arith.constant 1 : index
    %c0_81 = arith.constant 0 : index
    %58 = vector.load %arg9[%c4_79, %c1_80, %c0_81] : memref<10x24x4xf32, #tpu.memory_space<vmem>>, vector<4x16x4xf32>
    %59 = vector.shape_cast %58 : vector<4x16x4xf32> to vector<64x4xf32>
    %c0_82 = arith.constant 0 : index
    %c4_83 = arith.constant 4 : index
    %60 = vector.load %arg10[%c0_82, %c4_83] : memref<64x128xf32, #tpu.memory_space<vmem>>, vector<64x4xf32>
    tpu.vector_store %arg10[%c0_82, %c4_83], %59 {strides = array<i32>} : memref<64x128xf32, #tpu.memory_space<vmem>>, vector<64x4xf32>,
    %c4_84 = arith.constant 4 : index
    %c2_85 = arith.constant 2 : index
    %c0_86 = arith.constant 0 : index
    %61 = vector.load %arg9[%c4_84, %c2_85, %c0_86] : memref<10x24x4xf32, #tpu.memory_space<vmem>>, vector<4x16x4xf32>
    %62 = vector.shape_cast %61 : vector<4x16x4xf32> to vector<64x4xf32>
    %c0_87 = arith.constant 0 : index
    %c8_88 = arith.constant 8 : index
    %63 = vector.load %arg10[%c0_87, %c8_88] : memref<64x128xf32, #tpu.memory_space<vmem>>, vector<64x4xf32>
    tpu.vector_store %arg10[%c0_87, %c8_88], %62 {strides = array<i32>} : memref<64x128xf32, #tpu.memory_space<vmem>>, vector<64x4xf32>,
    %c5 = arith.constant 5 : index
    %c0_89 = arith.constant 0 : index
    %c0_90 = arith.constant 0 : index
    %64 = vector.load %arg9[%c5, %c0_89, %c0_90] : memref<10x24x4xf32, #tpu.memory_space<vmem>>, vector<4x16x4xf32>
    %65 = vector.shape_cast %64 : vector<4x16x4xf32> to vector<64x4xf32>
    %c0_91 = arith.constant 0 : index
    %c12_92 = arith.constant 12 : index
    %66 = vector.load %arg10[%c0_91, %c12_92] : memref<64x128xf32, #tpu.memory_space<vmem>>, vector<64x4xf32>
    tpu.vector_store %arg10[%c0_91, %c12_92], %65 {strides = array<i32>} : memref<64x128xf32, #tpu.memory_space<vmem>>, vector<64x4xf32>,
    %c5_93 = arith.constant 5 : index
    %c1_94 = arith.constant 1 : index
    %c0_95 = arith.constant 0 : index
    %67 = vector.load %arg9[%c5_93, %c1_94, %c0_95] : memref<10x24x4xf32, #tpu.memory_space<vmem>>, vector<4x16x4xf32>
    %68 = vector.shape_cast %67 : vector<4x16x4xf32> to vector<64x4xf32>
    %c0_96 = arith.constant 0 : index
    %c16_97 = arith.constant 16 : index
    %69 = vector.load %arg10[%c0_96, %c16_97] : memref<64x128xf32, #tpu.memory_space<vmem>>, vector<64x4xf32>
    tpu.vector_store %arg10[%c0_96, %c16_97], %68 {strides = array<i32>} : memref<64x128xf32, #tpu.memory_space<vmem>>, vector<64x4xf32>,
    %c5_98 = arith.constant 5 : index
    %c2_99 = arith.constant 2 : index
    %c0_100 = arith.constant 0 : index
    %70 = vector.load %arg9[%c5_98, %c2_99, %c0_100] : memref<10x24x4xf32, #tpu.memory_space<vmem>>, vector<4x16x4xf32>
    %71 = vector.shape_cast %70 : vector<4x16x4xf32> to vector<64x4xf32>
    %c0_101 = arith.constant 0 : index
    %c20_102 = arith.constant 20 : index
    %72 = vector.load %arg10[%c0_101, %c20_102] : memref<64x128xf32, #tpu.memory_space<vmem>>, vector<64x4xf32>
    tpu.vector_store %arg10[%c0_101, %c20_102], %71 {strides = array<i32>} : memref<64x128xf32, #tpu.memory_space<vmem>>, vector<64x4xf32>,
    %c6 = arith.constant 6 : index
    %c0_103 = arith.constant 0 : index
    %c0_104 = arith.constant 0 : index
    %73 = vector.load %arg9[%c6, %c0_103, %c0_104] : memref<10x24x4xf32, #tpu.memory_space<vmem>>, vector<4x16x4xf32>
    %74 = vector.shape_cast %73 : vector<4x16x4xf32> to vector<64x4xf32>
    %c0_105 = arith.constant 0 : index
    %c24_106 = arith.constant 24 : index
    %75 = vector.load %arg10[%c0_105, %c24_106] : memref<64x128xf32, #tpu.memory_space<vmem>>, vector<64x4xf32>
    tpu.vector_store %arg10[%c0_105, %c24_106], %74 {strides = array<i32>} : memref<64x128xf32, #tpu.memory_space<vmem>>, vector<64x4xf32>,
    %c6_107 = arith.constant 6 : index
    %c1_108 = arith.constant 1 : index
    %c0_109 = arith.constant 0 : index
    %76 = vector.load %arg9[%c6_107, %c1_108, %c0_109] : memref<10x24x4xf32, #tpu.memory_space<vmem>>, vector<4x16x4xf32>
    %77 = vector.shape_cast %76 : vector<4x16x4xf32> to vector<64x4xf32>
    %c0_110 = arith.constant 0 : index
    %c28_111 = arith.constant 28 : index
    %78 = vector.load %arg10[%c0_110, %c28_111] : memref<64x128xf32, #tpu.memory_space<vmem>>, vector<64x4xf32>
    tpu.vector_store %arg10[%c0_110, %c28_111], %77 {strides = array<i32>} : memref<64x128xf32, #tpu.memory_space<vmem>>, vector<64x4xf32>,
    %c6_112 = arith.constant 6 : index
    %c2_113 = arith.constant 2 : index
    %c0_114 = arith.constant 0 : index
    %79 = vector.load %arg9[%c6_112, %c2_113, %c0_114] : memref<10x24x4xf32, #tpu.memory_space<vmem>>, vector<4x16x4xf32>
    %80 = vector.shape_cast %79 : vector<4x16x4xf32> to vector<64x4xf32>
    %c0_115 = arith.constant 0 : index
    %c32_116 = arith.constant 32 : index
    %81 = vector.load %arg10[%c0_115, %c32_116] : memref<64x128xf32, #tpu.memory_space<vmem>>, vector<64x4xf32>
    tpu.vector_store %arg10[%c0_115, %c32_116], %80 {strides = array<i32>} : memref<64x128xf32, #tpu.memory_space<vmem>>, vector<64x4xf32>,
    %c0_117 = arith.constant 0 : index
    %c0_118 = arith.constant 0 : index
    %82 = vector.load %arg10[%c0_117, %c0_118] : memref<64x128xf32, #tpu.memory_space<vmem>>, vector<64x128xf32>
    %cst_119 = arith.constant dense<0.000000e+00> : vector<64x128xf32>
    %83 = tpu.matmul %82, %14, %cst_119 {dimension_numbers = #tpu.dot_dimension_numbers<[1], [0], [0], [1], [0, 0, 1, 1], [], []>} : vector<64x128xf32>, vector<128x128xf32>, vector<64x128xf32> -> vector<64x128xf32>
    %84 = vector.shape_cast %83 : vector<64x128xf32> to vector<4x16x128xf32>
    %c0_120 = arith.constant 0 : index
    %c4_121 = arith.constant 4 : index
    %c0_122 = arith.constant 0 : index
    %c0_123 = arith.constant 0 : index
    %85 = vector.load %arg6[%c0_120, %c4_121, %c0_122, %c0_123] : memref<1x8x16x128xf32, #tpu.memory_space<vmem>>, vector<1x4x16x128xf32>
    %86 = vector.shape_cast %85 : vector<1x4x16x128xf32> to vector<4x16x128xf32>
    %87 = vector.shape_cast %84 : vector<4x16x128xf32> to vector<1x4x16x128xf32>
    tpu.vector_store %arg6[%c0_120, %c4_121, %c0_122, %c0_123], %87 {strides = array<i32>} : memref<1x8x16x128xf32, #tpu.memory_space<vmem>>, vector<1x4x16x128xf32>,
    %cst_124 = arith.constant dense<0.000000e+00> : vector<128xf32>
    %88 = vector.multi_reduction <add>, %83, %cst_124 [0] : vector<64x128xf32> to vector<128xf32>
    %89 = arith.addf %51, %88 : vector<128xf32>
    %90 = arith.mulf %83, %83 : vector<64x128xf32>
    %cst_125 = arith.constant dense<0.000000e+00> : vector<128xf32>
    %91 = vector.multi_reduction <add>, %90, %cst_125 [0] : vector<64x128xf32> to vector<128xf32>
    %92 = arith.addf %54, %91 : vector<128xf32>
    %93 = vector.shape_cast %89 : vector<128xf32> to vector<1x128xf32>
    %c0_126 = arith.constant 0 : index
    %c0_127 = arith.constant 0 : index
    %c0_128 = arith.constant 0 : index
    %c0_129 = arith.constant 0 : index
    %94 = vector.load %arg7[%c0_126, %c0_127, %c0_128, %c0_129] : memref<1x1x8x128xf32, #tpu.memory_space<vmem>>, vector<1x1x1x128xf32>
    %95 = vector.shape_cast %94 : vector<1x1x1x128xf32> to vector<1x128xf32>
    %96 = vector.shape_cast %93 : vector<1x128xf32> to vector<1x1x1x128xf32>
    tpu.vector_store %arg7[%c0_126, %c0_127, %c0_128, %c0_129], %96 {strides = array<i32>} : memref<1x1x8x128xf32, #tpu.memory_space<vmem>>, vector<1x1x1x128xf32>,
    %97 = vector.shape_cast %92 : vector<128xf32> to vector<1x128xf32>
    %c0_130 = arith.constant 0 : index
    %c0_131 = arith.constant 0 : index
    %c0_132 = arith.constant 0 : index
    %c0_133 = arith.constant 0 : index
    %98 = vector.load %arg8[%c0_130, %c0_131, %c0_132, %c0_133] : memref<1x1x8x128xf32, #tpu.memory_space<vmem>>, vector<1x1x1x128xf32>
    %99 = vector.shape_cast %98 : vector<1x1x1x128xf32> to vector<1x128xf32>
    %100 = vector.shape_cast %97 : vector<1x128xf32> to vector<1x1x1x128xf32>
    tpu.vector_store %arg8[%c0_130, %c0_131, %c0_132, %c0_133], %100 {strides = array<i32>} : memref<1x1x8x128xf32, #tpu.memory_space<vmem>>, vector<1x1x1x128xf32>,
    return
  }
  func.func @transform_0(%arg0: i32, %arg1: i32) -> (i32, i32, i32, i32) {
    %c0_i32 = arith.constant 0 : i32
    %c0_i32_0 = arith.constant 0 : i32
    %c0_i32_1 = arith.constant 0 : i32
    return %arg0, %arg1, %c0_i32, %c0_i32_0 : i32, i32, i32, i32
  }
  func.func @transform_1(%arg0: i32, %arg1: i32) -> (i32, i32, i32, i32) {
    %c0_i32 = arith.constant 0 : i32
    %c0_i32_0 = arith.constant 0 : i32
    %c0_i32_1 = arith.constant 0 : i32
    return %arg0, %arg1, %c0_i32, %c0_i32_0 : i32, i32, i32, i32
  }
  func.func @transform_2(%arg0: i32, %arg1: i32) -> (i32, i32, i32, i32) {
    %c0_i32 = arith.constant 0 : i32
    %c0_i32_0 = arith.constant 0 : i32
    %c0_i32_1 = arith.constant 0 : i32
    return %arg0, %arg1, %c0_i32, %c0_i32_0 : i32, i32, i32, i32
  }
  func.func @transform_3(%arg0: i32, %arg1: i32) -> (i32, i32) {
    %c0_i32 = arith.constant 0 : i32
    %c0_i32_0 = arith.constant 0 : i32
    %c0_i32_1 = arith.constant 0 : i32
    return %c0_i32, %c0_i32_0 : i32, i32
  }
  func.func @transform_4(%arg0: i32, %arg1: i32) -> (i32, i32, i32, i32) {
    %c0_i32 = arith.constant 0 : i32
    %c0_i32_0 = arith.constant 0 : i32
    %c0_i32_1 = arith.constant 0 : i32
    return %arg0, %arg1, %c0_i32, %c0_i32_0 : i32, i32, i32, i32
  }
  func.func @transform_5(%arg0: i32, %arg1: i32) -> (i32, i32, i32, i32) {
    %c0_i32 = arith.constant 0 : i32
    %c0_i32_0 = arith.constant 0 : i32
    %c0_i32_1 = arith.constant 0 : i32
    return %arg0, %arg1, %c0_i32, %c0_i32_0 : i32, i32, i32, i32
  }
  func.func @transform_6(%arg0: i32, %arg1: i32) -> (i32, i32, i32, i32) {
    %c0_i32 = arith.constant 0 : i32
    %c0_i32_0 = arith.constant 0 : i32
    %c0_i32_1 = arith.constant 0 : i32
    return %arg0, %arg1, %c0_i32, %c0_i32_0 : i32, i32, i32, i32
  }
}

module attributes {stable_mosaic.version = 11 : i64} {
  func.func @_conv3x3_kernel(%arg0: i32, %arg1: i32, %arg2: memref<1x8x16x128xf32, #tpu.memory_space<vmem>>, %arg3: memref<1x1x16x128xf32, #tpu.memory_space<vmem>>, %arg4: memref<1x1x16x128xf32, #tpu.memory_space<vmem>>, %arg5: memref<1x128xf32, #tpu.memory_space<vmem>>, %arg6: memref<1x128xf32, #tpu.memory_space<vmem>>, %arg7: memref<128x128xf32, #tpu.memory_space<vmem>>, %arg8: memref<1x8x16x128xf32, #tpu.memory_space<vmem>>, %arg9: memref<1x1x8x128xf32, #tpu.memory_space<vmem>>, %arg10: memref<1x1x8x128xf32, #tpu.memory_space<vmem>>, %arg11: memref<10x24x128xf32, #tpu.memory_space<vmem>>, %arg12: memref<64x128xf32, #tpu.memory_space<vmem>>) attributes {dimension_semantics = [#tpu.dimension_semantics<parallel>, #tpu.dimension_semantics<parallel>], iteration_bounds = array<i64: 2, 2>, scalar_prefetch = 0 : i64, scratch_operands = 2 : i64, tpu.core_type = #tpu.core_type<tc>, window_params = [{transform_indices = @transform_0, window_bounds = array<i64: 1, 8, 16, 128>}, {transform_indices = @transform_1, window_bounds = array<i64: 1, 1, 16, 128>}, {transform_indices = @transform_2, window_bounds = array<i64: 1, 1, 16, 128>}, {pipeline_mode = #tpu.pipeline_mode<synchronous>, transform_indices = @transform_3, window_bounds = array<i64: 1, 128>}, {pipeline_mode = #tpu.pipeline_mode<synchronous>, transform_indices = @transform_4, window_bounds = array<i64: 1, 128>}, {pipeline_mode = #tpu.pipeline_mode<synchronous>, transform_indices = @transform_5, window_bounds = array<i64: 128, 128>}, {transform_indices = @transform_6, window_bounds = array<i64: 1, 8, 16, 128>}, {transform_indices = @transform_7, window_bounds = array<i64: 1, 1, 8, 128>}, {transform_indices = @transform_8, window_bounds = array<i64: 1, 1, 8, 128>}]} {
    %c0 = arith.constant 0 : index
    %c0_0 = arith.constant 0 : index
    %c0_1 = arith.constant 0 : index
    %c0_2 = arith.constant 0 : index
    %0 = vector.load %arg2[%c0, %c0_0, %c0_1, %c0_2] : memref<1x8x16x128xf32, #tpu.memory_space<vmem>>, vector<1x8x16x128xf32>
    %1 = vector.shape_cast %0 : vector<1x8x16x128xf32> to vector<8x16x128xf32>
    %c0_3 = arith.constant 0 : index
    %c0_4 = arith.constant 0 : index
    %2 = vector.load %arg5[%c0_3, %c0_4] : memref<1x128xf32, #tpu.memory_space<vmem>>, vector<1x128xf32>
    %3 = vector.shape_cast %2 : vector<1x128xf32> to vector<1x1x128xf32>
    %c0_5 = arith.constant 0 : index
    %c0_6 = arith.constant 0 : index
    %4 = vector.load %arg6[%c0_5, %c0_6] : memref<1x128xf32, #tpu.memory_space<vmem>>, vector<1x128xf32>
    %5 = vector.shape_cast %4 : vector<1x128xf32> to vector<1x1x128xf32>
    %6 = vector.broadcast %3 : vector<1x1x128xf32> to vector<8x16x128xf32>
    %7 = arith.mulf %1, %6 : vector<8x16x128xf32>
    %8 = vector.broadcast %5 : vector<1x1x128xf32> to vector<8x16x128xf32>
    %9 = arith.addf %7, %8 : vector<8x16x128xf32>
    %cst = arith.constant 0.000000e+00 : f32
    %10 = vector.broadcast %cst : f32 to vector<8x16x128xf32>
    %11 = arith.maximumf %9, %10 : vector<8x16x128xf32>
    %cst_7 = arith.constant 0.000000e+00 : f32
    %12 = vector.broadcast %cst_7 : f32 to vector<10x1x128xf32>
    %c0_8 = arith.constant 0 : index
    %c0_9 = arith.constant 0 : index
    %c0_10 = arith.constant 0 : index
    %13 = vector.load %arg11[%c0_8, %c0_9, %c0_10] : memref<10x24x128xf32, #tpu.memory_space<vmem>>, vector<10x1x128xf32>
    tpu.vector_store %arg11[%c0_8, %c0_9, %c0_10], %12 {strides = array<i32>} : memref<10x24x128xf32, #tpu.memory_space<vmem>>, vector<10x1x128xf32>,
    %c0_11 = arith.constant 0 : index
    %c17 = arith.constant 17 : index
    %c0_12 = arith.constant 0 : index
    %14 = vector.load %arg11[%c0_11, %c17, %c0_12] : memref<10x24x128xf32, #tpu.memory_space<vmem>>, vector<10x1x128xf32>
    tpu.vector_store %arg11[%c0_11, %c17, %c0_12], %12 {strides = array<i32>} : memref<10x24x128xf32, #tpu.memory_space<vmem>>, vector<10x1x128xf32>,
    %c0_13 = arith.constant 0 : index
    %c0_14 = arith.constant 0 : index
    %c0_15 = arith.constant 0 : index
    %c0_16 = arith.constant 0 : index
    %15 = vector.load %arg3[%c0_13, %c0_14, %c0_15, %c0_16] : memref<1x1x16x128xf32, #tpu.memory_space<vmem>>, vector<1x1x16x128xf32>
    %16 = vector.shape_cast %15 : vector<1x1x16x128xf32> to vector<1x16x128xf32>
    %c0_17 = arith.constant 0 : index
    %c1 = arith.constant 1 : index
    %c0_18 = arith.constant 0 : index
    %17 = vector.load %arg11[%c0_17, %c1, %c0_18] : memref<10x24x128xf32, #tpu.memory_space<vmem>>, vector<1x16x128xf32>
    tpu.vector_store %arg11[%c0_17, %c1, %c0_18], %16 {strides = array<i32>} : memref<10x24x128xf32, #tpu.memory_space<vmem>>, vector<1x16x128xf32>,
    %c0_19 = arith.constant 0 : index
    %c0_20 = arith.constant 0 : index
    %c0_21 = arith.constant 0 : index
    %c0_22 = arith.constant 0 : index
    %18 = vector.load %arg4[%c0_19, %c0_20, %c0_21, %c0_22] : memref<1x1x16x128xf32, #tpu.memory_space<vmem>>, vector<1x1x16x128xf32>
    %19 = vector.shape_cast %18 : vector<1x1x16x128xf32> to vector<1x16x128xf32>
    %c9 = arith.constant 9 : index
    %c1_23 = arith.constant 1 : index
    %c0_24 = arith.constant 0 : index
    %20 = vector.load %arg11[%c9, %c1_23, %c0_24] : memref<10x24x128xf32, #tpu.memory_space<vmem>>, vector<1x16x128xf32>
    tpu.vector_store %arg11[%c9, %c1_23, %c0_24], %19 {strides = array<i32>} : memref<10x24x128xf32, #tpu.memory_space<vmem>>, vector<1x16x128xf32>,
    %c1_25 = arith.constant 1 : index
    %c1_26 = arith.constant 1 : index
    %c0_27 = arith.constant 0 : index
    %21 = vector.load %arg11[%c1_25, %c1_26, %c0_27] : memref<10x24x128xf32, #tpu.memory_space<vmem>>, vector<8x16x128xf32>
    tpu.vector_store %arg11[%c1_25, %c1_26, %c0_27], %11 {strides = array<i32>} : memref<10x24x128xf32, #tpu.memory_space<vmem>>, vector<8x16x128xf32>,
    %cst_28 = arith.constant 0.000000e+00 : f32
    %22 = vector.broadcast %cst_28 : f32 to vector<64x56xf32>
    %c0_29 = arith.constant 0 : index
    %c72 = arith.constant 72 : index
    %23 = vector.load %arg12[%c0_29, %c72] : memref<64x128xf32, #tpu.memory_space<vmem>>, vector<64x56xf32>
    tpu.vector_store %arg12[%c0_29, %c72], %22 {strides = array<i32>} : memref<64x128xf32, #tpu.memory_space<vmem>>, vector<64x56xf32>,
    %c0_30 = arith.constant 0 : index
    %c0_31 = arith.constant 0 : index
    %24 = vector.load %arg7[%c0_30, %c0_31] : memref<128x128xf32, #tpu.memory_space<vmem>>, vector<128x128xf32>
    %cst_32 = arith.constant 0.000000e+00 : f32
    %25 = vector.broadcast %cst_32 : f32 to vector<128xf32>
    %cst_33 = arith.constant 0.000000e+00 : f32
    %26 = vector.broadcast %cst_33 : f32 to vector<128xf32>
    %c0_34 = arith.constant 0 : index
    %c0_35 = arith.constant 0 : index
    %c0_36 = arith.constant 0 : index
    %27 = vector.load %arg11[%c0_34, %c0_35, %c0_36] : memref<10x24x128xf32, #tpu.memory_space<vmem>>, vector<4x16x8xf32>
    %28 = vector.shape_cast %27 : vector<4x16x8xf32> to vector<64x8xf32>
    %c0_37 = arith.constant 0 : index
    %c0_38 = arith.constant 0 : index
    %29 = vector.load %arg12[%c0_37, %c0_38] : memref<64x128xf32, #tpu.memory_space<vmem>>, vector<64x8xf32>
    tpu.vector_store %arg12[%c0_37, %c0_38], %28 {strides = array<i32>} : memref<64x128xf32, #tpu.memory_space<vmem>>, vector<64x8xf32>,
    %c0_39 = arith.constant 0 : index
    %c1_40 = arith.constant 1 : index
    %c0_41 = arith.constant 0 : index
    %30 = vector.load %arg11[%c0_39, %c1_40, %c0_41] : memref<10x24x128xf32, #tpu.memory_space<vmem>>, vector<4x16x8xf32>
    %31 = vector.shape_cast %30 : vector<4x16x8xf32> to vector<64x8xf32>
    %c0_42 = arith.constant 0 : index
    %c8 = arith.constant 8 : index
    %32 = vector.load %arg12[%c0_42, %c8] : memref<64x128xf32, #tpu.memory_space<vmem>>, vector<64x8xf32>
    tpu.vector_store %arg12[%c0_42, %c8], %31 {strides = array<i32>} : memref<64x128xf32, #tpu.memory_space<vmem>>, vector<64x8xf32>,
    %c0_43 = arith.constant 0 : index
    %c2 = arith.constant 2 : index
    %c0_44 = arith.constant 0 : index
    %33 = vector.load %arg11[%c0_43, %c2, %c0_44] : memref<10x24x128xf32, #tpu.memory_space<vmem>>, vector<4x16x8xf32>
    %34 = vector.shape_cast %33 : vector<4x16x8xf32> to vector<64x8xf32>
    %c0_45 = arith.constant 0 : index
    %c16 = arith.constant 16 : index
    %35 = vector.load %arg12[%c0_45, %c16] : memref<64x128xf32, #tpu.memory_space<vmem>>, vector<64x8xf32>
    tpu.vector_store %arg12[%c0_45, %c16], %34 {strides = array<i32>} : memref<64x128xf32, #tpu.memory_space<vmem>>, vector<64x8xf32>,
    %c1_46 = arith.constant 1 : index
    %c0_47 = arith.constant 0 : index
    %c0_48 = arith.constant 0 : index
    %36 = vector.load %arg11[%c1_46, %c0_47, %c0_48] : memref<10x24x128xf32, #tpu.memory_space<vmem>>, vector<4x16x8xf32>
    %37 = vector.shape_cast %36 : vector<4x16x8xf32> to vector<64x8xf32>
    %c0_49 = arith.constant 0 : index
    %c24 = arith.constant 24 : index
    %38 = vector.load %arg12[%c0_49, %c24] : memref<64x128xf32, #tpu.memory_space<vmem>>, vector<64x8xf32>
    tpu.vector_store %arg12[%c0_49, %c24], %37 {strides = array<i32>} : memref<64x128xf32, #tpu.memory_space<vmem>>, vector<64x8xf32>,
    %c1_50 = arith.constant 1 : index
    %c1_51 = arith.constant 1 : index
    %c0_52 = arith.constant 0 : index
    %39 = vector.load %arg11[%c1_50, %c1_51, %c0_52] : memref<10x24x128xf32, #tpu.memory_space<vmem>>, vector<4x16x8xf32>
    %40 = vector.shape_cast %39 : vector<4x16x8xf32> to vector<64x8xf32>
    %c0_53 = arith.constant 0 : index
    %c32 = arith.constant 32 : index
    %41 = vector.load %arg12[%c0_53, %c32] : memref<64x128xf32, #tpu.memory_space<vmem>>, vector<64x8xf32>
    tpu.vector_store %arg12[%c0_53, %c32], %40 {strides = array<i32>} : memref<64x128xf32, #tpu.memory_space<vmem>>, vector<64x8xf32>,
    %c1_54 = arith.constant 1 : index
    %c2_55 = arith.constant 2 : index
    %c0_56 = arith.constant 0 : index
    %42 = vector.load %arg11[%c1_54, %c2_55, %c0_56] : memref<10x24x128xf32, #tpu.memory_space<vmem>>, vector<4x16x8xf32>
    %43 = vector.shape_cast %42 : vector<4x16x8xf32> to vector<64x8xf32>
    %c0_57 = arith.constant 0 : index
    %c40 = arith.constant 40 : index
    %44 = vector.load %arg12[%c0_57, %c40] : memref<64x128xf32, #tpu.memory_space<vmem>>, vector<64x8xf32>
    tpu.vector_store %arg12[%c0_57, %c40], %43 {strides = array<i32>} : memref<64x128xf32, #tpu.memory_space<vmem>>, vector<64x8xf32>,
    %c2_58 = arith.constant 2 : index
    %c0_59 = arith.constant 0 : index
    %c0_60 = arith.constant 0 : index
    %45 = vector.load %arg11[%c2_58, %c0_59, %c0_60] : memref<10x24x128xf32, #tpu.memory_space<vmem>>, vector<4x16x8xf32>
    %46 = vector.shape_cast %45 : vector<4x16x8xf32> to vector<64x8xf32>
    %c0_61 = arith.constant 0 : index
    %c48 = arith.constant 48 : index
    %47 = vector.load %arg12[%c0_61, %c48] : memref<64x128xf32, #tpu.memory_space<vmem>>, vector<64x8xf32>
    tpu.vector_store %arg12[%c0_61, %c48], %46 {strides = array<i32>} : memref<64x128xf32, #tpu.memory_space<vmem>>, vector<64x8xf32>,
    %c2_62 = arith.constant 2 : index
    %c1_63 = arith.constant 1 : index
    %c0_64 = arith.constant 0 : index
    %48 = vector.load %arg11[%c2_62, %c1_63, %c0_64] : memref<10x24x128xf32, #tpu.memory_space<vmem>>, vector<4x16x8xf32>
    %49 = vector.shape_cast %48 : vector<4x16x8xf32> to vector<64x8xf32>
    %c0_65 = arith.constant 0 : index
    %c56 = arith.constant 56 : index
    %50 = vector.load %arg12[%c0_65, %c56] : memref<64x128xf32, #tpu.memory_space<vmem>>, vector<64x8xf32>
    tpu.vector_store %arg12[%c0_65, %c56], %49 {strides = array<i32>} : memref<64x128xf32, #tpu.memory_space<vmem>>, vector<64x8xf32>,
    %c2_66 = arith.constant 2 : index
    %c2_67 = arith.constant 2 : index
    %c0_68 = arith.constant 0 : index
    %51 = vector.load %arg11[%c2_66, %c2_67, %c0_68] : memref<10x24x128xf32, #tpu.memory_space<vmem>>, vector<4x16x8xf32>
    %52 = vector.shape_cast %51 : vector<4x16x8xf32> to vector<64x8xf32>
    %c0_69 = arith.constant 0 : index
    %c64 = arith.constant 64 : index
    %53 = vector.load %arg12[%c0_69, %c64] : memref<64x128xf32, #tpu.memory_space<vmem>>, vector<64x8xf32>
    tpu.vector_store %arg12[%c0_69, %c64], %52 {strides = array<i32>} : memref<64x128xf32, #tpu.memory_space<vmem>>, vector<64x8xf32>,
    %c0_70 = arith.constant 0 : index
    %c0_71 = arith.constant 0 : index
    %54 = vector.load %arg12[%c0_70, %c0_71] : memref<64x128xf32, #tpu.memory_space<vmem>>, vector<64x128xf32>
    %cst_72 = arith.constant dense<0.000000e+00> : vector<64x128xf32>
    %55 = tpu.matmul %54, %24, %cst_72 {dimension_numbers = #tpu.dot_dimension_numbers<[1], [0], [0], [1], [0, 0, 1, 1], [], []>} : vector<64x128xf32>, vector<128x128xf32>, vector<64x128xf32> -> vector<64x128xf32>
    %56 = vector.shape_cast %55 : vector<64x128xf32> to vector<4x16x128xf32>
    %c0_73 = arith.constant 0 : index
    %c0_74 = arith.constant 0 : index
    %c0_75 = arith.constant 0 : index
    %c0_76 = arith.constant 0 : index
    %57 = vector.load %arg8[%c0_73, %c0_74, %c0_75, %c0_76] : memref<1x8x16x128xf32, #tpu.memory_space<vmem>>, vector<1x4x16x128xf32>
    %58 = vector.shape_cast %57 : vector<1x4x16x128xf32> to vector<4x16x128xf32>
    %59 = vector.shape_cast %56 : vector<4x16x128xf32> to vector<1x4x16x128xf32>
    tpu.vector_store %arg8[%c0_73, %c0_74, %c0_75, %c0_76], %59 {strides = array<i32>} : memref<1x8x16x128xf32, #tpu.memory_space<vmem>>, vector<1x4x16x128xf32>,
    %cst_77 = arith.constant dense<0.000000e+00> : vector<128xf32>
    %60 = vector.multi_reduction <add>, %55, %cst_77 [0] : vector<64x128xf32> to vector<128xf32>
    %61 = arith.addf %25, %60 : vector<128xf32>
    %62 = arith.mulf %55, %55 : vector<64x128xf32>
    %cst_78 = arith.constant dense<0.000000e+00> : vector<128xf32>
    %63 = vector.multi_reduction <add>, %62, %cst_78 [0] : vector<64x128xf32> to vector<128xf32>
    %64 = arith.addf %26, %63 : vector<128xf32>
    %c4 = arith.constant 4 : index
    %c0_79 = arith.constant 0 : index
    %c0_80 = arith.constant 0 : index
    %65 = vector.load %arg11[%c4, %c0_79, %c0_80] : memref<10x24x128xf32, #tpu.memory_space<vmem>>, vector<4x16x8xf32>
    %66 = vector.shape_cast %65 : vector<4x16x8xf32> to vector<64x8xf32>
    %c0_81 = arith.constant 0 : index
    %c0_82 = arith.constant 0 : index
    %67 = vector.load %arg12[%c0_81, %c0_82] : memref<64x128xf32, #tpu.memory_space<vmem>>, vector<64x8xf32>
    tpu.vector_store %arg12[%c0_81, %c0_82], %66 {strides = array<i32>} : memref<64x128xf32, #tpu.memory_space<vmem>>, vector<64x8xf32>,
    %c4_83 = arith.constant 4 : index
    %c1_84 = arith.constant 1 : index
    %c0_85 = arith.constant 0 : index
    %68 = vector.load %arg11[%c4_83, %c1_84, %c0_85] : memref<10x24x128xf32, #tpu.memory_space<vmem>>, vector<4x16x8xf32>
    %69 = vector.shape_cast %68 : vector<4x16x8xf32> to vector<64x8xf32>
    %c0_86 = arith.constant 0 : index
    %c8_87 = arith.constant 8 : index
    %70 = vector.load %arg12[%c0_86, %c8_87] : memref<64x128xf32, #tpu.memory_space<vmem>>, vector<64x8xf32>
    tpu.vector_store %arg12[%c0_86, %c8_87], %69 {strides = array<i32>} : memref<64x128xf32, #tpu.memory_space<vmem>>, vector<64x8xf32>,
    %c4_88 = arith.constant 4 : index
    %c2_89 = arith.constant 2 : index
    %c0_90 = arith.constant 0 : index
    %71 = vector.load %arg11[%c4_88, %c2_89, %c0_90] : memref<10x24x128xf32, #tpu.memory_space<vmem>>, vector<4x16x8xf32>
    %72 = vector.shape_cast %71 : vector<4x16x8xf32> to vector<64x8xf32>
    %c0_91 = arith.constant 0 : index
    %c16_92 = arith.constant 16 : index
    %73 = vector.load %arg12[%c0_91, %c16_92] : memref<64x128xf32, #tpu.memory_space<vmem>>, vector<64x8xf32>
    tpu.vector_store %arg12[%c0_91, %c16_92], %72 {strides = array<i32>} : memref<64x128xf32, #tpu.memory_space<vmem>>, vector<64x8xf32>,
    %c5 = arith.constant 5 : index
    %c0_93 = arith.constant 0 : index
    %c0_94 = arith.constant 0 : index
    %74 = vector.load %arg11[%c5, %c0_93, %c0_94] : memref<10x24x128xf32, #tpu.memory_space<vmem>>, vector<4x16x8xf32>
    %75 = vector.shape_cast %74 : vector<4x16x8xf32> to vector<64x8xf32>
    %c0_95 = arith.constant 0 : index
    %c24_96 = arith.constant 24 : index
    %76 = vector.load %arg12[%c0_95, %c24_96] : memref<64x128xf32, #tpu.memory_space<vmem>>, vector<64x8xf32>
    tpu.vector_store %arg12[%c0_95, %c24_96], %75 {strides = array<i32>} : memref<64x128xf32, #tpu.memory_space<vmem>>, vector<64x8xf32>,
    %c5_97 = arith.constant 5 : index
    %c1_98 = arith.constant 1 : index
    %c0_99 = arith.constant 0 : index
    %77 = vector.load %arg11[%c5_97, %c1_98, %c0_99] : memref<10x24x128xf32, #tpu.memory_space<vmem>>, vector<4x16x8xf32>
    %78 = vector.shape_cast %77 : vector<4x16x8xf32> to vector<64x8xf32>
    %c0_100 = arith.constant 0 : index
    %c32_101 = arith.constant 32 : index
    %79 = vector.load %arg12[%c0_100, %c32_101] : memref<64x128xf32, #tpu.memory_space<vmem>>, vector<64x8xf32>
    tpu.vector_store %arg12[%c0_100, %c32_101], %78 {strides = array<i32>} : memref<64x128xf32, #tpu.memory_space<vmem>>, vector<64x8xf32>,
    %c5_102 = arith.constant 5 : index
    %c2_103 = arith.constant 2 : index
    %c0_104 = arith.constant 0 : index
    %80 = vector.load %arg11[%c5_102, %c2_103, %c0_104] : memref<10x24x128xf32, #tpu.memory_space<vmem>>, vector<4x16x8xf32>
    %81 = vector.shape_cast %80 : vector<4x16x8xf32> to vector<64x8xf32>
    %c0_105 = arith.constant 0 : index
    %c40_106 = arith.constant 40 : index
    %82 = vector.load %arg12[%c0_105, %c40_106] : memref<64x128xf32, #tpu.memory_space<vmem>>, vector<64x8xf32>
    tpu.vector_store %arg12[%c0_105, %c40_106], %81 {strides = array<i32>} : memref<64x128xf32, #tpu.memory_space<vmem>>, vector<64x8xf32>,
    %c6 = arith.constant 6 : index
    %c0_107 = arith.constant 0 : index
    %c0_108 = arith.constant 0 : index
    %83 = vector.load %arg11[%c6, %c0_107, %c0_108] : memref<10x24x128xf32, #tpu.memory_space<vmem>>, vector<4x16x8xf32>
    %84 = vector.shape_cast %83 : vector<4x16x8xf32> to vector<64x8xf32>
    %c0_109 = arith.constant 0 : index
    %c48_110 = arith.constant 48 : index
    %85 = vector.load %arg12[%c0_109, %c48_110] : memref<64x128xf32, #tpu.memory_space<vmem>>, vector<64x8xf32>
    tpu.vector_store %arg12[%c0_109, %c48_110], %84 {strides = array<i32>} : memref<64x128xf32, #tpu.memory_space<vmem>>, vector<64x8xf32>,
    %c6_111 = arith.constant 6 : index
    %c1_112 = arith.constant 1 : index
    %c0_113 = arith.constant 0 : index
    %86 = vector.load %arg11[%c6_111, %c1_112, %c0_113] : memref<10x24x128xf32, #tpu.memory_space<vmem>>, vector<4x16x8xf32>
    %87 = vector.shape_cast %86 : vector<4x16x8xf32> to vector<64x8xf32>
    %c0_114 = arith.constant 0 : index
    %c56_115 = arith.constant 56 : index
    %88 = vector.load %arg12[%c0_114, %c56_115] : memref<64x128xf32, #tpu.memory_space<vmem>>, vector<64x8xf32>
    tpu.vector_store %arg12[%c0_114, %c56_115], %87 {strides = array<i32>} : memref<64x128xf32, #tpu.memory_space<vmem>>, vector<64x8xf32>,
    %c6_116 = arith.constant 6 : index
    %c2_117 = arith.constant 2 : index
    %c0_118 = arith.constant 0 : index
    %89 = vector.load %arg11[%c6_116, %c2_117, %c0_118] : memref<10x24x128xf32, #tpu.memory_space<vmem>>, vector<4x16x8xf32>
    %90 = vector.shape_cast %89 : vector<4x16x8xf32> to vector<64x8xf32>
    %c0_119 = arith.constant 0 : index
    %c64_120 = arith.constant 64 : index
    %91 = vector.load %arg12[%c0_119, %c64_120] : memref<64x128xf32, #tpu.memory_space<vmem>>, vector<64x8xf32>
    tpu.vector_store %arg12[%c0_119, %c64_120], %90 {strides = array<i32>} : memref<64x128xf32, #tpu.memory_space<vmem>>, vector<64x8xf32>,
    %c0_121 = arith.constant 0 : index
    %c0_122 = arith.constant 0 : index
    %92 = vector.load %arg12[%c0_121, %c0_122] : memref<64x128xf32, #tpu.memory_space<vmem>>, vector<64x128xf32>
    %cst_123 = arith.constant dense<0.000000e+00> : vector<64x128xf32>
    %93 = tpu.matmul %92, %24, %cst_123 {dimension_numbers = #tpu.dot_dimension_numbers<[1], [0], [0], [1], [0, 0, 1, 1], [], []>} : vector<64x128xf32>, vector<128x128xf32>, vector<64x128xf32> -> vector<64x128xf32>
    %94 = vector.shape_cast %93 : vector<64x128xf32> to vector<4x16x128xf32>
    %c0_124 = arith.constant 0 : index
    %c4_125 = arith.constant 4 : index
    %c0_126 = arith.constant 0 : index
    %c0_127 = arith.constant 0 : index
    %95 = vector.load %arg8[%c0_124, %c4_125, %c0_126, %c0_127] : memref<1x8x16x128xf32, #tpu.memory_space<vmem>>, vector<1x4x16x128xf32>
    %96 = vector.shape_cast %95 : vector<1x4x16x128xf32> to vector<4x16x128xf32>
    %97 = vector.shape_cast %94 : vector<4x16x128xf32> to vector<1x4x16x128xf32>
    tpu.vector_store %arg8[%c0_124, %c4_125, %c0_126, %c0_127], %97 {strides = array<i32>} : memref<1x8x16x128xf32, #tpu.memory_space<vmem>>, vector<1x4x16x128xf32>,
    %cst_128 = arith.constant dense<0.000000e+00> : vector<128xf32>
    %98 = vector.multi_reduction <add>, %93, %cst_128 [0] : vector<64x128xf32> to vector<128xf32>
    %99 = arith.addf %61, %98 : vector<128xf32>
    %100 = arith.mulf %93, %93 : vector<64x128xf32>
    %cst_129 = arith.constant dense<0.000000e+00> : vector<128xf32>
    %101 = vector.multi_reduction <add>, %100, %cst_129 [0] : vector<64x128xf32> to vector<128xf32>
    %102 = arith.addf %64, %101 : vector<128xf32>
    %103 = vector.shape_cast %99 : vector<128xf32> to vector<1x128xf32>
    %c0_130 = arith.constant 0 : index
    %c0_131 = arith.constant 0 : index
    %c0_132 = arith.constant 0 : index
    %c0_133 = arith.constant 0 : index
    %104 = vector.load %arg9[%c0_130, %c0_131, %c0_132, %c0_133] : memref<1x1x8x128xf32, #tpu.memory_space<vmem>>, vector<1x1x1x128xf32>
    %105 = vector.shape_cast %104 : vector<1x1x1x128xf32> to vector<1x128xf32>
    %106 = vector.shape_cast %103 : vector<1x128xf32> to vector<1x1x1x128xf32>
    tpu.vector_store %arg9[%c0_130, %c0_131, %c0_132, %c0_133], %106 {strides = array<i32>} : memref<1x1x8x128xf32, #tpu.memory_space<vmem>>, vector<1x1x1x128xf32>,
    %107 = vector.shape_cast %102 : vector<128xf32> to vector<1x128xf32>
    %c0_134 = arith.constant 0 : index
    %c0_135 = arith.constant 0 : index
    %c0_136 = arith.constant 0 : index
    %c0_137 = arith.constant 0 : index
    %108 = vector.load %arg10[%c0_134, %c0_135, %c0_136, %c0_137] : memref<1x1x8x128xf32, #tpu.memory_space<vmem>>, vector<1x1x1x128xf32>
    %109 = vector.shape_cast %108 : vector<1x1x1x128xf32> to vector<1x128xf32>
    %110 = vector.shape_cast %107 : vector<1x128xf32> to vector<1x1x1x128xf32>
    tpu.vector_store %arg10[%c0_134, %c0_135, %c0_136, %c0_137], %110 {strides = array<i32>} : memref<1x1x8x128xf32, #tpu.memory_space<vmem>>, vector<1x1x1x128xf32>,
    return
  }
  func.func @transform_0(%arg0: i32, %arg1: i32) -> (i32, i32, i32, i32) {
    %c0_i32 = arith.constant 0 : i32
    %c0_i32_0 = arith.constant 0 : i32
    %c0_i32_1 = arith.constant 0 : i32
    return %arg0, %arg1, %c0_i32, %c0_i32_0 : i32, i32, i32, i32
  }
  func.func @transform_1(%arg0: i32, %arg1: i32) -> (i32, i32, i32, i32) {
    %c0_i32 = arith.constant 0 : i32
    %c0_i32_0 = arith.constant 0 : i32
    %c0_i32_1 = arith.constant 0 : i32
    return %arg0, %arg1, %c0_i32, %c0_i32_0 : i32, i32, i32, i32
  }
  func.func @transform_2(%arg0: i32, %arg1: i32) -> (i32, i32, i32, i32) {
    %c0_i32 = arith.constant 0 : i32
    %c0_i32_0 = arith.constant 0 : i32
    %c0_i32_1 = arith.constant 0 : i32
    return %arg0, %arg1, %c0_i32, %c0_i32_0 : i32, i32, i32, i32
  }
  func.func @transform_3(%arg0: i32, %arg1: i32) -> (i32, i32) {
    %c0_i32 = arith.constant 0 : i32
    %c0_i32_0 = arith.constant 0 : i32
    %c0_i32_1 = arith.constant 0 : i32
    return %c0_i32, %c0_i32_0 : i32, i32
  }
  func.func @transform_4(%arg0: i32, %arg1: i32) -> (i32, i32) {
    %c0_i32 = arith.constant 0 : i32
    %c0_i32_0 = arith.constant 0 : i32
    %c0_i32_1 = arith.constant 0 : i32
    return %c0_i32, %c0_i32_0 : i32, i32
  }
  func.func @transform_5(%arg0: i32, %arg1: i32) -> (i32, i32) {
    %c0_i32 = arith.constant 0 : i32
    %c0_i32_0 = arith.constant 0 : i32
    %c0_i32_1 = arith.constant 0 : i32
    return %c0_i32, %c0_i32_0 : i32, i32
  }
  func.func @transform_6(%arg0: i32, %arg1: i32) -> (i32, i32, i32, i32) {
    %c0_i32 = arith.constant 0 : i32
    %c0_i32_0 = arith.constant 0 : i32
    %c0_i32_1 = arith.constant 0 : i32
    return %arg0, %arg1, %c0_i32, %c0_i32_0 : i32, i32, i32, i32
  }
  func.func @transform_7(%arg0: i32, %arg1: i32) -> (i32, i32, i32, i32) {
    %c0_i32 = arith.constant 0 : i32
    %c0_i32_0 = arith.constant 0 : i32
    %c0_i32_1 = arith.constant 0 : i32
    return %arg0, %arg1, %c0_i32, %c0_i32_0 : i32, i32, i32, i32
  }
  func.func @transform_8(%arg0: i32, %arg1: i32) -> (i32, i32, i32, i32) {
    %c0_i32 = arith.constant 0 : i32
    %c0_i32_0 = arith.constant 0 : i32
    %c0_i32_1 = arith.constant 0 : i32
    return %arg0, %arg1, %c0_i32, %c0_i32_0 : i32, i32, i32, i32
  }
}

</mosaic_0001>

<llo_original>
// kernel: _lambda_.5
$region0: #{_lambda_.5}
  #allocation0 [shape = 'u32[]', space=smem, size = 0x4, offset = 0x4, fixed_abs, tag = 'smem constant byte address 0x4 - core index']
  #allocation1 [shape = 'u32[144,128]{1,0:T(1,128)}', space=vmem, size = 0x12000, scoped, tag = 'internal scratch']
  %s0 = inlined_call_operand.vmem [shape: f32[2,16,16,128], index: 0, kind: input, shape index: {}, may-alias: {0,3}]
  %s1 = inlined_call_operand.vmem [shape: f32[1,128], index: 1, kind: input, shape index: {}]
  %s2 = inlined_call_operand.vmem [shape: f32[1,128], index: 2, kind: input, shape index: {}]
  %s3 = inlined_call_operand.vmem [shape: f32[2,16,16,128], index: 3, kind: output, shape index: {}, may-alias: {0,3}]
  %s4 = sld [smem:[#allocation0]]
  $region45: #{_lambda_.5} parent=0
    _
  %s6 = ssub.s32 1, %s4
  %s7 = scalar_select 0, %s6, %s4
  loop: start=0, step=1, limit=6
  $region2: #{_lambda_.5} parent=0 // loop_pre_header
    _
  $region3: #{_lambda_.5} parent=0 // loop_header
    %s9 = sphi 0, %s13
    %p10 = scmp.ge.s32.totalorder %s9, 6
    %s16 = sphi 0, %s28
    %s17 = sphi 0, %s24
    %s18 = sphi 0, %s16
    %s19 = sphi 0, %s17
    %s20 = sphi 0, %s18
    %s21 = sphi 0, %s19
    %s33 = sphi 0, %s35
    %s36 = sphi 0, %s33
    %s37 = sphi 0, %s36
    %s53 = sphi 0, %s37
    %s57 = sphi 0, %s57
    %s59 = sphi 0, %s57
    %s60 = sphi 0, %s59
    %s74 = sphi 0, %s60
    %s78 = sphi 0, %s78
    %s80 = sphi 0, %s78
    %s81 = sphi 0, %s80
    %s95 = sphi 0, %s81
    %s103 = sphi 0, %s105
    %s106 = sphi 0, %s103
    %s107 = sphi 0, %s106
    %s123 = sphi 0, %s107
  $region4: #{_lambda_.5} parent=0 // loop_header_branch
    %12 = sbr.rel (%p10) target = $region8
  $region5: #{_lambda_.5} parent=0 // loop_body
    %s14 = ssub.s32 %s9, 1
    %s15 = ssub.s32 %s9, 2
    %s22 = sadd.s32 1, %s17
    %p23 = scmp.ge.s32.totalorder %s22, 2
    %s24 = scalar_select %p23, 0, %s22
    %s25 = sadd.s32 1, %s16
    %s26 = scalar_select %p23, %s25, %s16
    %p27 = scmp.ge.s32.totalorder %s26, 2
    %s28 = scalar_select %p27, 0, %s26
    %s29 = ssub.s32 %s16, %s28
    %s30 = ssub.s32 %s17, %s24
    %s31 = sor.u32 %s29, %s30
    %p32 = scmp.eq.s32.totalorder %s31, 0
    %s34 = sadd.s32 %s33, 1
    %s35 = scalar_select %p32, %s33, %s34
    %p38 = pneg %p32
    %p39 = scmp.eq.s32.totalorder %s9, 3
    %p40 = por %p38, %p39
    %p41 = scmp.ne.s32.totalorder %s33, %s36
    %p42 = scmp.eq.s32.totalorder %s9, 0
    %p43 = por %p41, %p42
    %p44 = scmp.ne.s32.totalorder %s33, %s36
    %p45 = scmp.eq.s32.totalorder %s14, 3
    %p46 = por %p44, %p45
    %p47 = scmp.ne.s32.totalorder %s36, %s37
    %p48 = scmp.eq.s32.totalorder %s14, 0
    %p49 = por %p47, %p48
    %p50 = scmp.ne.s32.totalorder %s36, %s37
    %p51 = scmp.eq.s32.totalorder %s15, 3
    %p52 = por %p50, %p51
    %p54 = scmp.ne.s32.totalorder %s37, %s53
    %p55 = scmp.eq.s32.totalorder %s15, 0
    %p56 = por %p54, %p55
    %s58 = sadd.s32 %s57, 1
    %p61 = scmp.eq.s32.totalorder %s9, 3
    %p62 = scmp.ne.s32.totalorder %s57, %s59
    %p63 = scmp.eq.s32.totalorder %s9, 0
    %p64 = por %p62, %p63
    %p65 = scmp.ne.s32.totalorder %s57, %s59
    %p66 = scmp.eq.s32.totalorder %s14, 3
    %p67 = por %p65, %p66
    %p68 = scmp.ne.s32.totalorder %s59, %s60
    %p69 = scmp.eq.s32.totalorder %s14, 0
    %p70 = por %p68, %p69
    %p71 = scmp.ne.s32.totalorder %s59, %s60
    %p72 = scmp.eq.s32.totalorder %s15, 3
    %p73 = por %p71, %p72
    %p75 = scmp.ne.s32.totalorder %s60, %s74
    %p76 = scmp.eq.s32.totalorder %s15, 0
    %p77 = por %p75, %p76
    %s79 = sadd.s32 %s78, 1
    %p82 = scmp.eq.s32.totalorder %s9, 3
    %p83 = scmp.ne.s32.totalorder %s78, %s80
    %p84 = scmp.eq.s32.totalorder %s9, 0
    %p85 = por %p83, %p84
    %p86 = scmp.ne.s32.totalorder %s78, %s80
    %p87 = scmp.eq.s32.totalorder %s14, 3
    %p88 = por %p86, %p87
    %p89 = scmp.ne.s32.totalorder %s80, %s81
    %p90 = scmp.eq.s32.totalorder %s14, 0
    %p91 = por %p89, %p90
    %p92 = scmp.ne.s32.totalorder %s80, %s81
    %p93 = scmp.eq.s32.totalorder %s15, 3
    %p94 = por %p92, %p93
    %p96 = scmp.ne.s32.totalorder %s81, %s95
    %p97 = scmp.eq.s32.totalorder %s15, 0
    %p98 = por %p96, %p97
    %s99 = ssub.s32 %s16, %s28
    %s100 = ssub.s32 %s17, %s24
    %s101 = sor.u32 %s99, %s100
    %p102 = scmp.eq.s32.totalorder %s101, 0
    %s104 = sadd.s32 %s103, 1
    %s105 = scalar_select %p102, %s103, %s104
    %p108 = pneg %p102
    %p109 = scmp.eq.s32.totalorder %s9, 3
    %p110 = por %p108, %p109
    %p111 = scmp.ne.s32.totalorder %s103, %s106
    %p112 = scmp.eq.s32.totalorder %s9, 0
    %p113 = por %p111, %p112
    %p114 = scmp.ne.s32.totalorder %s103, %s106
    %p115 = scmp.eq.s32.totalorder %s14, 3
    %p116 = por %p114, %p115
    %p117 = scmp.ne.s32.totalorder %s106, %s107
    %p118 = scmp.eq.s32.totalorder %s14, 0
    %p119 = por %p117, %p118
    %p120 = scmp.ne.s32.totalorder %s106, %s107
    %p121 = scmp.eq.s32.totalorder %s15, 3
    %p122 = por %p120, %p121
    %p124 = scmp.ne.s32.totalorder %s107, %s123
    %p125 = scmp.eq.s32.totalorder %s15, 0
    %p126 = por %p124, %p125
    %p127 = scmp.le.s32.totalorder 1, %s9
    %p128 = scmp.lt.s32.totalorder %s9, 5
    %p129 = pnand %p127, %p128
    %p130 = pneg %p129
    // Predicated region
    $region9: #{_lambda_.5} parent=5 // pred_check
      _
    $region10: #{_lambda_.5} parent=5 // pred_check_branch
      %132 = sbr.rel (%p129) target = $region12
    $region11: #{_lambda_.5} parent=5 // pred_region
      %s133 = ssub.s32 %s9, 1
      // Predicated region
      $region13: #{_lambda_.5} parent=11 // pred_check
        %p134 = pneg %p70
      $region14: #{_lambda_.5} parent=11 // pred_check_branch
        %136 = sbr.rel (%p134) target = $region16
      $region15: #{_lambda_.5} parent=11 // pred_region
        _
      $region16: #{_lambda_.5} parent=11 // pred_fallthru
        _
      // Predicated region
      $region17: #{_lambda_.5} parent=11 // pred_check
        %p137 = pneg %p91
      $region18: #{_lambda_.5} parent=11 // pred_check_branch
        %139 = sbr.rel (%p137) target = $region20
      $region19: #{_lambda_.5} parent=11 // pred_region
        _
      $region20: #{_lambda_.5} parent=11 // pred_fallthru
        _
    $region12: #{_lambda_.5} parent=5 // pred_fallthru
      _
    %p140 = scmp.lt.s32.totalorder %s9, 4
    // Predicated region
    $region21: #{_lambda_.5} parent=5 // pred_check
      %p141 = pneg %p140
    $region22: #{_lambda_.5} parent=5 // pred_check_branch
      %143 = sbr.rel (%p141) target = $region24
    $region23: #{_lambda_.5} parent=5 // pred_region
      // Predicated region
      $region25: #{_lambda_.5} parent=23 // pred_check
        %p144 = pneg %p43
      $region26: #{_lambda_.5} parent=23 // pred_check_branch
        %146 = sbr.rel (%p144) target = $region28
      $region27: #{_lambda_.5} parent=23 // pred_region
        %s147 = smul.u32 8, %s17
        %p148 = scmp.lt.s32.totalorder %s16, 1
        %s149 = scalar_select %p148, %s16, 1
        %p150 = scmp.lt.s32.totalorder %s147, 15
        %s151 = scalar_select %p150, %s147, 15
        %s152 = smul.addr %s151, 2
        %s153 = smul.addr %s149, 32
        %s154 = sadd.s32 %s152, %s153
        %s155 = smul.addr %s154, 8
        %s156 = scalar_lea.vmem %s0, %s155
        %s157 = smul.u32 8, %s17
      $region28: #{_lambda_.5} parent=23 // pred_fallthru
        _
    $region24: #{_lambda_.5} parent=5 // pred_fallthru
      _
    %p158 = scmp.le.s32.totalorder 1, %s9
    %p159 = scmp.lt.s32.totalorder %s9, 5
    %p160 = pnand %p158, %p159
    %p161 = pneg %p160
    // Predicated region
    $region29: #{_lambda_.5} parent=5 // pred_check
      _
    $region30: #{_lambda_.5} parent=5 // pred_check_branch
      %163 = sbr.rel (%p160) target = $region32
    $region31: #{_lambda_.5} parent=5 // pred_region
      %s164 = ssub.s32 %s9, 1
      %s165 = smul.u32 8, %s19
      %p166 = scmp.lt.s32.totalorder %s18, 1
      %s167 = scalar_select %p166, %s18, 1
      %p168 = scmp.lt.s32.totalorder %s165, 15
      %s169 = scalar_select %p168, %s165, 15
      %s170 = smul.addr %s169, 2
      %s171 = smul.addr %s167, 32
      %s172 = sadd.s32 %s170, %s171
      %s173 = smul.addr %s172, 8
      %s174 = scalar_lea.vmem %s0, %s173
      %p175 = pneg %p49
      %p176 = pneg %p46
      %p177 = pneg %p70
      %p178 = pneg %p67
      %p179 = pneg %p91
      %p180 = pneg %p88
      %p181 = pneg %p119
      %p182 = pneg %p116
      %s183 = smul.u32 8, %s19
      %p184 = scmp.lt.s32.totalorder %s18, 1
      %s185 = scalar_select %p184, %s18, 1
      %p186 = scmp.lt.s32.totalorder %s183, 15
      %s187 = scalar_select %p186, %s183, 15
      %s188 = smul.addr %s187, 2
      %s189 = smul.addr %s185, 32
      %s190 = sadd.s32 %s188, %s189
      %s191 = smul.addr %s190, 8
      %s192 = scalar_lea.vmem %s3, %s191
      %s193 = smul.u32 8, %s19
      %p194 = scmp.lt.s32.totalorder %s18, 1
      %s195 = scalar_select %p194, %s18, 1
      %p196 = scmp.lt.s32.totalorder %s193, 15
      %s197 = scalar_select %p196, %s193, 15
      %s198 = smul.addr %s197, 2
      %s199 = smul.addr %s195, 32
      %s200 = sadd.s32 %s198, %s199
      %s201 = smul.addr %s200, 8
      %s202 = scalar_lea.vmem %s0, %s201
      %s203 = smul.u32 8, %s19
      %s204 = smul.u32 8, %s19
      %p205 = scmp.lt.s32.totalorder %s18, 1
      %s206 = scalar_select %p205, %s18, 1
      %p207 = scmp.lt.s32.totalorder %s204, 15
      %s208 = scalar_select %p207, %s204, 15
      %s209 = smul.addr %s208, 2
      %s210 = smul.addr %s206, 32
      %s211 = sadd.s32 %s209, %s210
      %s212 = smul.addr %s211, 8
      %s213 = scalar_lea.vmem %s3, %s212
      %s214 = smul.u32 8, %s19
      %v215 = vld [vmem:[%s1] sm:$0x1]
      %v216 = vld [vmem:[%s2] sm:$0x1]
      %v217 = vld [vmem:[%s202] sm:$0xff]
      %v218 = vld [vmem:[%s202 + $0x8] sm:$0xff]
      %v219 = vld [vmem:[%s202 + $0x10] sm:$0xff]
      %v220 = vld [vmem:[%s202 + $0x18] sm:$0xff]
      %v221 = vld [vmem:[%s202 + $0x20] sm:$0xff]
      %v222 = vld [vmem:[%s202 + $0x28] sm:$0xff]
      %v223 = vld [vmem:[%s202 + $0x30] sm:$0xff]
      %v224 = vld [vmem:[%s202 + $0x38] sm:$0xff]
      %v225 = vld [vmem:[%s202 + $0x40] sm:$0xff]
      %v226 = vld [vmem:[%s202 + $0x48] sm:$0xff]
      %v227 = vld [vmem:[%s202 + $0x50] sm:$0xff]
      %v228 = vld [vmem:[%s202 + $0x58] sm:$0xff]
      %v229 = vld [vmem:[%s202 + $0x60] sm:$0xff]
      %v230 = vld [vmem:[%s202 + $0x68] sm:$0xff]
      %v231 = vld [vmem:[%s202 + $0x70] sm:$0xff]
      %v232 = vld [vmem:[%s202 + $0x78] sm:$0xff]
      %v234 = vlaneseq
      %v235 = vshrl.u32 %v234, 7
      %v236 = vsub.s32 0, %v235
      %v237 = vrot.slane %v215, %v236
      %v239 = vmul.f32 %v217, %v237
      %v240 = vmul.f32 %v218, %v237
      %v241 = vmul.f32 %v219, %v237
      %v242 = vmul.f32 %v220, %v237
      %v243 = vmul.f32 %v221, %v237
      %v244 = vmul.f32 %v222, %v237
      %v245 = vmul.f32 %v223, %v237
      %v246 = vmul.f32 %v224, %v237
      %v247 = vmul.f32 %v225, %v237
      %v248 = vmul.f32 %v226, %v237
      %v249 = vmul.f32 %v227, %v237
      %v250 = vmul.f32 %v228, %v237
      %v251 = vmul.f32 %v229, %v237
      %v252 = vmul.f32 %v230, %v237
      %v253 = vmul.f32 %v231, %v237
      %v254 = vmul.f32 %v232, %v237
      %v256 = vlaneseq
      %v257 = vshrl.u32 %v256, 7
      %v258 = vsub.s32 0, %v257
      %v259 = vrot.slane %v216, %v258
      %v261 = vadd.f32 %v239, %v259
      %v262 = vadd.f32 %v240, %v259
      %v263 = vadd.f32 %v241, %v259
      %v264 = vadd.f32 %v242, %v259
      %v265 = vadd.f32 %v243, %v259
      %v266 = vadd.f32 %v244, %v259
      %v267 = vadd.f32 %v245, %v259
      %v268 = vadd.f32 %v246, %v259
      %v269 = vadd.f32 %v247, %v259
      %v270 = vadd.f32 %v248, %v259
      %v271 = vadd.f32 %v249, %v259
      %v272 = vadd.f32 %v250, %v259
      %v273 = vadd.f32 %v251, %v259
      %v274 = vadd.f32 %v252, %v259
      %v275 = vadd.f32 %v253, %v259
      %v276 = vadd.f32 %v254, %v259
      %v277 = vmax.f32 %v261, 0.0
      %v278 = vmax.f32 %v262, 0.0
      %v279 = vmax.f32 %v263, 0.0
      %v280 = vmax.f32 %v264, 0.0
      %v281 = vmax.f32 %v265, 0.0
      %v282 = vmax.f32 %v266, 0.0
      %v283 = vmax.f32 %v267, 0.0
      %v284 = vmax.f32 %v268, 0.0
      %v285 = vmax.f32 %v269, 0.0
      %v286 = vmax.f32 %v270, 0.0
      %v287 = vmax.f32 %v271, 0.0
      %v288 = vmax.f32 %v272, 0.0
      %v289 = vmax.f32 %v273, 0.0
      %v290 = vmax.f32 %v274, 0.0
      %v291 = vmax.f32 %v275, 0.0
      %v292 = vmax.f32 %v276, 0.0
      %293 = vst [vmem:[%s213] sm:$0xff] %v277
      %294 = vst [vmem:[%s213 + $0x8] sm:$0xff] %v278
      %295 = vst [vmem:[%s213 + $0x10] sm:$0xff] %v279
      %296 = vst [vmem:[%s213 + $0x18] sm:$0xff] %v280
      %297 = vst [vmem:[%s213 + $0x20] sm:$0xff] %v281
      %298 = vst [vmem:[%s213 + $0x28] sm:$0xff] %v282
      %299 = vst [vmem:[%s213 + $0x30] sm:$0xff] %v283
      %300 = vst [vmem:[%s213 + $0x38] sm:$0xff] %v284
      %301 = vst [vmem:[%s213 + $0x40] sm:$0xff] %v285
      %302 = vst [vmem:[%s213 + $0x48] sm:$0xff] %v286
      %303 = vst [vmem:[%s213 + $0x50] sm:$0xff] %v287
      %304 = vst [vmem:[%s213 + $0x58] sm:$0xff] %v288
      %305 = vst [vmem:[%s213 + $0x60] sm:$0xff] %v289
      %306 = vst [vmem:[%s213 + $0x68] sm:$0xff] %v290
      %307 = vst [vmem:[%s213 + $0x70] sm:$0xff] %v291
      %308 = vst [vmem:[%s213 + $0x78] sm:$0xff] %v292
      %s309 = smul.u32 8, %s19
      %p310 = scmp.lt.s32.totalorder %s18, 1
      %s311 = scalar_select %p310, %s18, 1
      %p312 = scmp.lt.s32.totalorder %s309, 15
      %s313 = scalar_select %p312, %s309, 15
      %s314 = smul.addr %s313, 2
      %s315 = smul.addr %s311, 32
      %s316 = sadd.s32 %s314, %s315
      %s317 = smul.addr %s316, 8
      %s318 = scalar_lea.vmem %s3, %s317
      // Predicated region
      $region33: #{_lambda_.5} parent=31 // pred_check
        %p319 = pneg %p116
      $region34: #{_lambda_.5} parent=31 // pred_check_branch
        %321 = sbr.rel (%p319) target = $region36
      $region35: #{_lambda_.5} parent=31 // pred_region
        %s322 = smul.u32 8, %s19
      $region36: #{_lambda_.5} parent=31 // pred_fallthru
        _
    $region32: #{_lambda_.5} parent=5 // pred_fallthru
      _
    %p323 = scmp.le.s32.totalorder 2, %s9
    // Predicated region
    $region37: #{_lambda_.5} parent=5 // pred_check
      %p324 = pneg %p323
    $region38: #{_lambda_.5} parent=5 // pred_check_branch
      %326 = sbr.rel (%p324) target = $region40
    $region39: #{_lambda_.5} parent=5 // pred_region
      %s327 = ssub.s32 %s9, 2
      // Predicated region
      $region41: #{_lambda_.5} parent=39 // pred_check
        %p328 = pneg %p122
      $region42: #{_lambda_.5} parent=39 // pred_check_branch
        %330 = sbr.rel (%p328) target = $region44
      $region43: #{_lambda_.5} parent=39 // pred_region
        %s331 = smul.u32 8, %s21
        %p332 = scmp.lt.s32.totalorder %s20, 1
        %s333 = scalar_select %p332, %s20, 1
        %p334 = scmp.lt.s32.totalorder %s331, 15
        %s335 = scalar_select %p334, %s331, 15
        %s336 = smul.addr %s335, 2
        %s337 = smul.addr %s333, 32
        %s338 = sadd.s32 %s336, %s337
        %s339 = smul.addr %s338, 8
        %s340 = scalar_lea.vmem %s3, %s339
      $region44: #{_lambda_.5} parent=39 // pred_fallthru
        _
    $region40: #{_lambda_.5} parent=5 // pred_fallthru
      _
  $region6: #{_lambda_.5} parent=0 // loop_footer
    %s13 = sadd.s32 1, %s9
  $region7: #{_lambda_.5} parent=0 // loop_footer_branch
    %8 = sbr.rel target = $region3
  $region8: #{_lambda_.5} parent=0 // loop_exit
    _

// kernel: _lambda_.4
$region0: #{_lambda_.4}
  #allocation0 [shape = 'u32[]', space=smem, size = 0x4, offset = 0x4, fixed_abs, tag = 'smem constant byte address 0x4 - core index']
  #allocation1 [shape = 'u32[144,128]{1,0:T(1,128)}', space=vmem, size = 0x12000, scoped, tag = 'internal scratch']
  #allocation2 [shape = 'f32[10,24,128]{2,1,0:T(8,128)}', space=vmem, size = 0x1e000, scoped, tag = 'scratch operand']
  #allocation3 [shape = 'f32[64,128]{1,0:T(8,128)}', space=vmem, size = 0x8000, scoped, tag = 'scratch operand']
  %s0 = inlined_call_operand.vmem [shape: f32[2,16,16,128], index: 0, kind: input, shape index: {}]
  %s1 = inlined_call_operand.vmem [shape: f32[2,2,16,128], index: 1, kind: input, shape index: {}]
  %s2 = inlined_call_operand.vmem [shape: f32[2,2,16,128], index: 2, kind: input, shape index: {}]
  %s3 = inlined_call_operand.vmem [shape: f32[1,128], index: 3, kind: input, shape index: {}]
  %s4 = inlined_call_operand.vmem [shape: f32[1,128], index: 4, kind: input, shape index: {}]
  %s5 = inlined_call_operand.vmem [shape: f32[128,128], index: 5, kind: input, shape index: {}]
  %s6 = inlined_call_operand.vmem [shape: f32[2,16,16,128], index: 6, kind: output, shape index: {0}]
  %s7 = inlined_call_operand.vmem [shape: f32[2,2,8,128], index: 7, kind: output, shape index: {1}]
  %s8 = inlined_call_operand.vmem [shape: f32[2,2,8,128], index: 8, kind: output, shape index: {2}]
  %9 = xla_tuple %s6, %s7, %s8
  %s10 = sld [smem:[#allocation0]]
  $region73: #{_lambda_.4} parent=0
    _
  %s12 = ssub.s32 1, %s10
  %s13 = scalar_select 0, %s12, %s10
  loop: start=0, step=1, limit=6
  $region2: #{_lambda_.4} parent=0 // loop_pre_header
    _
  $region3: #{_lambda_.4} parent=0 // loop_header
    %s15 = sphi 0, %s19
    %p16 = scmp.ge.s32.totalorder %s15, 6
    %s22 = sphi 0, %s34
    %s23 = sphi 0, %s30
    %s24 = sphi 0, %s22
    %s25 = sphi 0, %s23
    %s26 = sphi 0, %s24
    %s27 = sphi 0, %s25
    %s39 = sphi 0, %s41
    %s42 = sphi 0, %s39
    %s43 = sphi 0, %s42
    %s59 = sphi 0, %s43
    %s67 = sphi 0, %s69
    %s70 = sphi 0, %s67
    %s71 = sphi 0, %s70
    %s87 = sphi 0, %s71
    %s95 = sphi 0, %s97
    %s98 = sphi 0, %s95
    %s99 = sphi 0, %s98
    %s115 = sphi 0, %s99
    %s119 = sphi 0, %s119
    %s121 = sphi 0, %s119
    %s122 = sphi 0, %s121
    %s136 = sphi 0, %s122
    %s140 = sphi 0, %s140
    %s142 = sphi 0, %s140
    %s143 = sphi 0, %s142
    %s157 = sphi 0, %s143
    %s161 = sphi 0, %s161
    %s163 = sphi 0, %s161
    %s164 = sphi 0, %s163
    %s178 = sphi 0, %s164
    %s186 = sphi 0, %s188
    %s189 = sphi 0, %s186
    %s190 = sphi 0, %s189
    %s206 = sphi 0, %s190
    %s214 = sphi 0, %s216
    %s217 = sphi 0, %s214
    %s218 = sphi 0, %s217
    %s234 = sphi 0, %s218
    %s242 = sphi 0, %s244
    %s245 = sphi 0, %s242
    %s246 = sphi 0, %s245
    %s262 = sphi 0, %s246
  $region4: #{_lambda_.4} parent=0 // loop_header_branch
    %18 = sbr.rel (%p16) target = $region8
  $region5: #{_lambda_.4} parent=0 // loop_body
    %s20 = ssub.s32 %s15, 1
    %s21 = ssub.s32 %s15, 2
    %s28 = sadd.s32 1, %s23
    %p29 = scmp.ge.s32.totalorder %s28, 2
    %s30 = scalar_select %p29, 0, %s28
    %s31 = sadd.s32 1, %s22
    %s32 = scalar_select %p29, %s31, %s22
    %p33 = scmp.ge.s32.totalorder %s32, 2
    %s34 = scalar_select %p33, 0, %s32
    %s35 = ssub.s32 %s22, %s34
    %s36 = ssub.s32 %s23, %s30
    %s37 = sor.u32 %s35, %s36
    %p38 = scmp.eq.s32.totalorder %s37, 0
    %s40 = sadd.s32 %s39, 1
    %s41 = scalar_select %p38, %s39, %s40
    %p44 = pneg %p38
    %p45 = scmp.eq.s32.totalorder %s15, 3
    %p46 = por %p44, %p45
    %p47 = scmp.ne.s32.totalorder %s39, %s42
    %p48 = scmp.eq.s32.totalorder %s15, 0
    %p49 = por %p47, %p48
    %p50 = scmp.ne.s32.totalorder %s39, %s42
    %p51 = scmp.eq.s32.totalorder %s20, 3
    %p52 = por %p50, %p51
    %p53 = scmp.ne.s32.totalorder %s42, %s43
    %p54 = scmp.eq.s32.totalorder %s20, 0
    %p55 = por %p53, %p54
    %p56 = scmp.ne.s32.totalorder %s42, %s43
    %p57 = scmp.eq.s32.totalorder %s21, 3
    %p58 = por %p56, %p57
    %p60 = scmp.ne.s32.totalorder %s43, %s59
    %p61 = scmp.eq.s32.totalorder %s21, 0
    %p62 = por %p60, %p61
    %s63 = ssub.s32 %s22, %s34
    %s64 = ssub.s32 %s23, %s30
    %s65 = sor.u32 %s63, %s64
    %p66 = scmp.eq.s32.totalorder %s65, 0
    %s68 = sadd.s32 %s67, 1
    %s69 = scalar_select %p66, %s67, %s68
    %p72 = pneg %p66
    %p73 = scmp.eq.s32.totalorder %s15, 3
    %p74 = por %p72, %p73
    %p75 = scmp.ne.s32.totalorder %s67, %s70
    %p76 = scmp.eq.s32.totalorder %s15, 0
    %p77 = por %p75, %p76
    %p78 = scmp.ne.s32.totalorder %s67, %s70
    %p79 = scmp.eq.s32.totalorder %s20, 3
    %p80 = por %p78, %p79
    %p81 = scmp.ne.s32.totalorder %s70, %s71
    %p82 = scmp.eq.s32.totalorder %s20, 0
    %p83 = por %p81, %p82
    %p84 = scmp.ne.s32.totalorder %s70, %s71
    %p85 = scmp.eq.s32.totalorder %s21, 3
    %p86 = por %p84, %p85
    %p88 = scmp.ne.s32.totalorder %s71, %s87
    %p89 = scmp.eq.s32.totalorder %s21, 0
    %p90 = por %p88, %p89
    %s91 = ssub.s32 %s22, %s34
    %s92 = ssub.s32 %s23, %s30
    %s93 = sor.u32 %s91, %s92
    %p94 = scmp.eq.s32.totalorder %s93, 0
    %s96 = sadd.s32 %s95, 1
    %s97 = scalar_select %p94, %s95, %s96
    %p100 = pneg %p94
    %p101 = scmp.eq.s32.totalorder %s15, 3
    %p102 = por %p100, %p101
    %p103 = scmp.ne.s32.totalorder %s95, %s98
    %p104 = scmp.eq.s32.totalorder %s15, 0
    %p105 = por %p103, %p104
    %p106 = scmp.ne.s32.totalorder %s95, %s98
    %p107 = scmp.eq.s32.totalorder %s20, 3
    %p108 = por %p106, %p107
    %p109 = scmp.ne.s32.totalorder %s98, %s99
    %p110 = scmp.eq.s32.totalorder %s20, 0
    %p111 = por %p109, %p110
    %p112 = scmp.ne.s32.totalorder %s98, %s99
    %p113 = scmp.eq.s32.totalorder %s21, 3
    %p114 = por %p112, %p113
    %p116 = scmp.ne.s32.totalorder %s99, %s115
    %p117 = scmp.eq.s32.totalorder %s21, 0
    %p118 = por %p116, %p117
    %s120 = sadd.s32 %s119, 1
    %p123 = scmp.eq.s32.totalorder %s15, 3
    %p124 = scmp.ne.s32.totalorder %s119, %s121
    %p125 = scmp.eq.s32.totalorder %s15, 0
    %p126 = por %p124, %p125
    %p127 = scmp.ne.s32.totalorder %s119, %s121
    %p128 = scmp.eq.s32.totalorder %s20, 3
    %p129 = por %p127, %p128
    %p130 = scmp.ne.s32.totalorder %s121, %s122
    %p131 = scmp.eq.s32.totalorder %s20, 0
    %p132 = por %p130, %p131
    %p133 = scmp.ne.s32.totalorder %s121, %s122
    %p134 = scmp.eq.s32.totalorder %s21, 3
    %p135 = por %p133, %p134
    %p137 = scmp.ne.s32.totalorder %s122, %s136
    %p138 = scmp.eq.s32.totalorder %s21, 0
    %p139 = por %p137, %p138
    %s141 = sadd.s32 %s140, 1
    %p144 = scmp.eq.s32.totalorder %s15, 3
    %p145 = scmp.ne.s32.totalorder %s140, %s142
    %p146 = scmp.eq.s32.totalorder %s15, 0
    %p147 = por %p145, %p146
    %p148 = scmp.ne.s32.totalorder %s140, %s142
    %p149 = scmp.eq.s32.totalorder %s20, 3
    %p150 = por %p148, %p149
    %p151 = scmp.ne.s32.totalorder %s142, %s143
    %p152 = scmp.eq.s32.totalorder %s20, 0
    %p153 = por %p151, %p152
    %p154 = scmp.ne.s32.totalorder %s142, %s143
    %p155 = scmp.eq.s32.totalorder %s21, 3
    %p156 = por %p154, %p155
    %p158 = scmp.ne.s32.totalorder %s143, %s157
    %p159 = scmp.eq.s32.totalorder %s21, 0
    %p160 = por %p158, %p159
    %s162 = sadd.s32 %s161, 1
    %p165 = scmp.eq.s32.totalorder %s15, 3
    %p166 = scmp.ne.s32.totalorder %s161, %s163
    %p167 = scmp.eq.s32.totalorder %s15, 0
    %p168 = por %p166, %p167
    %p169 = scmp.ne.s32.totalorder %s161, %s163
    %p170 = scmp.eq.s32.totalorder %s20, 3
    %p171 = por %p169, %p170
    %p172 = scmp.ne.s32.totalorder %s163, %s164
    %p173 = scmp.eq.s32.totalorder %s20, 0
    %p174 = por %p172, %p173
    %p175 = scmp.ne.s32.totalorder %s163, %s164
    %p176 = scmp.eq.s32.totalorder %s21, 3
    %p177 = por %p175, %p176
    %p179 = scmp.ne.s32.totalorder %s164, %s178
    %p180 = scmp.eq.s32.totalorder %s21, 0
    %p181 = por %p179, %p180
    %s182 = ssub.s32 %s22, %s34
    %s183 = ssub.s32 %s23, %s30
    %s184 = sor.u32 %s182, %s183
    %p185 = scmp.eq.s32.totalorder %s184, 0
    %s187 = sadd.s32 %s186, 1
    %s188 = scalar_select %p185, %s186, %s187
    %p191 = pneg %p185
    %p192 = scmp.eq.s32.totalorder %s15, 3
    %p193 = por %p191, %p192
    %p194 = scmp.ne.s32.totalorder %s186, %s189
    %p195 = scmp.eq.s32.totalorder %s15, 0
    %p196 = por %p194, %p195
    %p197 = scmp.ne.s32.totalorder %s186, %s189
    %p198 = scmp.eq.s32.totalorder %s20, 3
    %p199 = por %p197, %p198
    %p200 = scmp.ne.s32.totalorder %s189, %s190
    %p201 = scmp.eq.s32.totalorder %s20, 0
    %p202 = por %p200, %p201
    %p203 = scmp.ne.s32.totalorder %s189, %s190
    %p204 = scmp.eq.s32.totalorder %s21, 3
    %p205 = por %p203, %p204
    %p207 = scmp.ne.s32.totalorder %s190, %s206
    %p208 = scmp.eq.s32.totalorder %s21, 0
    %p209 = por %p207, %p208
    %s210 = ssub.s32 %s22, %s34
    %s211 = ssub.s32 %s23, %s30
    %s212 = sor.u32 %s210, %s211
    %p213 = scmp.eq.s32.totalorder %s212, 0
    %s215 = sadd.s32 %s214, 1
    %s216 = scalar_select %p213, %s214, %s215
    %p219 = pneg %p213
    %p220 = scmp.eq.s32.totalorder %s15, 3
    %p221 = por %p219, %p220
    %p222 = scmp.ne.s32.totalorder %s214, %s217
    %p223 = scmp.eq.s32.totalorder %s15, 0
    %p224 = por %p222, %p223
    %p225 = scmp.ne.s32.totalorder %s214, %s217
    %p226 = scmp.eq.s32.totalorder %s20, 3
    %p227 = por %p225, %p226
    %p228 = scmp.ne.s32.totalorder %s217, %s218
    %p229 = scmp.eq.s32.totalorder %s20, 0
    %p230 = por %p228, %p229
    %p231 = scmp.ne.s32.totalorder %s217, %s218
    %p232 = scmp.eq.s32.totalorder %s21, 3
    %p233 = por %p231, %p232
    %p235 = scmp.ne.s32.totalorder %s218, %s234
    %p236 = scmp.eq.s32.totalorder %s21, 0
    %p237 = por %p235, %p236
    %s238 = ssub.s32 %s22, %s34
    %s239 = ssub.s32 %s23, %s30
    %s240 = sor.u32 %s238, %s239
    %p241 = scmp.eq.s32.totalorder %s240, 0
    %s243 = sadd.s32 %s242, 1
    %s244 = scalar_select %p241, %s242, %s243
    %p247 = pneg %p241
    %p248 = scmp.eq.s32.totalorder %s15, 3
    %p249 = por %p247, %p248
    %p250 = scmp.ne.s32.totalorder %s242, %s245
    %p251 = scmp.eq.s32.totalorder %s15, 0
    %p252 = por %p250, %p251
    %p253 = scmp.ne.s32.totalorder %s242, %s245
    %p254 = scmp.eq.s32.totalorder %s20, 3
    %p255 = por %p253, %p254
    %p256 = scmp.ne.s32.totalorder %s245, %s246
    %p257 = scmp.eq.s32.totalorder %s20, 0
    %p258 = por %p256, %p257
    %p259 = scmp.ne.s32.totalorder %s245, %s246
    %p260 = scmp.eq.s32.totalorder %s21, 3
    %p261 = por %p259, %p260
    %p263 = scmp.ne.s32.totalorder %s246, %s262
    %p264 = scmp.eq.s32.totalorder %s21, 0
    %p265 = por %p263, %p264
    %p266 = scmp.le.s32.totalorder 1, %s15
    %p267 = scmp.lt.s32.totalorder %s15, 5
    %p268 = pnand %p266, %p267
    %p269 = pneg %p268
    // Predicated region
    $region9: #{_lambda_.4} parent=5 // pred_check
      _
    $region10: #{_lambda_.4} parent=5 // pred_check_branch
      %271 = sbr.rel (%p268) target = $region12
    $region11: #{_lambda_.4} parent=5 // pred_region
      %s272 = ssub.s32 %s15, 1
      // Predicated region
      $region13: #{_lambda_.4} parent=11 // pred_check
        %p273 = pneg %p132
      $region14: #{_lambda_.4} parent=11 // pred_check_branch
        %275 = sbr.rel (%p273) target = $region16
      $region15: #{_lambda_.4} parent=11 // pred_region
        _
      $region16: #{_lambda_.4} parent=11 // pred_fallthru
        _
      // Predicated region
      $region17: #{_lambda_.4} parent=11 // pred_check
        %p276 = pneg %p153
      $region18: #{_lambda_.4} parent=11 // pred_check_branch
        %278 = sbr.rel (%p276) target = $region20
      $region19: #{_lambda_.4} parent=11 // pred_region
        _
      $region20: #{_lambda_.4} parent=11 // pred_fallthru
        _
      // Predicated region
      $region21: #{_lambda_.4} parent=11 // pred_check
        %p279 = pneg %p174
      $region22: #{_lambda_.4} parent=11 // pred_check_branch
        %281 = sbr.rel (%p279) target = $region24
      $region23: #{_lambda_.4} parent=11 // pred_region
        _
      $region24: #{_lambda_.4} parent=11 // pred_fallthru
        _
    $region12: #{_lambda_.4} parent=5 // pred_fallthru
      _
    %p282 = scmp.lt.s32.totalorder %s15, 4
    // Predicated region
    $region25: #{_lambda_.4} parent=5 // pred_check
      %p283 = pneg %p282
    $region26: #{_lambda_.4} parent=5 // pred_check_branch
      %285 = sbr.rel (%p283) target = $region28
    $region27: #{_lambda_.4} parent=5 // pred_region
      // Predicated region
      $region29: #{_lambda_.4} parent=27 // pred_check
        %p286 = pneg %p49
      $region30: #{_lambda_.4} parent=27 // pred_check_branch
        %288 = sbr.rel (%p286) target = $region32
      $region31: #{_lambda_.4} parent=27 // pred_region
        %s289 = smul.u32 8, %s23
        %p290 = scmp.lt.s32.totalorder %s22, 1
        %s291 = scalar_select %p290, %s22, 1
        %p292 = scmp.lt.s32.totalorder %s289, 15
        %s293 = scalar_select %p292, %s289, 15
        %s294 = smul.addr %s293, 2
        %s295 = smul.addr %s291, 32
        %s296 = sadd.s32 %s294, %s295
        %s297 = smul.addr %s296, 8
        %s298 = scalar_lea.vmem %s0, %s297
        %s299 = smul.u32 8, %s23
      $region32: #{_lambda_.4} parent=27 // pred_fallthru
        _
      // Predicated region
      $region33: #{_lambda_.4} parent=27 // pred_check
        %p300 = pneg %p77
      $region34: #{_lambda_.4} parent=27 // pred_check_branch
        %302 = sbr.rel (%p300) target = $region36
      $region35: #{_lambda_.4} parent=27 // pred_region
        %p303 = scmp.lt.s32.totalorder %s22, 1
        %s304 = scalar_select %p303, %s22, 1
        %p305 = scmp.lt.s32.totalorder %s23, 1
        %s306 = scalar_select %p305, %s23, 1
        %s307 = smul.addr %s306, 2
        %s308 = smul.addr %s304, 4
        %s309 = sadd.s32 %s307, %s308
        %s310 = smul.addr %s309, 8
        %s311 = scalar_lea.vmem %s1, %s310
      $region36: #{_lambda_.4} parent=27 // pred_fallthru
        _
      // Predicated region
      $region37: #{_lambda_.4} parent=27 // pred_check
        %p312 = pneg %p105
      $region38: #{_lambda_.4} parent=27 // pred_check_branch
        %314 = sbr.rel (%p312) target = $region40
      $region39: #{_lambda_.4} parent=27 // pred_region
        %p315 = scmp.lt.s32.totalorder %s22, 1
        %s316 = scalar_select %p315, %s22, 1
        %p317 = scmp.lt.s32.totalorder %s23, 1
        %s318 = scalar_select %p317, %s23, 1
        %s319 = smul.addr %s318, 2
        %s320 = smul.addr %s316, 4
        %s321 = sadd.s32 %s319, %s320
        %s322 = smul.addr %s321, 8
        %s323 = scalar_lea.vmem %s2, %s322
      $region40: #{_lambda_.4} parent=27 // pred_fallthru
        _
    $region28: #{_lambda_.4} parent=5 // pred_fallthru
      _
    %p324 = scmp.le.s32.totalorder 1, %s15
    %p325 = scmp.lt.s32.totalorder %s15, 5
    %p326 = pnand %p324, %p325
    %p327 = pneg %p326
    // Predicated region
    $region41: #{_lambda_.4} parent=5 // pred_check
      _
    $region42: #{_lambda_.4} parent=5 // pred_check_branch
      %329 = sbr.rel (%p326) target = $region44
    $region43: #{_lambda_.4} parent=5 // pred_region
      %s330 = ssub.s32 %s15, 1
      %s331 = smul.u32 8, %s25
      %p332 = scmp.lt.s32.totalorder %s24, 1
      %s333 = scalar_select %p332, %s24, 1
      %p334 = scmp.lt.s32.totalorder %s331, 15
      %s335 = scalar_select %p334, %s331, 15
      %s336 = smul.addr %s335, 2
      %s337 = smul.addr %s333, 32
      %s338 = sadd.s32 %s336, %s337
      %s339 = smul.addr %s338, 8
      %s340 = scalar_lea.vmem %s0, %s339
      %p341 = pneg %p55
      %p342 = pneg %p52
      %p343 = scmp.lt.s32.totalorder %s24, 1
      %s344 = scalar_select %p343, %s24, 1
      %p345 = scmp.lt.s32.totalorder %s25, 1
      %s346 = scalar_select %p345, %s25, 1
      %s347 = smul.addr %s346, 2
      %s348 = smul.addr %s344, 4
      %s349 = sadd.s32 %s347, %s348
      %s350 = smul.addr %s349, 8
      %s351 = scalar_lea.vmem %s1, %s350
      %p352 = pneg %p83
      %p353 = pneg %p80
      %p354 = scmp.lt.s32.totalorder %s24, 1
      %s355 = scalar_select %p354, %s24, 1
      %p356 = scmp.lt.s32.totalorder %s25, 1
      %s357 = scalar_select %p356, %s25, 1
      %s358 = smul.addr %s357, 2
      %s359 = smul.addr %s355, 4
      %s360 = sadd.s32 %s358, %s359
      %s361 = smul.addr %s360, 8
      %s362 = scalar_lea.vmem %s2, %s361
      %p363 = pneg %p111
      %p364 = pneg %p108
      %p365 = pneg %p132
      %p366 = pneg %p129
      %p367 = pneg %p153
      %p368 = pneg %p150
      %p369 = pneg %p174
      %p370 = pneg %p171
      %p371 = pneg %p202
      %p372 = pneg %p199
      %s373 = smul.u32 8, %s25
      %p374 = scmp.lt.s32.totalorder %s24, 1
      %s375 = scalar_select %p374, %s24, 1
      %p376 = scmp.lt.s32.totalorder %s373, 15
      %s377 = scalar_select %p376, %s373, 15
      %s378 = smul.addr %s377, 2
      %s379 = smul.addr %s375, 32
      %s380 = sadd.s32 %s378, %s379
      %s381 = smul.addr %s380, 8
      %s382 = scalar_lea.vmem %s6, %s381
      %p383 = pneg %p230
      %p384 = pneg %p227
      %p385 = scmp.lt.s32.totalorder %s24, 1
      %s386 = scalar_select %p385, %s24, 1
      %p387 = scmp.lt.s32.totalorder %s25, 1
      %s388 = scalar_select %p387, %s25, 1
      %s389 = smul.addr %s386, 2
      %s390 = sadd.s32 %s388, %s389
      %s391 = smul.addr %s390, 8
      %s392 = scalar_lea.vmem %s7, %s391
      %p393 = pneg %p258
      %p394 = pneg %p255
      %p395 = scmp.lt.s32.totalorder %s24, 1
      %s396 = scalar_select %p395, %s24, 1
      %p397 = scmp.lt.s32.totalorder %s25, 1
      %s398 = scalar_select %p397, %s25, 1
      %s399 = smul.addr %s396, 2
      %s400 = sadd.s32 %s398, %s399
      %s401 = smul.addr %s400, 8
      %s402 = scalar_lea.vmem %s8, %s401
      %s403 = smul.u32 8, %s25
      %p404 = scmp.lt.s32.totalorder %s24, 1
      %s405 = scalar_select %p404, %s24, 1
      %p406 = scmp.lt.s32.totalorder %s403, 15
      %s407 = scalar_select %p406, %s403, 15
      %s408 = smul.addr %s407, 2
      %s409 = smul.addr %s405, 32
      %s410 = sadd.s32 %s408, %s409
      %s411 = smul.addr %s410, 8
      %s412 = scalar_lea.vmem %s0, %s411
      %s413 = smul.u32 8, %s25
      %p414 = scmp.lt.s32.totalorder %s24, 1
      %s415 = scalar_select %p414, %s24, 1
      %p416 = scmp.lt.s32.totalorder %s25, 1
      %s417 = scalar_select %p416, %s25, 1
      %s418 = smul.addr %s417, 2
      %s419 = smul.addr %s415, 4
      %s420 = sadd.s32 %s418, %s419
      %s421 = smul.addr %s420, 8
      %s422 = scalar_lea.vmem %s1, %s421
      %p423 = scmp.lt.s32.totalorder %s24, 1
      %s424 = scalar_select %p423, %s24, 1
      %p425 = scmp.lt.s32.totalorder %s25, 1
      %s426 = scalar_select %p425, %s25, 1
      %s427 = smul.addr %s426, 2
      %s428 = smul.addr %s424, 4
      %s429 = sadd.s32 %s427, %s428
      %s430 = smul.addr %s429, 8
      %s431 = scalar_lea.vmem %s2, %s430
      %s432 = smul.u32 8, %s25
      %p433 = scmp.lt.s32.totalorder %s24, 1
      %s434 = scalar_select %p433, %s24, 1
      %p435 = scmp.lt.s32.totalorder %s432, 15
      %s436 = scalar_select %p435, %s432, 15
      %s437 = smul.addr %s436, 2
      %s438 = smul.addr %s434, 32
      %s439 = sadd.s32 %s437, %s438
      %s440 = smul.addr %s439, 8
      %s441 = scalar_lea.vmem %s6, %s440
      %s442 = smul.u32 8, %s25
      %p443 = scmp.lt.s32.totalorder %s24, 1
      %s444 = scalar_select %p443, %s24, 1
      %p445 = scmp.lt.s32.totalorder %s25, 1
      %s446 = scalar_select %p445, %s25, 1
      %s447 = smul.addr %s444, 2
      %s448 = sadd.s32 %s446, %s447
      %s449 = smul.addr %s448, 8
      %s450 = scalar_lea.vmem %s7, %s449
      %p451 = scmp.lt.s32.totalorder %s24, 1
      %s452 = scalar_select %p451, %s24, 1
      %p453 = scmp.lt.s32.totalorder %s25, 1
      %s454 = scalar_select %p453, %s25, 1
      %s455 = smul.addr %s452, 2
      %s456 = sadd.s32 %s454, %s455
      %s457 = smul.addr %s456, 8
      %s458 = scalar_lea.vmem %s8, %s457
      %v459 = vld [vmem:[%s412] sm:$0xff]
      %v460 = vld [vmem:[%s412 + $0x8] sm:$0xff]
      %v461 = vld [vmem:[%s412 + $0x10] sm:$0xff]
      %v462 = vld [vmem:[%s412 + $0x18] sm:$0xff]
      %v463 = vld [vmem:[%s412 + $0x20] sm:$0xff]
      %v464 = vld [vmem:[%s412 + $0x28] sm:$0xff]
      %v465 = vld [vmem:[%s412 + $0x30] sm:$0xff]
      %v466 = vld [vmem:[%s412 + $0x38] sm:$0xff]
      %v467 = vld [vmem:[%s412 + $0x40] sm:$0xff]
      %v468 = vld [vmem:[%s412 + $0x48] sm:$0xff]
      %v469 = vld [vmem:[%s412 + $0x50] sm:$0xff]
      %v470 = vld [vmem:[%s412 + $0x58] sm:$0xff]
      %v471 = vld [vmem:[%s412 + $0x60] sm:$0xff]
      %v472 = vld [vmem:[%s412 + $0x68] sm:$0xff]
      %v473 = vld [vmem:[%s412 + $0x70] sm:$0xff]
      %v474 = vld [vmem:[%s412 + $0x78] sm:$0xff]
      %v475 = vld [vmem:[%s3] sm:$0x1]
      %v476 = vld [vmem:[%s4] sm:$0x1]
      %v478 = vlaneseq
      %v479 = vshrl.u32 %v478, 7
      %v480 = vsub.s32 0, %v479
      %v481 = vrot.slane %v475, %v480
      %v483 = vmul.f32 %v459, %v481
      %v484 = vmul.f32 %v460, %v481
      %v485 = vmul.f32 %v461, %v481
      %v486 = vmul.f32 %v462, %v481
      %v487 = vmul.f32 %v463, %v481
      %v488 = vmul.f32 %v464, %v481
      %v489 = vmul.f32 %v465, %v481
      %v490 = vmul.f32 %v466, %v481
      %v491 = vmul.f32 %v467, %v481
      %v492 = vmul.f32 %v468, %v481
      %v493 = vmul.f32 %v469, %v481
      %v494 = vmul.f32 %v470, %v481
      %v495 = vmul.f32 %v471, %v481
      %v496 = vmul.f32 %v472, %v481
      %v497 = vmul.f32 %v473, %v481
      %v498 = vmul.f32 %v474, %v481
      %v500 = vlaneseq
      %v501 = vshrl.u32 %v500, 7
      %v502 = vsub.s32 0, %v501
      %v503 = vrot.slane %v476, %v502
      %v505 = vadd.f32 %v483, %v503
      %v506 = vadd.f32 %v484, %v503
      %v507 = vadd.f32 %v485, %v503
      %v508 = vadd.f32 %v486, %v503
      %v509 = vadd.f32 %v487, %v503
      %v510 = vadd.f32 %v488, %v503
      %v511 = vadd.f32 %v489, %v503
      %v512 = vadd.f32 %v490, %v503
      %v513 = vadd.f32 %v491, %v503
      %v514 = vadd.f32 %v492, %v503
      %v515 = vadd.f32 %v493, %v503
      %v516 = vadd.f32 %v494, %v503
      %v517 = vadd.f32 %v495, %v503
      %v518 = vadd.f32 %v496, %v503
      %v519 = vadd.f32 %v497, %v503
      %v520 = vadd.f32 %v498, %v503
      %v521 = vmax.f32 %v505, 0.0
      %v522 = vmax.f32 %v506, 0.0
      %v523 = vmax.f32 %v507, 0.0
      %v524 = vmax.f32 %v508, 0.0
      %v525 = vmax.f32 %v509, 0.0
      %v526 = vmax.f32 %v510, 0.0
      %v527 = vmax.f32 %v511, 0.0
      %v528 = vmax.f32 %v512, 0.0
      %v529 = vmax.f32 %v513, 0.0
      %v530 = vmax.f32 %v514, 0.0
      %v531 = vmax.f32 %v515, 0.0
      %v532 = vmax.f32 %v516, 0.0
      %v533 = vmax.f32 %v517, 0.0
      %v534 = vmax.f32 %v518, 0.0
      %v535 = vmax.f32 %v519, 0.0
      %v536 = vmax.f32 %v520, 0.0
      %537 = vst [vmem:[#allocation2] sm:$0x1] 0.0
      %538 = vst [vmem:[#allocation2 + $0x18] sm:$0x1] 0.0
      %539 = vst [vmem:[#allocation2 + $0x30] sm:$0x1] 0.0
      %540 = vst [vmem:[#allocation2 + $0x48] sm:$0x1] 0.0
      %541 = vst [vmem:[#allocation2 + $0x60] sm:$0x1] 0.0
      %542 = vst [vmem:[#allocation2 + $0x78] sm:$0x1] 0.0
      %543 = vst [vmem:[#allocation2 + $0x90] sm:$0x1] 0.0
      %544 = vst [vmem:[#allocation2 + $0xa8] sm:$0x1] 0.0
      %545 = vst [vmem:[#allocation2 + $0xc0] sm:$0x1] 0.0
      %546 = vst [vmem:[#allocation2 + $0xd8] sm:$0x1] 0.0
      %547 = vst [vmem:[#allocation2 + $0x11] sm:$0x1] 0.0
      %548 = vst [vmem:[#allocation2 + $0x29] sm:$0x1] 0.0
      %549 = vst [vmem:[#allocation2 + $0x41] sm:$0x1] 0.0
      %550 = vst [vmem:[#allocation2 + $0x59] sm:$0x1] 0.0
      %551 = vst [vmem:[#allocation2 + $0x71] sm:$0x1] 0.0
      %552 = vst [vmem:[#allocation2 + $0x89] sm:$0x1] 0.0
      %553 = vst [vmem:[#allocation2 + $0xa1] sm:$0x1] 0.0
      %554 = vst [vmem:[#allocation2 + $0xb9] sm:$0x1] 0.0
      %555 = vst [vmem:[#allocation2 + $0xd1] sm:$0x1] 0.0
      %556 = vst [vmem:[#allocation2 + $0xe9] sm:$0x1] 0.0
      %v557 = vld [vmem:[%s422] sm:$0xff]
      %v558 = vld [vmem:[%s422 + $0x8] sm:$0xff]
      %559 = vst [vmem:[#allocation2 + $0x1] sm:$0xff] %v557
      %560 = vst [vmem:[#allocation2 + $0x9] sm:$0xff] %v558
      %v561 = vld [vmem:[%s431] sm:$0xff]
      %v562 = vld [vmem:[%s431 + $0x8] sm:$0xff]
      %s563 = scalar_lea.vmem [#allocation2], 216
      %564 = vst [vmem:[%s563 + $0x1] sm:$0xff] %v561
      %565 = vst [vmem:[%s563 + $0x9] sm:$0xff] %v562
      %s566 = scalar_lea.vmem [#allocation2], 24
      %567 = vst [vmem:[%s566 + $0x1] sm:$0xff] %v521
      %568 = vst [vmem:[%s566 + $0x9] sm:$0xff] %v522
      %569 = vst [vmem:[%s566 + $0x19] sm:$0xff] %v523
      %570 = vst [vmem:[%s566 + $0x21] sm:$0xff] %v524
      %571 = vst [vmem:[%s566 + $0x31] sm:$0xff] %v525
      %572 = vst [vmem:[%s566 + $0x39] sm:$0xff] %v526
      %573 = vst [vmem:[%s566 + $0x49] sm:$0xff] %v527
      %574 = vst [vmem:[%s566 + $0x51] sm:$0xff] %v528
      %575 = vst [vmem:[%s566 + $0x61] sm:$0xff] %v529
      %576 = vst [vmem:[%s566 + $0x69] sm:$0xff] %v530
      %577 = vst [vmem:[%s566 + $0x79] sm:$0xff] %v531
      %578 = vst [vmem:[%s566 + $0x81] sm:$0xff] %v532
      %579 = vst [vmem:[%s566 + $0x91] sm:$0xff] %v533
      %580 = vst [vmem:[%s566 + $0x99] sm:$0xff] %v534
      %581 = vst [vmem:[%s566 + $0xa9] sm:$0xff] %v535
      %582 = vst [vmem:[%s566 + $0xb1] sm:$0xff] %v536
      %vm583 = vcmask 1048128
      %584 = vst.msk [vmem:[#allocation3] sm:$0xff] %vm583, 0.0
      %585 = vst.msk [vmem:[#allocation3 + $0x8] sm:$0xff] %vm583, 0.0
      %586 = vst.msk [vmem:[#allocation3 + $0x10] sm:$0xff] %vm583, 0.0
      %587 = vst.msk [vmem:[#allocation3 + $0x18] sm:$0xff] %vm583, 0.0
      %588 = vst.msk [vmem:[#allocation3 + $0x20] sm:$0xff] %vm583, 0.0
      %589 = vst.msk [vmem:[#allocation3 + $0x28] sm:$0xff] %vm583, 0.0
      %590 = vst.msk [vmem:[#allocation3 + $0x30] sm:$0xff] %vm583, 0.0
      %591 = vst.msk [vmem:[#allocation3 + $0x38] sm:$0xff] %vm583, 0.0
      %v592 = vld [vmem:[%s5] sm:$0xff]
      %v593 = vld [vmem:[%s5 + $0x8] sm:$0xff]
      %v594 = vld [vmem:[%s5 + $0x10] sm:$0xff]
      %v595 = vld [vmem:[%s5 + $0x18] sm:$0xff]
      %v596 = vld [vmem:[%s5 + $0x20] sm:$0xff]
      %v597 = vld [vmem:[%s5 + $0x28] sm:$0xff]
      %v598 = vld [vmem:[%s5 + $0x30] sm:$0xff]
      %v599 = vld [vmem:[%s5 + $0x38] sm:$0xff]
      %v600 = vld [vmem:[%s5 + $0x40] sm:$0xff]
      %v601 = vld [vmem:[%s5 + $0x48] sm:$0xff]
      %v602 = vld [vmem:[%s5 + $0x50] sm:$0xff]
      %v603 = vld [vmem:[%s5 + $0x58] sm:$0xff]
      %v604 = vld [vmem:[%s5 + $0x60] sm:$0xff]
      %v605 = vld [vmem:[%s5 + $0x68] sm:$0xff]
      %v606 = vld [vmem:[%s5 + $0x70] sm:$0xff]
      %v607 = vld [vmem:[%s5 + $0x78] sm:$0xff]
      %v608 = vld [vmem:[#allocation2] sm:$0xff]
      %v609 = vld [vmem:[#allocation2 + $0x8] sm:$0xff]
      %v610 = vld [vmem:[#allocation2 + $0x18] sm:$0xff]
      %v611 = vld [vmem:[#allocation2 + $0x20] sm:$0xff]
      %v612 = vld [vmem:[#allocation2 + $0x30] sm:$0xff]
      %v613 = vld [vmem:[#allocation2 + $0x38] sm:$0xff]
      %v614 = vld [vmem:[#allocation2 + $0x48] sm:$0xff]
      %v615 = vld [vmem:[#allocation2 + $0x50] sm:$0xff]
      %vm616 = vcmask 64512
      %617 = vst.msk [vmem:[#allocation3] sm:$0xff] %vm616, %v608
      %618 = vst.msk [vmem:[#allocation3 + $0x8] sm:$0xff] %vm616, %v609
      %619 = vst.msk [vmem:[#allocation3 + $0x10] sm:$0xff] %vm616, %v610
      %620 = vst.msk [vmem:[#allocation3 + $0x18] sm:$0xff] %vm616, %v611
      %621 = vst.msk [vmem:[#allocation3 + $0x20] sm:$0xff] %vm616, %v612
      %622 = vst.msk [vmem:[#allocation3 + $0x28] sm:$0xff] %vm616, %v613
      %623 = vst.msk [vmem:[#allocation3 + $0x30] sm:$0xff] %vm616, %v614
      %624 = vst.msk [vmem:[#allocation3 + $0x38] sm:$0xff] %vm616, %v615
      %v625 = vld [vmem:[#allocation2 + $0x1] sm:$0xff]
      %v626 = vld [vmem:[#allocation2 + $0x9] sm:$0xff]
      %v627 = vld [vmem:[#allocation2 + $0x19] sm:$0xff]
      %v628 = vld [vmem:[#allocation2 + $0x21] sm:$0xff]
      %v629 = vld [vmem:[#allocation2 + $0x31] sm:$0xff]
      %v630 = vld [vmem:[#allocation2 + $0x39] sm:$0xff]
      %v631 = vld [vmem:[#allocation2 + $0x49] sm:$0xff]
      %v632 = vld [vmem:[#allocation2 + $0x51] sm:$0xff]
      %641 = vrot.lane.b32.xlu0 %v625, 8
      %v642 = vpop.permute.xlu0 %641
      %643 = vrot.lane.b32.xlu0 %v626, 8
      %v644 = vpop.permute.xlu0 %643
      %645 = vrot.lane.b32.xlu0 %v627, 8
      %v646 = vpop.permute.xlu0 %645
      %647 = vrot.lane.b32.xlu0 %v628, 8
      %v648 = vpop.permute.xlu0 %647
      %649 = vrot.lane.b32.xlu0 %v629, 8
      %v650 = vpop.permute.xlu0 %649
      %651 = vrot.lane.b32.xlu0 %v630, 8
      %v652 = vpop.permute.xlu0 %651
      %653 = vrot.lane.b32.xlu0 %v631, 8
      %v654 = vpop.permute.xlu0 %653
      %655 = vrot.lane.b32.xlu0 %v632, 8
      %v656 = vpop.permute.xlu0 %655
      %vm665 = vcmask 130112
      %666 = vst.msk [vmem:[#allocation3] sm:$0xff] %vm665, %v642
      %667 = vst.msk [vmem:[#allocation3 + $0x8] sm:$0xff] %vm665, %v644
      %668 = vst.msk [vmem:[#allocation3 + $0x10] sm:$0xff] %vm665, %v646
      %669 = vst.msk [vmem:[#allocation3 + $0x18] sm:$0xff] %vm665, %v648
      %670 = vst.msk [vmem:[#allocation3 + $0x20] sm:$0xff] %vm665, %v650
      %671 = vst.msk [vmem:[#allocation3 + $0x28] sm:$0xff] %vm665, %v652
      %672 = vst.msk [vmem:[#allocation3 + $0x30] sm:$0xff] %vm665, %v654
      %673 = vst.msk [vmem:[#allocation3 + $0x38] sm:$0xff] %vm665, %v656
      %v674 = vld [vmem:[#allocation2 + $0x2] sm:$0xff]
      %v675 = vld [vmem:[#allocation2 + $0xa] sm:$0xff]
      %v676 = vld [vmem:[#allocation2 + $0x1a] sm:$0xff]
      %v677 = vld [vmem:[#allocation2 + $0x22] sm:$0xff]
      %v678 = vld [vmem:[#allocation2 + $0x32] sm:$0xff]
      %v679 = vld [vmem:[#allocation2 + $0x3a] sm:$0xff]
      %v680 = vld [vmem:[#allocation2 + $0x4a] sm:$0xff]
      %v681 = vld [vmem:[#allocation2 + $0x52] sm:$0xff]
      %690 = vrot.lane.b32.xlu0 %v674, 16
      %v691 = vpop.permute.xlu0 %690
      %692 = vrot.lane.b32.xlu0 %v675, 16
      %v693 = vpop.permute.xlu0 %692
      %694 = vrot.lane.b32.xlu0 %v676, 16
      %v695 = vpop.permute.xlu0 %694
      %696 = vrot.lane.b32.xlu0 %v677, 16
      %v697 = vpop.permute.xlu0 %696
      %698 = vrot.lane.b32.xlu0 %v678, 16
      %v699 = vpop.permute.xlu0 %698
      %700 = vrot.lane.b32.xlu0 %v679, 16
      %v701 = vpop.permute.xlu0 %700
      %702 = vrot.lane.b32.xlu0 %v680, 16
      %v703 = vpop.permute.xlu0 %702
      %704 = vrot.lane.b32.xlu0 %v681, 16
      %v705 = vpop.permute.xlu0 %704
      %vm714 = vcmask 195712
      %715 = vst.msk [vmem:[#allocation3] sm:$0xff] %vm714, %v691
      %716 = vst.msk [vmem:[#allocation3 + $0x8] sm:$0xff] %vm714, %v693
      %717 = vst.msk [vmem:[#allocation3 + $0x10] sm:$0xff] %vm714, %v695
      %718 = vst.msk [vmem:[#allocation3 + $0x18] sm:$0xff] %vm714, %v697
      %719 = vst.msk [vmem:[#allocation3 + $0x20] sm:$0xff] %vm714, %v699
      %720 = vst.msk [vmem:[#allocation3 + $0x28] sm:$0xff] %vm714, %v701
      %721 = vst.msk [vmem:[#allocation3 + $0x30] sm:$0xff] %vm714, %v703
      %722 = vst.msk [vmem:[#allocation3 + $0x38] sm:$0xff] %vm714, %v705
      %v723 = vld [vmem:[%s566] sm:$0xff]
      %v724 = vld [vmem:[%s566 + $0x8] sm:$0xff]
      %v725 = vld [vmem:[%s566 + $0x18] sm:$0xff]
      %v726 = vld [vmem:[%s566 + $0x20] sm:$0xff]
      %v727 = vld [vmem:[%s566 + $0x30] sm:$0xff]
      %v728 = vld [vmem:[%s566 + $0x38] sm:$0xff]
      %v729 = vld [vmem:[%s566 + $0x48] sm:$0xff]
      %v730 = vld [vmem:[%s566 + $0x50] sm:$0xff]
      %739 = vrot.lane.b32.xlu0 %v723, 24
      %v740 = vpop.permute.xlu0 %739
      %741 = vrot.lane.b32.xlu0 %v724, 24
      %v742 = vpop.permute.xlu0 %741
      %743 = vrot.lane.b32.xlu0 %v725, 24
      %v744 = vpop.permute.xlu0 %743
      %745 = vrot.lane.b32.xlu0 %v726, 24
      %v746 = vpop.permute.xlu0 %745
      %747 = vrot.lane.b32.xlu0 %v727, 24
      %v748 = vpop.permute.xlu0 %747
      %749 = vrot.lane.b32.xlu0 %v728, 24
      %v750 = vpop.permute.xlu0 %749
      %751 = vrot.lane.b32.xlu0 %v729, 24
      %v752 = vpop.permute.xlu0 %751
      %753 = vrot.lane.b32.xlu0 %v730, 24
      %v754 = vpop.permute.xlu0 %753
      %vm763 = vcmask 261312
      %764 = vst.msk [vmem:[#allocation3] sm:$0xff] %vm763, %v740
      %765 = vst.msk [vmem:[#allocation3 + $0x8] sm:$0xff] %vm763, %v742
      %766 = vst.msk [vmem:[#allocation3 + $0x10] sm:$0xff] %vm763, %v744
      %767 = vst.msk [vmem:[#allocation3 + $0x18] sm:$0xff] %vm763, %v746
      %768 = vst.msk [vmem:[#allocation3 + $0x20] sm:$0xff] %vm763, %v748
      %769 = vst.msk [vmem:[#allocation3 + $0x28] sm:$0xff] %vm763, %v750
      %770 = vst.msk [vmem:[#allocation3 + $0x30] sm:$0xff] %vm763, %v752
      %771 = vst.msk [vmem:[#allocation3 + $0x38] sm:$0xff] %vm763, %v754
      %v772 = vld [vmem:[%s566 + $0x1] sm:$0xff]
      %v773 = vld [vmem:[%s566 + $0x9] sm:$0xff]
      %v774 = vld [vmem:[%s566 + $0x19] sm:$0xff]
      %v775 = vld [vmem:[%s566 + $0x21] sm:$0xff]
      %v776 = vld [vmem:[%s566 + $0x31] sm:$0xff]
      %v777 = vld [vmem:[%s566 + $0x39] sm:$0xff]
      %v778 = vld [vmem:[%s566 + $0x49] sm:$0xff]
      %v779 = vld [vmem:[%s566 + $0x51] sm:$0xff]
      %788 = vrot.lane.b32.xlu0 %v772, 32
      %v789 = vpop.permute.xlu0 %788
      %790 = vrot.lane.b32.xlu0 %v773, 32
      %v791 = vpop.permute.xlu0 %790
      %792 = vrot.lane.b32.xlu0 %v774, 32
      %v793 = vpop.permute.xlu0 %792
      %794 = vrot.lane.b32.xlu0 %v775, 32
      %v795 = vpop.permute.xlu0 %794
      %796 = vrot.lane.b32.xlu0 %v776, 32
      %v797 = vpop.permute.xlu0 %796
      %798 = vrot.lane.b32.xlu0 %v777, 32
      %v799 = vpop.permute.xlu0 %798
      %800 = vrot.lane.b32.xlu0 %v778, 32
      %v801 = vpop.permute.xlu0 %800
      %802 = vrot.lane.b32.xlu0 %v779, 32
      %v803 = vpop.permute.xlu0 %802
      %vm812 = vcmask 326912
      %813 = vst.msk [vmem:[#allocation3] sm:$0xff] %vm812, %v789
      %814 = vst.msk [vmem:[#allocation3 + $0x8] sm:$0xff] %vm812, %v791
      %815 = vst.msk [vmem:[#allocation3 + $0x10] sm:$0xff] %vm812, %v793
      %816 = vst.msk [vmem:[#allocation3 + $0x18] sm:$0xff] %vm812, %v795
      %817 = vst.msk [vmem:[#allocation3 + $0x20] sm:$0xff] %vm812, %v797
      %818 = vst.msk [vmem:[#allocation3 + $0x28] sm:$0xff] %vm812, %v799
      %819 = vst.msk [vmem:[#allocation3 + $0x30] sm:$0xff] %vm812, %v801
      %820 = vst.msk [vmem:[#allocation3 + $0x38] sm:$0xff] %vm812, %v803
      %v821 = vld [vmem:[%s566 + $0x2] sm:$0xff]
      %v822 = vld [vmem:[%s566 + $0xa] sm:$0xff]
      %v823 = vld [vmem:[%s566 + $0x1a] sm:$0xff]
      %v824 = vld [vmem:[%s566 + $0x22] sm:$0xff]
      %v825 = vld [vmem:[%s566 + $0x32] sm:$0xff]
      %v826 = vld [vmem:[%s566 + $0x3a] sm:$0xff]
      %v827 = vld [vmem:[%s566 + $0x4a] sm:$0xff]
      %v828 = vld [vmem:[%s566 + $0x52] sm:$0xff]
      %837 = vrot.lane.b32.xlu0 %v821, 40
      %v838 = vpop.permute.xlu0 %837
      %839 = vrot.lane.b32.xlu0 %v822, 40
      %v840 = vpop.permute.xlu0 %839
      %841 = vrot.lane.b32.xlu0 %v823, 40
      %v842 = vpop.permute.xlu0 %841
      %843 = vrot.lane.b32.xlu0 %v824, 40
      %v844 = vpop.permute.xlu0 %843
      %845 = vrot.lane.b32.xlu0 %v825, 40
      %v846 = vpop.permute.xlu0 %845
      %847 = vrot.lane.b32.xlu0 %v826, 40
      %v848 = vpop.permute.xlu0 %847
      %849 = vrot.lane.b32.xlu0 %v827, 40
      %v850 = vpop.permute.xlu0 %849
      %851 = vrot.lane.b32.xlu0 %v828, 40
      %v852 = vpop.permute.xlu0 %851
      %vm861 = vcmask 392512
      %862 = vst.msk [vmem:[#allocation3] sm:$0xff] %vm861, %v838
      %863 = vst.msk [vmem:[#allocation3 + $0x8] sm:$0xff] %vm861, %v840
      %864 = vst.msk [vmem:[#allocation3 + $0x10] sm:$0xff] %vm861, %v842
      %865 = vst.msk [vmem:[#allocation3 + $0x18] sm:$0xff] %vm861, %v844
      %866 = vst.msk [vmem:[#allocation3 + $0x20] sm:$0xff] %vm861, %v846
      %867 = vst.msk [vmem:[#allocation3 + $0x28] sm:$0xff] %vm861, %v848
      %868 = vst.msk [vmem:[#allocation3 + $0x30] sm:$0xff] %vm861, %v850
      %869 = vst.msk [vmem:[#allocation3 + $0x38] sm:$0xff] %vm861, %v852
      %s870 = scalar_lea.vmem [#allocation2], 48
      %v871 = vld [vmem:[%s870] sm:$0xff]
      %v872 = vld [vmem:[%s870 + $0x8] sm:$0xff]
      %v873 = vld [vmem:[%s870 + $0x18] sm:$0xff]
      %v874 = vld [vmem:[%s870 + $0x20] sm:$0xff]
      %v875 = vld [vmem:[%s870 + $0x30] sm:$0xff]
      %v876 = vld [vmem:[%s870 + $0x38] sm:$0xff]
      %v877 = vld [vmem:[%s870 + $0x48] sm:$0xff]
      %v878 = vld [vmem:[%s870 + $0x50] sm:$0xff]
      %887 = vrot.lane.b32.xlu0 %v871, 48
      %v888 = vpop.permute.xlu0 %887
      %889 = vrot.lane.b32.xlu0 %v872, 48
      %v890 = vpop.permute.xlu0 %889
      %891 = vrot.lane.b32.xlu0 %v873, 48
      %v892 = vpop.permute.xlu0 %891
      %893 = vrot.lane.b32.xlu0 %v874, 48
      %v894 = vpop.permute.xlu0 %893
      %895 = vrot.lane.b32.xlu0 %v875, 48
      %v896 = vpop.permute.xlu0 %895
      %897 = vrot.lane.b32.xlu0 %v876, 48
      %v898 = vpop.permute.xlu0 %897
      %899 = vrot.lane.b32.xlu0 %v877, 48
      %v900 = vpop.permute.xlu0 %899
      %901 = vrot.lane.b32.xlu0 %v878, 48
      %v902 = vpop.permute.xlu0 %901
      %vm911 = vcmask 458112
      %912 = vst.msk [vmem:[#allocation3] sm:$0xff] %vm911, %v888
      %913 = vst.msk [vmem:[#allocation3 + $0x8] sm:$0xff] %vm911, %v890
      %914 = vst.msk [vmem:[#allocation3 + $0x10] sm:$0xff] %vm911, %v892
      %915 = vst.msk [vmem:[#allocation3 + $0x18] sm:$0xff] %vm911, %v894
      %916 = vst.msk [vmem:[#allocation3 + $0x20] sm:$0xff] %vm911, %v896
      %917 = vst.msk [vmem:[#allocation3 + $0x28] sm:$0xff] %vm911, %v898
      %918 = vst.msk [vmem:[#allocation3 + $0x30] sm:$0xff] %vm911, %v900
      %919 = vst.msk [vmem:[#allocation3 + $0x38] sm:$0xff] %vm911, %v902
      %v920 = vld [vmem:[%s870 + $0x1] sm:$0xff]
      %v921 = vld [vmem:[%s870 + $0x9] sm:$0xff]
      %v922 = vld [vmem:[%s870 + $0x19] sm:$0xff]
      %v923 = vld [vmem:[%s870 + $0x21] sm:$0xff]
      %v924 = vld [vmem:[%s870 + $0x31] sm:$0xff]
      %v925 = vld [vmem:[%s870 + $0x39] sm:$0xff]
      %v926 = vld [vmem:[%s870 + $0x49] sm:$0xff]
      %v927 = vld [vmem:[%s870 + $0x51] sm:$0xff]
      %936 = vrot.lane.b32.xlu0 %v920, 56
      %v937 = vpop.permute.xlu0 %936
      %938 = vrot.lane.b32.xlu0 %v921, 56
      %v939 = vpop.permute.xlu0 %938
      %940 = vrot.lane.b32.xlu0 %v922, 56
      %v941 = vpop.permute.xlu0 %940
      %942 = vrot.lane.b32.xlu0 %v923, 56
      %v943 = vpop.permute.xlu0 %942
      %944 = vrot.lane.b32.xlu0 %v924, 56
      %v945 = vpop.permute.xlu0 %944
      %946 = vrot.lane.b32.xlu0 %v925, 56
      %v947 = vpop.permute.xlu0 %946
      %948 = vrot.lane.b32.xlu0 %v926, 56
      %v949 = vpop.permute.xlu0 %948
      %950 = vrot.lane.b32.xlu0 %v927, 56
      %v951 = vpop.permute.xlu0 %950
      %vm960 = vcmask 523712
      %961 = vst.msk [vmem:[#allocation3] sm:$0xff] %vm960, %v937
      %962 = vst.msk [vmem:[#allocation3 + $0x8] sm:$0xff] %vm960, %v939
      %963 = vst.msk [vmem:[#allocation3 + $0x10] sm:$0xff] %vm960, %v941
      %964 = vst.msk [vmem:[#allocation3 + $0x18] sm:$0xff] %vm960, %v943
      %965 = vst.msk [vmem:[#allocation3 + $0x20] sm:$0xff] %vm960, %v945
      %966 = vst.msk [vmem:[#allocation3 + $0x28] sm:$0xff] %vm960, %v947
      %967 = vst.msk [vmem:[#allocation3 + $0x30] sm:$0xff] %vm960, %v949
      %968 = vst.msk [vmem:[#allocation3 + $0x38] sm:$0xff] %vm960, %v951
      %v969 = vld [vmem:[%s870 + $0x2] sm:$0xff]
      %v970 = vld [vmem:[%s870 + $0xa] sm:$0xff]
      %v971 = vld [vmem:[%s870 + $0x1a] sm:$0xff]
      %v972 = vld [vmem:[%s870 + $0x22] sm:$0xff]
      %v973 = vld [vmem:[%s870 + $0x32] sm:$0xff]
      %v974 = vld [vmem:[%s870 + $0x3a] sm:$0xff]
      %v975 = vld [vmem:[%s870 + $0x4a] sm:$0xff]
      %v976 = vld [vmem:[%s870 + $0x52] sm:$0xff]
      %985 = vrot.lane.b32.xlu0 %v969, 64
      %v986 = vpop.permute.xlu0 %985
      %987 = vrot.lane.b32.xlu0 %v970, 64
      %v988 = vpop.permute.xlu0 %987
      %989 = vrot.lane.b32.xlu0 %v971, 64
      %v990 = vpop.permute.xlu0 %989
      %991 = vrot.lane.b32.xlu0 %v972, 64
      %v992 = vpop.permute.xlu0 %991
      %993 = vrot.lane.b32.xlu0 %v973, 64
      %v994 = vpop.permute.xlu0 %993
      %995 = vrot.lane.b32.xlu0 %v974, 64
      %v996 = vpop.permute.xlu0 %995
      %997 = vrot.lane.b32.xlu0 %v975, 64
      %v998 = vpop.permute.xlu0 %997
      %999 = vrot.lane.b32.xlu0 %v976, 64
      %v1000 = vpop.permute.xlu0 %999
      %vm1009 = vcmask 589312
      %1010 = vst.msk [vmem:[#allocation3] sm:$0xff] %vm1009, %v986
      %1011 = vst.msk [vmem:[#allocation3 + $0x8] sm:$0xff] %vm1009, %v988
      %1012 = vst.msk [vmem:[#allocation3 + $0x10] sm:$0xff] %vm1009, %v990
      %1013 = vst.msk [vmem:[#allocation3 + $0x18] sm:$0xff] %vm1009, %v992
      %1014 = vst.msk [vmem:[#allocation3 + $0x20] sm:$0xff] %vm1009, %v994
      %1015 = vst.msk [vmem:[#allocation3 + $0x28] sm:$0xff] %vm1009, %v996
      %1016 = vst.msk [vmem:[#allocation3 + $0x30] sm:$0xff] %vm1009, %v998
      %1017 = vst.msk [vmem:[#allocation3 + $0x38] sm:$0xff] %vm1009, %v1000
      %v1018 = vld [vmem:[#allocation3] sm:$0xff]
      %v1019 = vld [vmem:[#allocation3 + $0x8] sm:$0xff]
      %v1020 = vld [vmem:[#allocation3 + $0x10] sm:$0xff]
      %v1021 = vld [vmem:[#allocation3 + $0x18] sm:$0xff]
      %v1022 = vld [vmem:[#allocation3 + $0x20] sm:$0xff]
      %v1023 = vld [vmem:[#allocation3 + $0x28] sm:$0xff]
      %v1024 = vld [vmem:[#allocation3 + $0x30] sm:$0xff]
      %v1025 = vld [vmem:[#allocation3 + $0x38] sm:$0xff]
      %1026 = vmatprep.subr.mxu0 0.0
      %1027 = vmatpush1.msra.mxu0 %v592
      %1028 = vmatprep.subr.mxu0 0.0
      %1029 = vmatpush1.msra.mxu0 %v593
      %1030 = vmatprep.subr.mxu0 0.0
      %1031 = vmatpush1.msra.mxu0 %v594
      %1032 = vmatprep.subr.mxu0 0.0
      %1033 = vmatpush1.msra.mxu0 %v595
      %1034 = vmatprep.subr.mxu0 0.0
      %1035 = vmatpush1.msra.mxu0 %v596
      %1036 = vmatprep.subr.mxu0 0.0
      %1037 = vmatpush1.msra.mxu0 %v597
      %1038 = vmatprep.subr.mxu0 0.0
      %1039 = vmatpush1.msra.mxu0 %v598
      %1040 = vmatprep.subr.mxu0 0.0
      %1041 = vmatpush1.msra.mxu0 %v599
      %1042 = vmatprep.subr.mxu0 0.0
      %1043 = vmatpush1.msra.mxu0 %v600
      %1044 = vmatprep.subr.mxu0 0.0
      %1045 = vmatpush1.msra.mxu0 %v601
      %1046 = vmatprep.subr.mxu0 0.0
      %1047 = vmatpush1.msra.mxu0 %v602
      %1048 = vmatprep.subr.mxu0 0.0
      %1049 = vmatpush1.msra.mxu0 %v603
      %1050 = vmatprep.subr.mxu0 0.0
      %1051 = vmatpush1.msra.mxu0 %v604
      %1052 = vmatprep.subr.mxu0 0.0
      %1053 = vmatpush1.msra.mxu0 %v605
      %1054 = vmatprep.subr.mxu0 0.0
      %1055 = vmatpush1.msra.mxu0 %v606
      %1056 = vmatprep.subr.mxu0 0.0
      %1057 = vmatpush1.msra.mxu0 %v607
      %1058 = vmatprep.subr.mxu0 0.0
      %1059 = vmatpush1.msra.mxu0 0.0
      %1060 = vmatprep.subr.mxu0 0.0
      %1061 = vmatpush1.msra.mxu0 0.0
      %1062 = vmatprep.subr.mxu0 0.0
      %1063 = vmatpush1.msra.mxu0 0.0
      %1064 = vmatprep.subr.mxu0 0.0
      %1065 = vmatpush1.msra.mxu0 0.0
      %1066 = vmatprep.subr.mxu0 0.0
      %1067 = vmatpush1.msra.mxu0 0.0
      %1068 = vmatprep.subr.mxu0 0.0
      %1069 = vmatpush1.msra.mxu0 0.0
      %1070 = vmatprep.subr.mxu0 0.0
      %1071 = vmatpush1.msra.mxu0 0.0
      %1072 = vmatprep.subr.mxu0 0.0
      %1073 = vmatpush1.msra.mxu0 0.0
      %1074 = vmatprep.subr.mxu0 0.0
      %1075 = vmatpush1.msra.mxu0 0.0
      %1076 = vmatprep.subr.mxu0 0.0
      %1077 = vmatpush1.msra.mxu0 0.0
      %1078 = vmatprep.subr.mxu0 0.0
      %1079 = vmatpush1.msra.mxu0 0.0
      %1080 = vmatprep.subr.mxu0 0.0
      %1081 = vmatpush1.msra.mxu0 0.0
      %1082 = vmatprep.subr.mxu0 0.0
      %1083 = vmatpush1.msra.mxu0 0.0
      %1084 = vmatprep.subr.mxu0 0.0
      %1085 = vmatpush1.msra.mxu0 0.0
      %1086 = vmatprep.subr.mxu0 0.0
      %1087 = vmatpush1.msra.mxu0 0.0
      %1088 = vmatprep.subr.mxu0 0.0
      %1089 = vmatpush1.msra.mxu0 0.0
      %1090 = vmatprep.mubr.f32.mxu0 0.0
      %1091 = vmatmul.mubr.f32.gmra.mrb[0].mxu0 %v1018
      %v1092 = vpop.f32.mrb[0].mxu0
      %v1093 = vadd.f32 0.0, %v1092
      %v1094 = vpop.f32.mrb[0].mxu0
      %1095 = vmatprep.mubr.f32.mxu0 0.0
      %1096 = vmatmul.mubr.f32.gmra.mrb[0].mxu0 %v1019
      %v1097 = vpop.f32.mrb[0].mxu0
      %v1098 = vadd.f32 0.0, %v1097
      %v1099 = vpop.f32.mrb[0].mxu0
      %1100 = vmatprep.mubr.f32.mxu0 0.0
      %1101 = vmatmul.mubr.f32.gmra.mrb[0].mxu0 %v1020
      %v1102 = vpop.f32.mrb[0].mxu0
      %v1103 = vadd.f32 0.0, %v1102
      %v1104 = vpop.f32.mrb[0].mxu0
      %1105 = vmatprep.mubr.f32.mxu0 0.0
      %1106 = vmatmul.mubr.f32.gmra.mrb[0].mxu0 %v1021
      %v1107 = vpop.f32.mrb[0].mxu0
      %v1108 = vadd.f32 0.0, %v1107
      %v1109 = vpop.f32.mrb[0].mxu0
      %1110 = vmatprep.mubr.f32.mxu0 0.0
      %1111 = vmatmul.mubr.f32.gmra.mrb[0].mxu0 %v1022
      %v1112 = vpop.f32.mrb[0].mxu0
      %v1113 = vadd.f32 0.0, %v1112
      %v1114 = vpop.f32.mrb[0].mxu0
      %1115 = vmatprep.mubr.f32.mxu0 0.0
      %1116 = vmatmul.mubr.f32.gmra.mrb[0].mxu0 %v1023
      %v1117 = vpop.f32.mrb[0].mxu0
      %v1118 = vadd.f32 0.0, %v1117
      %v1119 = vpop.f32.mrb[0].mxu0
      %1120 = vmatprep.mubr.f32.mxu0 0.0
      %1121 = vmatmul.mubr.f32.gmra.mrb[0].mxu0 %v1024
      %v1122 = vpop.f32.mrb[0].mxu0
      %v1123 = vadd.f32 0.0, %v1122
      %v1124 = vpop.f32.mrb[0].mxu0
      %1125 = vmatprep.mubr.f32.mxu0 0.0
      %1126 = vmatmul.mubr.f32.gmra.mrb[0].mxu0 %v1025
      %v1127 = vpop.f32.mrb[0].mxu0
      %v1128 = vadd.f32 0.0, %v1127
      %v1129 = vpop.f32.mrb[0].mxu0
      %1130 = vdwg.mxu0
      %1131 = vst [vmem:[%s441] sm:$0xff] %v1093
      %1132 = vst [vmem:[%s441 + $0x8] sm:$0xff] %v1098
      %1133 = vst [vmem:[%s441 + $0x10] sm:$0xff] %v1103
      %1134 = vst [vmem:[%s441 + $0x18] sm:$0xff] %v1108
      %1135 = vst [vmem:[%s441 + $0x20] sm:$0xff] %v1113
      %1136 = vst [vmem:[%s441 + $0x28] sm:$0xff] %v1118
      %1137 = vst [vmem:[%s441 + $0x30] sm:$0xff] %v1123
      %1138 = vst [vmem:[%s441 + $0x38] sm:$0xff] %v1128
      %v1139 = vadd.f32 %v1093, %v1098
      %v1140 = vadd.f32 %v1139, %v1103
      %v1141 = vadd.f32 %v1140, %v1108
      %v1142 = vadd.f32 %v1141, %v1113
      %v1143 = vadd.f32 %v1142, %v1118
      %v1144 = vadd.f32 %v1143, %v1123
      %v1145 = vadd.f32 %v1144, %v1128
      %v1146 = vrot.slane %v1145, 4
      %v1147 = vadd.f32 %v1145, %v1146
      %v1148 = vrot.slane %v1147, 2
      %v1149 = vadd.f32 %v1147, %v1148
      %v1150 = vrot.slane %v1149, 1
      %v1151 = vadd.f32 %v1149, %v1150
      %v1152 = vadd.f32 %v1151, 0.0
      %v1153 = vmul.f32 %v1093, %v1093
      %v1154 = vmul.f32 %v1098, %v1098
      %v1155 = vmul.f32 %v1103, %v1103
      %v1156 = vmul.f32 %v1108, %v1108
      %v1157 = vmul.f32 %v1113, %v1113
      %v1158 = vmul.f32 %v1118, %v1118
      %v1159 = vmul.f32 %v1123, %v1123
      %v1160 = vmul.f32 %v1128, %v1128
      %v1161 = vadd.f32 %v1153, %v1154
      %v1162 = vadd.f32 %v1161, %v1155
      %v1163 = vadd.f32 %v1162, %v1156
      %v1164 = vadd.f32 %v1163, %v1157
      %v1165 = vadd.f32 %v1164, %v1158
      %v1166 = vadd.f32 %v1165, %v1159
      %v1167 = vadd.f32 %v1166, %v1160
      %v1168 = vrot.slane %v1167, 4
      %v1169 = vadd.f32 %v1167, %v1168
      %v1170 = vrot.slane %v1169, 2
      %v1171 = vadd.f32 %v1169, %v1170
      %v1172 = vrot.slane %v1171, 1
      %v1173 = vadd.f32 %v1171, %v1172
      %v1174 = vadd.f32 %v1173, 0.0
      %s1175 = scalar_lea.vmem [#allocation2], 96
      %v1176 = vld [vmem:[%s1175] sm:$0xff]
      %v1177 = vld [vmem:[%s1175 + $0x8] sm:$0xff]
      %v1178 = vld [vmem:[%s1175 + $0x18] sm:$0xff]
      %v1179 = vld [vmem:[%s1175 + $0x20] sm:$0xff]
      %v1180 = vld [vmem:[%s1175 + $0x30] sm:$0xff]
      %v1181 = vld [vmem:[%s1175 + $0x38] sm:$0xff]
      %v1182 = vld [vmem:[%s1175 + $0x48] sm:$0xff]
      %v1183 = vld [vmem:[%s1175 + $0x50] sm:$0xff]
      %1184 = vst.msk [vmem:[#allocation3] sm:$0xff] %vm616, %v1176
      %1185 = vst.msk [vmem:[#allocation3 + $0x8] sm:$0xff] %vm616, %v1177
      %1186 = vst.msk [vmem:[#allocation3 + $0x10] sm:$0xff] %vm616, %v1178
      %1187 = vst.msk [vmem:[#allocation3 + $0x18] sm:$0xff] %vm616, %v1179
      %1188 = vst.msk [vmem:[#allocation3 + $0x20] sm:$0xff] %vm616, %v1180
      %1189 = vst.msk [vmem:[#allocation3 + $0x28] sm:$0xff] %vm616, %v1181
      %1190 = vst.msk [vmem:[#allocation3 + $0x30] sm:$0xff] %vm616, %v1182
      %1191 = vst.msk [vmem:[#allocation3 + $0x38] sm:$0xff] %vm616, %v1183
      %v1192 = vld [vmem:[%s1175 + $0x1] sm:$0xff]
      %v1193 = vld [vmem:[%s1175 + $0x9] sm:$0xff]
      %v1194 = vld [vmem:[%s1175 + $0x19] sm:$0xff]
      %v1195 = vld [vmem:[%s1175 + $0x21] sm:$0xff]
      %v1196 = vld [vmem:[%s1175 + $0x31] sm:$0xff]
      %v1197 = vld [vmem:[%s1175 + $0x39] sm:$0xff]
      %v1198 = vld [vmem:[%s1175 + $0x49] sm:$0xff]
      %v1199 = vld [vmem:[%s1175 + $0x51] sm:$0xff]
      %1208 = vrot.lane.b32.xlu0 %v1192, 8
      %v1209 = vpop.permute.xlu0 %1208
      %1210 = vrot.lane.b32.xlu0 %v1193, 8
      %v1211 = vpop.permute.xlu0 %1210
      %1212 = vrot.lane.b32.xlu0 %v1194, 8
      %v1213 = vpop.permute.xlu0 %1212
      %1214 = vrot.lane.b32.xlu0 %v1195, 8
      %v1215 = vpop.permute.xlu0 %1214
      %1216 = vrot.lane.b32.xlu0 %v1196, 8
      %v1217 = vpop.permute.xlu0 %1216
      %1218 = vrot.lane.b32.xlu0 %v1197, 8
      %v1219 = vpop.permute.xlu0 %1218
      %1220 = vrot.lane.b32.xlu0 %v1198, 8
      %v1221 = vpop.permute.xlu0 %1220
      %1222 = vrot.lane.b32.xlu0 %v1199, 8
      %v1223 = vpop.permute.xlu0 %1222
      %1232 = vst.msk [vmem:[#allocation3] sm:$0xff] %vm665, %v1209
      %1233 = vst.msk [vmem:[#allocation3 + $0x8] sm:$0xff] %vm665, %v1211
      %1234 = vst.msk [vmem:[#allocation3 + $0x10] sm:$0xff] %vm665, %v1213
      %1235 = vst.msk [vmem:[#allocation3 + $0x18] sm:$0xff] %vm665, %v1215
      %1236 = vst.msk [vmem:[#allocation3 + $0x20] sm:$0xff] %vm665, %v1217
      %1237 = vst.msk [vmem:[#allocation3 + $0x28] sm:$0xff] %vm665, %v1219
      %1238 = vst.msk [vmem:[#allocation3 + $0x30] sm:$0xff] %vm665, %v1221
      %1239 = vst.msk [vmem:[#allocation3 + $0x38] sm:$0xff] %vm665, %v1223
      %v1240 = vld [vmem:[%s1175 + $0x2] sm:$0xff]
      %v1241 = vld [vmem:[%s1175 + $0xa] sm:$0xff]
      %v1242 = vld [vmem:[%s1175 + $0x1a] sm:$0xff]
      %v1243 = vld [vmem:[%s1175 + $0x22] sm:$0xff]
      %v1244 = vld [vmem:[%s1175 + $0x32] sm:$0xff]
      %v1245 = vld [vmem:[%s1175 + $0x3a] sm:$0xff]
      %v1246 = vld [vmem:[%s1175 + $0x4a] sm:$0xff]
      %v1247 = vld [vmem:[%s1175 + $0x52] sm:$0xff]
      %1256 = vrot.lane.b32.xlu0 %v1240, 16
      %v1257 = vpop.permute.xlu0 %1256
      %1258 = vrot.lane.b32.xlu0 %v1241, 16
      %v1259 = vpop.permute.xlu0 %1258
      %1260 = vrot.lane.b32.xlu0 %v1242, 16
      %v1261 = vpop.permute.xlu0 %1260
      %1262 = vrot.lane.b32.xlu0 %v1243, 16
      %v1263 = vpop.permute.xlu0 %1262
      %1264 = vrot.lane.b32.xlu0 %v1244, 16
      %v1265 = vpop.permute.xlu0 %1264
      %1266 = vrot.lane.b32.xlu0 %v1245, 16
      %v1267 = vpop.permute.xlu0 %1266
      %1268 = vrot.lane.b32.xlu0 %v1246, 16
      %v1269 = vpop.permute.xlu0 %1268
      %1270 = vrot.lane.b32.xlu0 %v1247, 16
      %v1271 = vpop.permute.xlu0 %1270
      %1280 = vst.msk [vmem:[#allocation3] sm:$0xff] %vm714, %v1257
      %1281 = vst.msk [vmem:[#allocation3 + $0x8] sm:$0xff] %vm714, %v1259
      %1282 = vst.msk [vmem:[#allocation3 + $0x10] sm:$0xff] %vm714, %v1261
      %1283 = vst.msk [vmem:[#allocation3 + $0x18] sm:$0xff] %vm714, %v1263
      %1284 = vst.msk [vmem:[#allocation3 + $0x20] sm:$0xff] %vm714, %v1265
      %1285 = vst.msk [vmem:[#allocation3 + $0x28] sm:$0xff] %vm714, %v1267
      %1286 = vst.msk [vmem:[#allocation3 + $0x30] sm:$0xff] %vm714, %v1269
      %1287 = vst.msk [vmem:[#allocation3 + $0x38] sm:$0xff] %vm714, %v1271
      %s1288 = scalar_lea.vmem [#allocation2], 120
      %v1289 = vld [vmem:[%s1288] sm:$0xff]
      %v1290 = vld [vmem:[%s1288 + $0x8] sm:$0xff]
      %v1291 = vld [vmem:[%s1288 + $0x18] sm:$0xff]
      %v1292 = vld [vmem:[%s1288 + $0x20] sm:$0xff]
      %v1293 = vld [vmem:[%s1288 + $0x30] sm:$0xff]
      %v1294 = vld [vmem:[%s1288 + $0x38] sm:$0xff]
      %v1295 = vld [vmem:[%s1288 + $0x48] sm:$0xff]
      %v1296 = vld [vmem:[%s1288 + $0x50] sm:$0xff]
      %1305 = vrot.lane.b32.xlu0 %v1289, 24
      %v1306 = vpop.permute.xlu0 %1305
      %1307 = vrot.lane.b32.xlu0 %v1290, 24
      %v1308 = vpop.permute.xlu0 %1307
      %1309 = vrot.lane.b32.xlu0 %v1291, 24
      %v1310 = vpop.permute.xlu0 %1309
      %1311 = vrot.lane.b32.xlu0 %v1292, 24
      %v1312 = vpop.permute.xlu0 %1311
      %1313 = vrot.lane.b32.xlu0 %v1293, 24
      %v1314 = vpop.permute.xlu0 %1313
      %1315 = vrot.lane.b32.xlu0 %v1294, 24
      %v1316 = vpop.permute.xlu0 %1315
      %1317 = vrot.lane.b32.xlu0 %v1295, 24
      %v1318 = vpop.permute.xlu0 %1317
      %1319 = vrot.lane.b32.xlu0 %v1296, 24
      %v1320 = vpop.permute.xlu0 %1319
      %1329 = vst.msk [vmem:[#allocation3] sm:$0xff] %vm763, %v1306
      %1330 = vst.msk [vmem:[#allocation3 + $0x8] sm:$0xff] %vm763, %v1308
      %1331 = vst.msk [vmem:[#allocation3 + $0x10] sm:$0xff] %vm763, %v1310
      %1332 = vst.msk [vmem:[#allocation3 + $0x18] sm:$0xff] %vm763, %v1312
      %1333 = vst.msk [vmem:[#allocation3 + $0x20] sm:$0xff] %vm763, %v1314
      %1334 = vst.msk [vmem:[#allocation3 + $0x28] sm:$0xff] %vm763, %v1316
      %1335 = vst.msk [vmem:[#allocation3 + $0x30] sm:$0xff] %vm763, %v1318
      %1336 = vst.msk [vmem:[#allocation3 + $0x38] sm:$0xff] %vm763, %v1320
      %v1337 = vld [vmem:[%s1288 + $0x1] sm:$0xff]
      %v1338 = vld [vmem:[%s1288 + $0x9] sm:$0xff]
      %v1339 = vld [vmem:[%s1288 + $0x19] sm:$0xff]
      %v1340 = vld [vmem:[%s1288 + $0x21] sm:$0xff]
      %v1341 = vld [vmem:[%s1288 + $0x31] sm:$0xff]
      %v1342 = vld [vmem:[%s1288 + $0x39] sm:$0xff]
      %v1343 = vld [vmem:[%s1288 + $0x49] sm:$0xff]
      %v1344 = vld [vmem:[%s1288 + $0x51] sm:$0xff]
      %1353 = vrot.lane.b32.xlu0 %v1337, 32
      %v1354 = vpop.permute.xlu0 %1353
      %1355 = vrot.lane.b32.xlu0 %v1338, 32
      %v1356 = vpop.permute.xlu0 %1355
      %1357 = vrot.lane.b32.xlu0 %v1339, 32
      %v1358 = vpop.permute.xlu0 %1357
      %1359 = vrot.lane.b32.xlu0 %v1340, 32
      %v1360 = vpop.permute.xlu0 %1359
      %1361 = vrot.lane.b32.xlu0 %v1341, 32
      %v1362 = vpop.permute.xlu0 %1361
      %1363 = vrot.lane.b32.xlu0 %v1342, 32
      %v1364 = vpop.permute.xlu0 %1363
      %1365 = vrot.lane.b32.xlu0 %v1343, 32
      %v1366 = vpop.permute.xlu0 %1365
      %1367 = vrot.lane.b32.xlu0 %v1344, 32
      %v1368 = vpop.permute.xlu0 %1367
      %1377 = vst.msk [vmem:[#allocation3] sm:$0xff] %vm812, %v1354
      %1378 = vst.msk [vmem:[#allocation3 + $0x8] sm:$0xff] %vm812, %v1356
      %1379 = vst.msk [vmem:[#allocation3 + $0x10] sm:$0xff] %vm812, %v1358
      %1380 = vst.msk [vmem:[#allocation3 + $0x18] sm:$0xff] %vm812, %v1360
      %1381 = vst.msk [vmem:[#allocation3 + $0x20] sm:$0xff] %vm812, %v1362
      %1382 = vst.msk [vmem:[#allocation3 + $0x28] sm:$0xff] %vm812, %v1364
      %1383 = vst.msk [vmem:[#allocation3 + $0x30] sm:$0xff] %vm812, %v1366
      %1384 = vst.msk [vmem:[#allocation3 + $0x38] sm:$0xff] %vm812, %v1368
      %v1385 = vld [vmem:[%s1288 + $0x2] sm:$0xff]
      %v1386 = vld [vmem:[%s1288 + $0xa] sm:$0xff]
      %v1387 = vld [vmem:[%s1288 + $0x1a] sm:$0xff]
      %v1388 = vld [vmem:[%s1288 + $0x22] sm:$0xff]
      %v1389 = vld [vmem:[%s1288 + $0x32] sm:$0xff]
      %v1390 = vld [vmem:[%s1288 + $0x3a] sm:$0xff]
      %v1391 = vld [vmem:[%s1288 + $0x4a] sm:$0xff]
      %v1392 = vld [vmem:[%s1288 + $0x52] sm:$0xff]
      %1401 = vrot.lane.b32.xlu0 %v1385, 40
      %v1402 = vpop.permute.xlu0 %1401
      %1403 = vrot.lane.b32.xlu0 %v1386, 40
      %v1404 = vpop.permute.xlu0 %1403
      %1405 = vrot.lane.b32.xlu0 %v1387, 40
      %v1406 = vpop.permute.xlu0 %1405
      %1407 = vrot.lane.b32.xlu0 %v1388, 40
      %v1408 = vpop.permute.xlu0 %1407
      %1409 = vrot.lane.b32.xlu0 %v1389, 40
      %v1410 = vpop.permute.xlu0 %1409
      %1411 = vrot.lane.b32.xlu0 %v1390, 40
      %v1412 = vpop.permute.xlu0 %1411
      %1413 = vrot.lane.b32.xlu0 %v1391, 40
      %v1414 = vpop.permute.xlu0 %1413
      %1415 = vrot.lane.b32.xlu0 %v1392, 40
      %v1416 = vpop.permute.xlu0 %1415
      %1425 = vst.msk [vmem:[#allocation3] sm:$0xff] %vm861, %v1402
      %1426 = vst.msk [vmem:[#allocation3 + $0x8] sm:$0xff] %vm861, %v1404
      %1427 = vst.msk [vmem:[#allocation3 + $0x10] sm:$0xff] %vm861, %v1406
      %1428 = vst.msk [vmem:[#allocation3 + $0x18] sm:$0xff] %vm861, %v1408
      %1429 = vst.msk [vmem:[#allocation3 + $0x20] sm:$0xff] %vm861, %v1410
      %1430 = vst.msk [vmem:[#allocation3 + $0x28] sm:$0xff] %vm861, %v1412
      %1431 = vst.msk [vmem:[#allocation3 + $0x30] sm:$0xff] %vm861, %v1414
      %1432 = vst.msk [vmem:[#allocation3 + $0x38] sm:$0xff] %vm861, %v1416
      %s1433 = scalar_lea.vmem [#allocation2], 144
      %v1434 = vld [vmem:[%s1433] sm:$0xff]
      %v1435 = vld [vmem:[%s1433 + $0x8] sm:$0xff]
      %v1436 = vld [vmem:[%s1433 + $0x18] sm:$0xff]
      %v1437 = vld [vmem:[%s1433 + $0x20] sm:$0xff]
      %v1438 = vld [vmem:[%s1433 + $0x30] sm:$0xff]
      %v1439 = vld [vmem:[%s1433 + $0x38] sm:$0xff]
      %v1440 = vld [vmem:[%s1433 + $0x48] sm:$0xff]
      %v1441 = vld [vmem:[%s1433 + $0x50] sm:$0xff]
      %1450 = vrot.lane.b32.xlu0 %v1434, 48
      %v1451 = vpop.permute.xlu0 %1450
      %1452 = vrot.lane.b32.xlu0 %v1435, 48
      %v1453 = vpop.permute.xlu0 %1452
      %1454 = vrot.lane.b32.xlu0 %v1436, 48
      %v1455 = vpop.permute.xlu0 %1454
      %1456 = vrot.lane.b32.xlu0 %v1437, 48
      %v1457 = vpop.permute.xlu0 %1456
      %1458 = vrot.lane.b32.xlu0 %v1438, 48
      %v1459 = vpop.permute.xlu0 %1458
      %1460 = vrot.lane.b32.xlu0 %v1439, 48
      %v1461 = vpop.permute.xlu0 %1460
      %1462 = vrot.lane.b32.xlu0 %v1440, 48
      %v1463 = vpop.permute.xlu0 %1462
      %1464 = vrot.lane.b32.xlu0 %v1441, 48
      %v1465 = vpop.permute.xlu0 %1464
      %1474 = vst.msk [vmem:[#allocation3] sm:$0xff] %vm911, %v1451
      %1475 = vst.msk [vmem:[#allocation3 + $0x8] sm:$0xff] %vm911, %v1453
      %1476 = vst.msk [vmem:[#allocation3 + $0x10] sm:$0xff] %vm911, %v1455
      %1477 = vst.msk [vmem:[#allocation3 + $0x18] sm:$0xff] %vm911, %v1457
      %1478 = vst.msk [vmem:[#allocation3 + $0x20] sm:$0xff] %vm911, %v1459
      %1479 = vst.msk [vmem:[#allocation3 + $0x28] sm:$0xff] %vm911, %v1461
      %1480 = vst.msk [vmem:[#allocation3 + $0x30] sm:$0xff] %vm911, %v1463
      %1481 = vst.msk [vmem:[#allocation3 + $0x38] sm:$0xff] %vm911, %v1465
      %v1482 = vld [vmem:[%s1433 + $0x1] sm:$0xff]
      %v1483 = vld [vmem:[%s1433 + $0x9] sm:$0xff]
      %v1484 = vld [vmem:[%s1433 + $0x19] sm:$0xff]
      %v1485 = vld [vmem:[%s1433 + $0x21] sm:$0xff]
      %v1486 = vld [vmem:[%s1433 + $0x31] sm:$0xff]
      %v1487 = vld [vmem:[%s1433 + $0x39] sm:$0xff]
      %v1488 = vld [vmem:[%s1433 + $0x49] sm:$0xff]
      %v1489 = vld [vmem:[%s1433 + $0x51] sm:$0xff]
      %1498 = vrot.lane.b32.xlu0 %v1482, 56
      %v1499 = vpop.permute.xlu0 %1498
      %1500 = vrot.lane.b32.xlu0 %v1483, 56
      %v1501 = vpop.permute.xlu0 %1500
      %1502 = vrot.lane.b32.xlu0 %v1484, 56
      %v1503 = vpop.permute.xlu0 %1502
      %1504 = vrot.lane.b32.xlu0 %v1485, 56
      %v1505 = vpop.permute.xlu0 %1504
      %1506 = vrot.lane.b32.xlu0 %v1486, 56
      %v1507 = vpop.permute.xlu0 %1506
      %1508 = vrot.lane.b32.xlu0 %v1487, 56
      %v1509 = vpop.permute.xlu0 %1508
      %1510 = vrot.lane.b32.xlu0 %v1488, 56
      %v1511 = vpop.permute.xlu0 %1510
      %1512 = vrot.lane.b32.xlu0 %v1489, 56
      %v1513 = vpop.permute.xlu0 %1512
      %1522 = vst.msk [vmem:[#allocation3] sm:$0xff] %vm960, %v1499
      %1523 = vst.msk [vmem:[#allocation3 + $0x8] sm:$0xff] %vm960, %v1501
      %1524 = vst.msk [vmem:[#allocation3 + $0x10] sm:$0xff] %vm960, %v1503
      %1525 = vst.msk [vmem:[#allocation3 + $0x18] sm:$0xff] %vm960, %v1505
      %1526 = vst.msk [vmem:[#allocation3 + $0x20] sm:$0xff] %vm960, %v1507
      %1527 = vst.msk [vmem:[#allocation3 + $0x28] sm:$0xff] %vm960, %v1509
      %1528 = vst.msk [vmem:[#allocation3 + $0x30] sm:$0xff] %vm960, %v1511
      %1529 = vst.msk [vmem:[#allocation3 + $0x38] sm:$0xff] %vm960, %v1513
      %v1530 = vld [vmem:[%s1433 + $0x2] sm:$0xff]
      %v1531 = vld [vmem:[%s1433 + $0xa] sm:$0xff]
      %v1532 = vld [vmem:[%s1433 + $0x1a] sm:$0xff]
      %v1533 = vld [vmem:[%s1433 + $0x22] sm:$0xff]
      %v1534 = vld [vmem:[%s1433 + $0x32] sm:$0xff]
      %v1535 = vld [vmem:[%s1433 + $0x3a] sm:$0xff]
      %v1536 = vld [vmem:[%s1433 + $0x4a] sm:$0xff]
      %v1537 = vld [vmem:[%s1433 + $0x52] sm:$0xff]
      %1546 = vrot.lane.b32.xlu0 %v1530, 64
      %v1547 = vpop.permute.xlu0 %1546
      %1548 = vrot.lane.b32.xlu0 %v1531, 64
      %v1549 = vpop.permute.xlu0 %1548
      %1550 = vrot.lane.b32.xlu0 %v1532, 64
      %v1551 = vpop.permute.xlu0 %1550
      %1552 = vrot.lane.b32.xlu0 %v1533, 64
      %v1553 = vpop.permute.xlu0 %1552
      %1554 = vrot.lane.b32.xlu0 %v1534, 64
      %v1555 = vpop.permute.xlu0 %1554
      %1556 = vrot.lane.b32.xlu0 %v1535, 64
      %v1557 = vpop.permute.xlu0 %1556
      %1558 = vrot.lane.b32.xlu0 %v1536, 64
      %v1559 = vpop.permute.xlu0 %1558
      %1560 = vrot.lane.b32.xlu0 %v1537, 64
      %v1561 = vpop.permute.xlu0 %1560
      %1570 = vst.msk [vmem:[#allocation3] sm:$0xff] %vm1009, %v1547
      %1571 = vst.msk [vmem:[#allocation3 + $0x8] sm:$0xff] %vm1009, %v1549
      %1572 = vst.msk [vmem:[#allocation3 + $0x10] sm:$0xff] %vm1009, %v1551
      %1573 = vst.msk [vmem:[#allocation3 + $0x18] sm:$0xff] %vm1009, %v1553
      %1574 = vst.msk [vmem:[#allocation3 + $0x20] sm:$0xff] %vm1009, %v1555
      %1575 = vst.msk [vmem:[#allocation3 + $0x28] sm:$0xff] %vm1009, %v1557
      %1576 = vst.msk [vmem:[#allocation3 + $0x30] sm:$0xff] %vm1009, %v1559
      %1577 = vst.msk [vmem:[#allocation3 + $0x38] sm:$0xff] %vm1009, %v1561
      %v1578 = vld [vmem:[#allocation3] sm:$0xff]
      %v1579 = vld [vmem:[#allocation3 + $0x8] sm:$0xff]
      %v1580 = vld [vmem:[#allocation3 + $0x10] sm:$0xff]
      %v1581 = vld [vmem:[#allocation3 + $0x18] sm:$0xff]
      %v1582 = vld [vmem:[#allocation3 + $0x20] sm:$0xff]
      %v1583 = vld [vmem:[#allocation3 + $0x28] sm:$0xff]
      %v1584 = vld [vmem:[#allocation3 + $0x30] sm:$0xff]
      %v1585 = vld [vmem:[#allocation3 + $0x38] sm:$0xff]
      %1586 = vmatprep.subr.mxu0 0.0
      %1587 = vmatpush1.msra.mxu0 %v592
      %1588 = vmatprep.subr.mxu0 0.0
      %1589 = vmatpush1.msra.mxu0 %v593
      %1590 = vmatprep.subr.mxu0 0.0
      %1591 = vmatpush1.msra.mxu0 %v594
      %1592 = vmatprep.subr.mxu0 0.0
      %1593 = vmatpush1.msra.mxu0 %v595
      %1594 = vmatprep.subr.mxu0 0.0
      %1595 = vmatpush1.msra.mxu0 %v596
      %1596 = vmatprep.subr.mxu0 0.0
      %1597 = vmatpush1.msra.mxu0 %v597
      %1598 = vmatprep.subr.mxu0 0.0
      %1599 = vmatpush1.msra.mxu0 %v598
      %1600 = vmatprep.subr.mxu0 0.0
      %1601 = vmatpush1.msra.mxu0 %v599
      %1602 = vmatprep.subr.mxu0 0.0
      %1603 = vmatpush1.msra.mxu0 %v600
      %1604 = vmatprep.subr.mxu0 0.0
      %1605 = vmatpush1.msra.mxu0 %v601
      %1606 = vmatprep.subr.mxu0 0.0
      %1607 = vmatpush1.msra.mxu0 %v602
      %1608 = vmatprep.subr.mxu0 0.0
      %1609 = vmatpush1.msra.mxu0 %v603
      %1610 = vmatprep.subr.mxu0 0.0
      %1611 = vmatpush1.msra.mxu0 %v604
      %1612 = vmatprep.subr.mxu0 0.0
      %1613 = vmatpush1.msra.mxu0 %v605
      %1614 = vmatprep.subr.mxu0 0.0
      %1615 = vmatpush1.msra.mxu0 %v606
      %1616 = vmatprep.subr.mxu0 0.0
      %1617 = vmatpush1.msra.mxu0 %v607
      %1618 = vmatprep.subr.mxu0 0.0
      %1619 = vmatpush1.msra.mxu0 0.0
      %1620 = vmatprep.subr.mxu0 0.0
      %1621 = vmatpush1.msra.mxu0 0.0
      %1622 = vmatprep.subr.mxu0 0.0
      %1623 = vmatpush1.msra.mxu0 0.0
      %1624 = vmatprep.subr.mxu0 0.0
      %1625 = vmatpush1.msra.mxu0 0.0
      %1626 = vmatprep.subr.mxu0 0.0
      %1627 = vmatpush1.msra.mxu0 0.0
      %1628 = vmatprep.subr.mxu0 0.0
      %1629 = vmatpush1.msra.mxu0 0.0
      %1630 = vmatprep.subr.mxu0 0.0
      %1631 = vmatpush1.msra.mxu0 0.0
      %1632 = vmatprep.subr.mxu0 0.0
      %1633 = vmatpush1.msra.mxu0 0.0
      %1634 = vmatprep.subr.mxu0 0.0
      %1635 = vmatpush1.msra.mxu0 0.0
      %1636 = vmatprep.subr.mxu0 0.0
      %1637 = vmatpush1.msra.mxu0 0.0
      %1638 = vmatprep.subr.mxu0 0.0
      %1639 = vmatpush1.msra.mxu0 0.0
      %1640 = vmatprep.subr.mxu0 0.0
      %1641 = vmatpush1.msra.mxu0 0.0
      %1642 = vmatprep.subr.mxu0 0.0
      %1643 = vmatpush1.msra.mxu0 0.0
      %1644 = vmatprep.subr.mxu0 0.0
      %1645 = vmatpush1.msra.mxu0 0.0
      %1646 = vmatprep.subr.mxu0 0.0
      %1647 = vmatpush1.msra.mxu0 0.0
      %1648 = vmatprep.subr.mxu0 0.0
      %1649 = vmatpush1.msra.mxu0 0.0
      %1650 = vmatprep.mubr.f32.mxu0 0.0
      %1651 = vmatmul.mubr.f32.gmra.mrb[0].mxu0 %v1578
      %v1652 = vpop.f32.mrb[0].mxu0
      %v1653 = vadd.f32 0.0, %v1652
      %v1654 = vpop.f32.mrb[0].mxu0
      %1655 = vmatprep.mubr.f32.mxu0 0.0
      %1656 = vmatmul.mubr.f32.gmra.mrb[0].mxu0 %v1579
      %v1657 = vpop.f32.mrb[0].mxu0
      %v1658 = vadd.f32 0.0, %v1657
      %v1659 = vpop.f32.mrb[0].mxu0
      %1660 = vmatprep.mubr.f32.mxu0 0.0
      %1661 = vmatmul.mubr.f32.gmra.mrb[0].mxu0 %v1580
      %v1662 = vpop.f32.mrb[0].mxu0
      %v1663 = vadd.f32 0.0, %v1662
      %v1664 = vpop.f32.mrb[0].mxu0
      %1665 = vmatprep.mubr.f32.mxu0 0.0
      %1666 = vmatmul.mubr.f32.gmra.mrb[0].mxu0 %v1581
      %v1667 = vpop.f32.mrb[0].mxu0
      %v1668 = vadd.f32 0.0, %v1667
      %v1669 = vpop.f32.mrb[0].mxu0
      %1670 = vmatprep.mubr.f32.mxu0 0.0
      %1671 = vmatmul.mubr.f32.gmra.mrb[0].mxu0 %v1582
      %v1672 = vpop.f32.mrb[0].mxu0
      %v1673 = vadd.f32 0.0, %v1672
      %v1674 = vpop.f32.mrb[0].mxu0
      %1675 = vmatprep.mubr.f32.mxu0 0.0
      %1676 = vmatmul.mubr.f32.gmra.mrb[0].mxu0 %v1583
      %v1677 = vpop.f32.mrb[0].mxu0
      %v1678 = vadd.f32 0.0, %v1677
      %v1679 = vpop.f32.mrb[0].mxu0
      %1680 = vmatprep.mubr.f32.mxu0 0.0
      %1681 = vmatmul.mubr.f32.gmra.mrb[0].mxu0 %v1584
      %v1682 = vpop.f32.mrb[0].mxu0
      %v1683 = vadd.f32 0.0, %v1682
      %v1684 = vpop.f32.mrb[0].mxu0
      %1685 = vmatprep.mubr.f32.mxu0 0.0
      %1686 = vmatmul.mubr.f32.gmra.mrb[0].mxu0 %v1585
      %v1687 = vpop.f32.mrb[0].mxu0
      %v1688 = vadd.f32 0.0, %v1687
      %v1689 = vpop.f32.mrb[0].mxu0
      %1690 = vdwg.mxu0
      %s1691 = scalar_lea.vmem %s441, 64
      %1692 = vst [vmem:[%s1691] sm:$0xff] %v1653
      %1693 = vst [vmem:[%s1691 + $0x8] sm:$0xff] %v1658
      %1694 = vst [vmem:[%s1691 + $0x10] sm:$0xff] %v1663
      %1695 = vst [vmem:[%s1691 + $0x18] sm:$0xff] %v1668
      %1696 = vst [vmem:[%s1691 + $0x20] sm:$0xff] %v1673
      %1697 = vst [vmem:[%s1691 + $0x28] sm:$0xff] %v1678
      %1698 = vst [vmem:[%s1691 + $0x30] sm:$0xff] %v1683
      %1699 = vst [vmem:[%s1691 + $0x38] sm:$0xff] %v1688
      %v1700 = vadd.f32 %v1653, %v1658
      %v1701 = vadd.f32 %v1700, %v1663
      %v1702 = vadd.f32 %v1701, %v1668
      %v1703 = vadd.f32 %v1702, %v1673
      %v1704 = vadd.f32 %v1703, %v1678
      %v1705 = vadd.f32 %v1704, %v1683
      %v1706 = vadd.f32 %v1705, %v1688
      %v1707 = vrot.slane %v1706, 4
      %v1708 = vadd.f32 %v1706, %v1707
      %v1709 = vrot.slane %v1708, 2
      %v1710 = vadd.f32 %v1708, %v1709
      %v1711 = vrot.slane %v1710, 1
      %v1712 = vadd.f32 %v1710, %v1711
      %v1713 = vadd.f32 %v1152, %v1712
      %v1714 = vmul.f32 %v1653, %v1653
      %v1715 = vmul.f32 %v1658, %v1658
      %v1716 = vmul.f32 %v1663, %v1663
      %v1717 = vmul.f32 %v1668, %v1668
      %v1718 = vmul.f32 %v1673, %v1673
      %v1719 = vmul.f32 %v1678, %v1678
      %v1720 = vmul.f32 %v1683, %v1683
      %v1721 = vmul.f32 %v1688, %v1688
      %v1722 = vadd.f32 %v1714, %v1715
      %v1723 = vadd.f32 %v1722, %v1716
      %v1724 = vadd.f32 %v1723, %v1717
      %v1725 = vadd.f32 %v1724, %v1718
      %v1726 = vadd.f32 %v1725, %v1719
      %v1727 = vadd.f32 %v1726, %v1720
      %v1728 = vadd.f32 %v1727, %v1721
      %v1729 = vrot.slane %v1728, 4
      %v1730 = vadd.f32 %v1728, %v1729
      %v1731 = vrot.slane %v1730, 2
      %v1732 = vadd.f32 %v1730, %v1731
      %v1733 = vrot.slane %v1732, 1
      %v1734 = vadd.f32 %v1732, %v1733
      %v1735 = vadd.f32 %v1174, %v1734
      %1736 = vst [vmem:[%s450] sm:$0x1] %v1713
      %1737 = vst [vmem:[%s458] sm:$0x1] %v1735
      %s1738 = smul.u32 8, %s25
      %p1739 = scmp.lt.s32.totalorder %s24, 1
      %s1740 = scalar_select %p1739, %s24, 1
      %p1741 = scmp.lt.s32.totalorder %s1738, 15
      %s1742 = scalar_select %p1741, %s1738, 15
      %s1743 = smul.addr %s1742, 2
      %s1744 = smul.addr %s1740, 32
      %s1745 = sadd.s32 %s1743, %s1744
      %s1746 = smul.addr %s1745, 8
      %s1747 = scalar_lea.vmem %s6, %s1746
      %p1748 = scmp.lt.s32.totalorder %s24, 1
      %s1749 = scalar_select %p1748, %s24, 1
      %p1750 = scmp.lt.s32.totalorder %s25, 1
      %s1751 = scalar_select %p1750, %s25, 1
      %s1752 = smul.addr %s1749, 2
      %s1753 = sadd.s32 %s1751, %s1752
      %s1754 = smul.addr %s1753, 8
      %s1755 = scalar_lea.vmem %s7, %s1754
      %p1756 = scmp.lt.s32.totalorder %s24, 1
      %s1757 = scalar_select %p1756, %s24, 1
      %p1758 = scmp.lt.s32.totalorder %s25, 1
      %s1759 = scalar_select %p1758, %s25, 1
      %s1760 = smul.addr %s1757, 2
      %s1761 = sadd.s32 %s1759, %s1760
      %s1762 = smul.addr %s1761, 8
      %s1763 = scalar_lea.vmem %s8, %s1762
      // Predicated region
      $region45: #{_lambda_.4} parent=43 // pred_check
        %p1764 = pneg %p199
      $region46: #{_lambda_.4} parent=43 // pred_check_branch
        %1766 = sbr.rel (%p1764) target = $region48
      $region47: #{_lambda_.4} parent=43 // pred_region
        %s1767 = smul.u32 8, %s25
      $region48: #{_lambda_.4} parent=43 // pred_fallthru
        _
      // Predicated region
      $region49: #{_lambda_.4} parent=43 // pred_check
        %p1768 = pneg %p227
      $region50: #{_lambda_.4} parent=43 // pred_check_branch
        %1770 = sbr.rel (%p1768) target = $region52
      $region51: #{_lambda_.4} parent=43 // pred_region
        _
      $region52: #{_lambda_.4} parent=43 // pred_fallthru
        _
      // Predicated region
      $region53: #{_lambda_.4} parent=43 // pred_check
        %p1771 = pneg %p255
      $region54: #{_lambda_.4} parent=43 // pred_check_branch
        %1773 = sbr.rel (%p1771) target = $region56
      $region55: #{_lambda_.4} parent=43 // pred_region
        _
      $region56: #{_lambda_.4} parent=43 // pred_fallthru
        _
    $region44: #{_lambda_.4} parent=5 // pred_fallthru
      _
    %p1774 = scmp.le.s32.totalorder 2, %s15
    // Predicated region
    $region57: #{_lambda_.4} parent=5 // pred_check
      %p1775 = pneg %p1774
    $region58: #{_lambda_.4} parent=5 // pred_check_branch
      %1777 = sbr.rel (%p1775) target = $region60
    $region59: #{_lambda_.4} parent=5 // pred_region
      %s1778 = ssub.s32 %s15, 2
      // Predicated region
      $region61: #{_lambda_.4} parent=59 // pred_check
        %p1779 = pneg %p205
      $region62: #{_lambda_.4} parent=59 // pred_check_branch
        %1781 = sbr.rel (%p1779) target = $region64
      $region63: #{_lambda_.4} parent=59 // pred_region
        %s1782 = smul.u32 8, %s27
        %p1783 = scmp.lt.s32.totalorder %s26, 1
        %s1784 = scalar_select %p1783, %s26, 1
        %p1785 = scmp.lt.s32.totalorder %s1782, 15
        %s1786 = scalar_select %p1785, %s1782, 15
        %s1787 = smul.addr %s1786, 2
        %s1788 = smul.addr %s1784, 32
        %s1789 = sadd.s32 %s1787, %s1788
        %s1790 = smul.addr %s1789, 8
        %s1791 = scalar_lea.vmem %s6, %s1790
      $region64: #{_lambda_.4} parent=59 // pred_fallthru
        _
      // Predicated region
      $region65: #{_lambda_.4} parent=59 // pred_check
        %p1792 = pneg %p233
      $region66: #{_lambda_.4} parent=59 // pred_check_branch
        %1794 = sbr.rel (%p1792) target = $region68
      $region67: #{_lambda_.4} parent=59 // pred_region
        %p1795 = scmp.lt.s32.totalorder %s26, 1
        %s1796 = scalar_select %p1795, %s26, 1
        %p1797 = scmp.lt.s32.totalorder %s27, 1
        %s1798 = scalar_select %p1797, %s27, 1
        %s1799 = smul.addr %s1796, 2
        %s1800 = sadd.s32 %s1798, %s1799
        %s1801 = smul.addr %s1800, 8
        %s1802 = scalar_lea.vmem %s7, %s1801
      $region68: #{_lambda_.4} parent=59 // pred_fallthru
        _
      // Predicated region
      $region69: #{_lambda_.4} parent=59 // pred_check
        %p1803 = pneg %p261
      $region70: #{_lambda_.4} parent=59 // pred_check_branch
        %1805 = sbr.rel (%p1803) target = $region72
      $region71: #{_lambda_.4} parent=59 // pred_region
        %p1806 = scmp.lt.s32.totalorder %s26, 1
        %s1807 = scalar_select %p1806, %s26, 1
        %p1808 = scmp.lt.s32.totalorder %s27, 1
        %s1809 = scalar_select %p1808, %s27, 1
        %s1810 = smul.addr %s1807, 2
        %s1811 = sadd.s32 %s1809, %s1810
        %s1812 = smul.addr %s1811, 8
        %s1813 = scalar_lea.vmem %s8, %s1812
      $region72: #{_lambda_.4} parent=59 // pred_fallthru
        _
    $region60: #{_lambda_.4} parent=5 // pred_fallthru
      _
  $region6: #{_lambda_.4} parent=0 // loop_footer
    %s19 = sadd.s32 1, %s15
  $region7: #{_lambda_.4} parent=0 // loop_footer_branch
    %14 = sbr.rel target = $region3
  $region8: #{_lambda_.4} parent=0 // loop_exit
    _

// kernel: _lambda_.3
$region0: #{_lambda_.3}
  #allocation0 [shape = 'u32[]', space=smem, size = 0x4, offset = 0x4, fixed_abs, tag = 'smem constant byte address 0x4 - core index']
  #allocation1 [shape = 'u32[144,128]{1,0:T(1,128)}', space=vmem, size = 0x12000, scoped, tag = 'internal scratch']
  #allocation2 [shape = 'f32[10,24,4]{2,1,0:T(8,128)}', space=vmem, size = 0x1e000, scoped, tag = 'scratch operand']
  #allocation3 [shape = 'f32[64,128]{1,0:T(8,128)}', space=vmem, size = 0x8000, scoped, tag = 'scratch operand']
  %s0 = inlined_call_operand.vmem [shape: f32[2,16,16,4], index: 0, kind: input, shape index: {}]
  %s1 = inlined_call_operand.vmem [shape: f32[2,2,16,4], index: 1, kind: input, shape index: {}]
  %s2 = inlined_call_operand.vmem [shape: f32[2,2,16,4], index: 2, kind: input, shape index: {}]
  %s3 = inlined_call_operand.vmem [shape: f32[128,128], index: 3, kind: input, shape index: {}]
  %s4 = inlined_call_operand.vmem [shape: f32[2,16,16,128], index: 4, kind: output, shape index: {0}]
  %s5 = inlined_call_operand.vmem [shape: f32[2,2,8,128], index: 5, kind: output, shape index: {1}]
  %s6 = inlined_call_operand.vmem [shape: f32[2,2,8,128], index: 6, kind: output, shape index: {2}]
  %7 = xla_tuple %s4, %s5, %s6
  %s8 = sld [smem:[#allocation0]]
  $region65: #{_lambda_.3} parent=0
    _
  %s10 = ssub.s32 1, %s8
  %s11 = scalar_select 0, %s10, %s8
  loop: start=0, step=1, limit=6
  $region2: #{_lambda_.3} parent=0 // loop_pre_header
    _
  $region3: #{_lambda_.3} parent=0 // loop_header
    %s13 = sphi 0, %s17
    %p14 = scmp.ge.s32.totalorder %s13, 6
    %s20 = sphi 0, %s32
    %s21 = sphi 0, %s28
    %s22 = sphi 0, %s20
    %s23 = sphi 0, %s21
    %s24 = sphi 0, %s22
    %s25 = sphi 0, %s23
    %s37 = sphi 0, %s39
    %s40 = sphi 0, %s37
    %s41 = sphi 0, %s40
    %s57 = sphi 0, %s41
    %s65 = sphi 0, %s67
    %s68 = sphi 0, %s65
    %s69 = sphi 0, %s68
    %s85 = sphi 0, %s69
    %s93 = sphi 0, %s95
    %s96 = sphi 0, %s93
    %s97 = sphi 0, %s96
    %s113 = sphi 0, %s97
    %s117 = sphi 0, %s117
    %s119 = sphi 0, %s117
    %s120 = sphi 0, %s119
    %s134 = sphi 0, %s120
    %s142 = sphi 0, %s144
    %s145 = sphi 0, %s142
    %s146 = sphi 0, %s145
    %s162 = sphi 0, %s146
    %s170 = sphi 0, %s172
    %s173 = sphi 0, %s170
    %s174 = sphi 0, %s173
    %s190 = sphi 0, %s174
    %s198 = sphi 0, %s200
    %s201 = sphi 0, %s198
    %s202 = sphi 0, %s201
    %s218 = sphi 0, %s202
  $region4: #{_lambda_.3} parent=0 // loop_header_branch
    %16 = sbr.rel (%p14) target = $region8
  $region5: #{_lambda_.3} parent=0 // loop_body
    %s18 = ssub.s32 %s13, 1
    %s19 = ssub.s32 %s13, 2
    %s26 = sadd.s32 1, %s21
    %p27 = scmp.ge.s32.totalorder %s26, 2
    %s28 = scalar_select %p27, 0, %s26
    %s29 = sadd.s32 1, %s20
    %s30 = scalar_select %p27, %s29, %s20
    %p31 = scmp.ge.s32.totalorder %s30, 2
    %s32 = scalar_select %p31, 0, %s30
    %s33 = ssub.s32 %s20, %s32
    %s34 = ssub.s32 %s21, %s28
    %s35 = sor.u32 %s33, %s34
    %p36 = scmp.eq.s32.totalorder %s35, 0
    %s38 = sadd.s32 %s37, 1
    %s39 = scalar_select %p36, %s37, %s38
    %p42 = pneg %p36
    %p43 = scmp.eq.s32.totalorder %s13, 3
    %p44 = por %p42, %p43
    %p45 = scmp.ne.s32.totalorder %s37, %s40
    %p46 = scmp.eq.s32.totalorder %s13, 0
    %p47 = por %p45, %p46
    %p48 = scmp.ne.s32.totalorder %s37, %s40
    %p49 = scmp.eq.s32.totalorder %s18, 3
    %p50 = por %p48, %p49
    %p51 = scmp.ne.s32.totalorder %s40, %s41
    %p52 = scmp.eq.s32.totalorder %s18, 0
    %p53 = por %p51, %p52
    %p54 = scmp.ne.s32.totalorder %s40, %s41
    %p55 = scmp.eq.s32.totalorder %s19, 3
    %p56 = por %p54, %p55
    %p58 = scmp.ne.s32.totalorder %s41, %s57
    %p59 = scmp.eq.s32.totalorder %s19, 0
    %p60 = por %p58, %p59
    %s61 = ssub.s32 %s20, %s32
    %s62 = ssub.s32 %s21, %s28
    %s63 = sor.u32 %s61, %s62
    %p64 = scmp.eq.s32.totalorder %s63, 0
    %s66 = sadd.s32 %s65, 1
    %s67 = scalar_select %p64, %s65, %s66
    %p70 = pneg %p64
    %p71 = scmp.eq.s32.totalorder %s13, 3
    %p72 = por %p70, %p71
    %p73 = scmp.ne.s32.totalorder %s65, %s68
    %p74 = scmp.eq.s32.totalorder %s13, 0
    %p75 = por %p73, %p74
    %p76 = scmp.ne.s32.totalorder %s65, %s68
    %p77 = scmp.eq.s32.totalorder %s18, 3
    %p78 = por %p76, %p77
    %p79 = scmp.ne.s32.totalorder %s68, %s69
    %p80 = scmp.eq.s32.totalorder %s18, 0
    %p81 = por %p79, %p80
    %p82 = scmp.ne.s32.totalorder %s68, %s69
    %p83 = scmp.eq.s32.totalorder %s19, 3
    %p84 = por %p82, %p83
    %p86 = scmp.ne.s32.totalorder %s69, %s85
    %p87 = scmp.eq.s32.totalorder %s19, 0
    %p88 = por %p86, %p87
    %s89 = ssub.s32 %s20, %s32
    %s90 = ssub.s32 %s21, %s28
    %s91 = sor.u32 %s89, %s90
    %p92 = scmp.eq.s32.totalorder %s91, 0
    %s94 = sadd.s32 %s93, 1
    %s95 = scalar_select %p92, %s93, %s94
    %p98 = pneg %p92
    %p99 = scmp.eq.s32.totalorder %s13, 3
    %p100 = por %p98, %p99
    %p101 = scmp.ne.s32.totalorder %s93, %s96
    %p102 = scmp.eq.s32.totalorder %s13, 0
    %p103 = por %p101, %p102
    %p104 = scmp.ne.s32.totalorder %s93, %s96
    %p105 = scmp.eq.s32.totalorder %s18, 3
    %p106 = por %p104, %p105
    %p107 = scmp.ne.s32.totalorder %s96, %s97
    %p108 = scmp.eq.s32.totalorder %s18, 0
    %p109 = por %p107, %p108
    %p110 = scmp.ne.s32.totalorder %s96, %s97
    %p111 = scmp.eq.s32.totalorder %s19, 3
    %p112 = por %p110, %p111
    %p114 = scmp.ne.s32.totalorder %s97, %s113
    %p115 = scmp.eq.s32.totalorder %s19, 0
    %p116 = por %p114, %p115
    %s118 = sadd.s32 %s117, 1
    %p121 = scmp.eq.s32.totalorder %s13, 3
    %p122 = scmp.ne.s32.totalorder %s117, %s119
    %p123 = scmp.eq.s32.totalorder %s13, 0
    %p124 = por %p122, %p123
    %p125 = scmp.ne.s32.totalorder %s117, %s119
    %p126 = scmp.eq.s32.totalorder %s18, 3
    %p127 = por %p125, %p126
    %p128 = scmp.ne.s32.totalorder %s119, %s120
    %p129 = scmp.eq.s32.totalorder %s18, 0
    %p130 = por %p128, %p129
    %p131 = scmp.ne.s32.totalorder %s119, %s120
    %p132 = scmp.eq.s32.totalorder %s19, 3
    %p133 = por %p131, %p132
    %p135 = scmp.ne.s32.totalorder %s120, %s134
    %p136 = scmp.eq.s32.totalorder %s19, 0
    %p137 = por %p135, %p136
    %s138 = ssub.s32 %s20, %s32
    %s139 = ssub.s32 %s21, %s28
    %s140 = sor.u32 %s138, %s139
    %p141 = scmp.eq.s32.totalorder %s140, 0
    %s143 = sadd.s32 %s142, 1
    %s144 = scalar_select %p141, %s142, %s143
    %p147 = pneg %p141
    %p148 = scmp.eq.s32.totalorder %s13, 3
    %p149 = por %p147, %p148
    %p150 = scmp.ne.s32.totalorder %s142, %s145
    %p151 = scmp.eq.s32.totalorder %s13, 0
    %p152 = por %p150, %p151
    %p153 = scmp.ne.s32.totalorder %s142, %s145
    %p154 = scmp.eq.s32.totalorder %s18, 3
    %p155 = por %p153, %p154
    %p156 = scmp.ne.s32.totalorder %s145, %s146
    %p157 = scmp.eq.s32.totalorder %s18, 0
    %p158 = por %p156, %p157
    %p159 = scmp.ne.s32.totalorder %s145, %s146
    %p160 = scmp.eq.s32.totalorder %s19, 3
    %p161 = por %p159, %p160
    %p163 = scmp.ne.s32.totalorder %s146, %s162
    %p164 = scmp.eq.s32.totalorder %s19, 0
    %p165 = por %p163, %p164
    %s166 = ssub.s32 %s20, %s32
    %s167 = ssub.s32 %s21, %s28
    %s168 = sor.u32 %s166, %s167
    %p169 = scmp.eq.s32.totalorder %s168, 0
    %s171 = sadd.s32 %s170, 1
    %s172 = scalar_select %p169, %s170, %s171
    %p175 = pneg %p169
    %p176 = scmp.eq.s32.totalorder %s13, 3
    %p177 = por %p175, %p176
    %p178 = scmp.ne.s32.totalorder %s170, %s173
    %p179 = scmp.eq.s32.totalorder %s13, 0
    %p180 = por %p178, %p179
    %p181 = scmp.ne.s32.totalorder %s170, %s173
    %p182 = scmp.eq.s32.totalorder %s18, 3
    %p183 = por %p181, %p182
    %p184 = scmp.ne.s32.totalorder %s173, %s174
    %p185 = scmp.eq.s32.totalorder %s18, 0
    %p186 = por %p184, %p185
    %p187 = scmp.ne.s32.totalorder %s173, %s174
    %p188 = scmp.eq.s32.totalorder %s19, 3
    %p189 = por %p187, %p188
    %p191 = scmp.ne.s32.totalorder %s174, %s190
    %p192 = scmp.eq.s32.totalorder %s19, 0
    %p193 = por %p191, %p192
    %s194 = ssub.s32 %s20, %s32
    %s195 = ssub.s32 %s21, %s28
    %s196 = sor.u32 %s194, %s195
    %p197 = scmp.eq.s32.totalorder %s196, 0
    %s199 = sadd.s32 %s198, 1
    %s200 = scalar_select %p197, %s198, %s199
    %p203 = pneg %p197
    %p204 = scmp.eq.s32.totalorder %s13, 3
    %p205 = por %p203, %p204
    %p206 = scmp.ne.s32.totalorder %s198, %s201
    %p207 = scmp.eq.s32.totalorder %s13, 0
    %p208 = por %p206, %p207
    %p209 = scmp.ne.s32.totalorder %s198, %s201
    %p210 = scmp.eq.s32.totalorder %s18, 3
    %p211 = por %p209, %p210
    %p212 = scmp.ne.s32.totalorder %s201, %s202
    %p213 = scmp.eq.s32.totalorder %s18, 0
    %p214 = por %p212, %p213
    %p215 = scmp.ne.s32.totalorder %s201, %s202
    %p216 = scmp.eq.s32.totalorder %s19, 3
    %p217 = por %p215, %p216
    %p219 = scmp.ne.s32.totalorder %s202, %s218
    %p220 = scmp.eq.s32.totalorder %s19, 0
    %p221 = por %p219, %p220
    %p222 = scmp.le.s32.totalorder 1, %s13
    %p223 = scmp.lt.s32.totalorder %s13, 5
    %p224 = pnand %p222, %p223
    %p225 = pneg %p224
    // Predicated region
    $region9: #{_lambda_.3} parent=5 // pred_check
      _
    $region10: #{_lambda_.3} parent=5 // pred_check_branch
      %227 = sbr.rel (%p224) target = $region12
    $region11: #{_lambda_.3} parent=5 // pred_region
      %s228 = ssub.s32 %s13, 1
      // Predicated region
      $region13: #{_lambda_.3} parent=11 // pred_check
        %p229 = pneg %p130
      $region14: #{_lambda_.3} parent=11 // pred_check_branch
        %231 = sbr.rel (%p229) target = $region16
      $region15: #{_lambda_.3} parent=11 // pred_region
        _
      $region16: #{_lambda_.3} parent=11 // pred_fallthru
        _
    $region12: #{_lambda_.3} parent=5 // pred_fallthru
      _
    %p232 = scmp.lt.s32.totalorder %s13, 4
    // Predicated region
    $region17: #{_lambda_.3} parent=5 // pred_check
      %p233 = pneg %p232
    $region18: #{_lambda_.3} parent=5 // pred_check_branch
      %235 = sbr.rel (%p233) target = $region20
    $region19: #{_lambda_.3} parent=5 // pred_region
      // Predicated region
      $region21: #{_lambda_.3} parent=19 // pred_check
        %p236 = pneg %p47
      $region22: #{_lambda_.3} parent=19 // pred_check_branch
        %238 = sbr.rel (%p236) target = $region24
      $region23: #{_lambda_.3} parent=19 // pred_region
        %s239 = smul.u32 8, %s21
        %p240 = scmp.lt.s32.totalorder %s20, 1
        %s241 = scalar_select %p240, %s20, 1
        %p242 = scmp.lt.s32.totalorder %s239, 15
        %s243 = scalar_select %p242, %s239, 15
        %s244 = smul.addr %s243, 2
        %s245 = smul.addr %s241, 32
        %s246 = sadd.s32 %s244, %s245
        %s247 = smul.addr %s246, 8
        %s248 = scalar_lea.vmem %s0, %s247
        %s249 = smul.u32 8, %s21
      $region24: #{_lambda_.3} parent=19 // pred_fallthru
        _
      // Predicated region
      $region25: #{_lambda_.3} parent=19 // pred_check
        %p250 = pneg %p75
      $region26: #{_lambda_.3} parent=19 // pred_check_branch
        %252 = sbr.rel (%p250) target = $region28
      $region27: #{_lambda_.3} parent=19 // pred_region
        %p253 = scmp.lt.s32.totalorder %s20, 1
        %s254 = scalar_select %p253, %s20, 1
        %p255 = scmp.lt.s32.totalorder %s21, 1
        %s256 = scalar_select %p255, %s21, 1
        %s257 = smul.addr %s256, 2
        %s258 = smul.addr %s254, 4
        %s259 = sadd.s32 %s257, %s258
        %s260 = smul.addr %s259, 8
        %s261 = scalar_lea.vmem %s1, %s260
      $region28: #{_lambda_.3} parent=19 // pred_fallthru
        _
      // Predicated region
      $region29: #{_lambda_.3} parent=19 // pred_check
        %p262 = pneg %p103
      $region30: #{_lambda_.3} parent=19 // pred_check_branch
        %264 = sbr.rel (%p262) target = $region32
      $region31: #{_lambda_.3} parent=19 // pred_region
        %p265 = scmp.lt.s32.totalorder %s20, 1
        %s266 = scalar_select %p265, %s20, 1
        %p267 = scmp.lt.s32.totalorder %s21, 1
        %s268 = scalar_select %p267, %s21, 1
        %s269 = smul.addr %s268, 2
        %s270 = smul.addr %s266, 4
        %s271 = sadd.s32 %s269, %s270
        %s272 = smul.addr %s271, 8
        %s273 = scalar_lea.vmem %s2, %s272
      $region32: #{_lambda_.3} parent=19 // pred_fallthru
        _
    $region20: #{_lambda_.3} parent=5 // pred_fallthru
      _
    %p274 = scmp.le.s32.totalorder 1, %s13
    %p275 = scmp.lt.s32.totalorder %s13, 5
    %p276 = pnand %p274, %p275
    %p277 = pneg %p276
    // Predicated region
    $region33: #{_lambda_.3} parent=5 // pred_check
      _
    $region34: #{_lambda_.3} parent=5 // pred_check_branch
      %279 = sbr.rel (%p276) target = $region36
    $region35: #{_lambda_.3} parent=5 // pred_region
      %s280 = ssub.s32 %s13, 1
      %s281 = smul.u32 8, %s23
      %p282 = scmp.lt.s32.totalorder %s22, 1
      %s283 = scalar_select %p282, %s22, 1
      %p284 = scmp.lt.s32.totalorder %s281, 15
      %s285 = scalar_select %p284, %s281, 15
      %s286 = smul.addr %s285, 2
      %s287 = smul.addr %s283, 32
      %s288 = sadd.s32 %s286, %s287
      %s289 = smul.addr %s288, 8
      %s290 = scalar_lea.vmem %s0, %s289
      %p291 = pneg %p53
      %p292 = pneg %p50
      %p293 = scmp.lt.s32.totalorder %s22, 1
      %s294 = scalar_select %p293, %s22, 1
      %p295 = scmp.lt.s32.totalorder %s23, 1
      %s296 = scalar_select %p295, %s23, 1
      %s297 = smul.addr %s296, 2
      %s298 = smul.addr %s294, 4
      %s299 = sadd.s32 %s297, %s298
      %s300 = smul.addr %s299, 8
      %s301 = scalar_lea.vmem %s1, %s300
      %p302 = pneg %p81
      %p303 = pneg %p78
      %p304 = scmp.lt.s32.totalorder %s22, 1
      %s305 = scalar_select %p304, %s22, 1
      %p306 = scmp.lt.s32.totalorder %s23, 1
      %s307 = scalar_select %p306, %s23, 1
      %s308 = smul.addr %s307, 2
      %s309 = smul.addr %s305, 4
      %s310 = sadd.s32 %s308, %s309
      %s311 = smul.addr %s310, 8
      %s312 = scalar_lea.vmem %s2, %s311
      %p313 = pneg %p109
      %p314 = pneg %p106
      %p315 = pneg %p130
      %p316 = pneg %p127
      %p317 = pneg %p158
      %p318 = pneg %p155
      %s319 = smul.u32 8, %s23
      %p320 = scmp.lt.s32.totalorder %s22, 1
      %s321 = scalar_select %p320, %s22, 1
      %p322 = scmp.lt.s32.totalorder %s319, 15
      %s323 = scalar_select %p322, %s319, 15
      %s324 = smul.addr %s323, 2
      %s325 = smul.addr %s321, 32
      %s326 = sadd.s32 %s324, %s325
      %s327 = smul.addr %s326, 8
      %s328 = scalar_lea.vmem %s4, %s327
      %p329 = pneg %p186
      %p330 = pneg %p183
      %p331 = scmp.lt.s32.totalorder %s22, 1
      %s332 = scalar_select %p331, %s22, 1
      %p333 = scmp.lt.s32.totalorder %s23, 1
      %s334 = scalar_select %p333, %s23, 1
      %s335 = smul.addr %s332, 2
      %s336 = sadd.s32 %s334, %s335
      %s337 = smul.addr %s336, 8
      %s338 = scalar_lea.vmem %s5, %s337
      %p339 = pneg %p214
      %p340 = pneg %p211
      %p341 = scmp.lt.s32.totalorder %s22, 1
      %s342 = scalar_select %p341, %s22, 1
      %p343 = scmp.lt.s32.totalorder %s23, 1
      %s344 = scalar_select %p343, %s23, 1
      %s345 = smul.addr %s342, 2
      %s346 = sadd.s32 %s344, %s345
      %s347 = smul.addr %s346, 8
      %s348 = scalar_lea.vmem %s6, %s347
      %s349 = smul.u32 8, %s23
      %p350 = scmp.lt.s32.totalorder %s22, 1
      %s351 = scalar_select %p350, %s22, 1
      %p352 = scmp.lt.s32.totalorder %s349, 15
      %s353 = scalar_select %p352, %s349, 15
      %s354 = smul.addr %s353, 2
      %s355 = smul.addr %s351, 32
      %s356 = sadd.s32 %s354, %s355
      %s357 = smul.addr %s356, 8
      %s358 = scalar_lea.vmem %s0, %s357
      %s359 = smul.u32 8, %s23
      %p360 = scmp.lt.s32.totalorder %s22, 1
      %s361 = scalar_select %p360, %s22, 1
      %p362 = scmp.lt.s32.totalorder %s23, 1
      %s363 = scalar_select %p362, %s23, 1
      %s364 = smul.addr %s363, 2
      %s365 = smul.addr %s361, 4
      %s366 = sadd.s32 %s364, %s365
      %s367 = smul.addr %s366, 8
      %s368 = scalar_lea.vmem %s1, %s367
      %p369 = scmp.lt.s32.totalorder %s22, 1
      %s370 = scalar_select %p369, %s22, 1
      %p371 = scmp.lt.s32.totalorder %s23, 1
      %s372 = scalar_select %p371, %s23, 1
      %s373 = smul.addr %s372, 2
      %s374 = smul.addr %s370, 4
      %s375 = sadd.s32 %s373, %s374
      %s376 = smul.addr %s375, 8
      %s377 = scalar_lea.vmem %s2, %s376
      %s378 = smul.u32 8, %s23
      %p379 = scmp.lt.s32.totalorder %s22, 1
      %s380 = scalar_select %p379, %s22, 1
      %p381 = scmp.lt.s32.totalorder %s378, 15
      %s382 = scalar_select %p381, %s378, 15
      %s383 = smul.addr %s382, 2
      %s384 = smul.addr %s380, 32
      %s385 = sadd.s32 %s383, %s384
      %s386 = smul.addr %s385, 8
      %s387 = scalar_lea.vmem %s4, %s386
      %s388 = smul.u32 8, %s23
      %p389 = scmp.lt.s32.totalorder %s22, 1
      %s390 = scalar_select %p389, %s22, 1
      %p391 = scmp.lt.s32.totalorder %s23, 1
      %s392 = scalar_select %p391, %s23, 1
      %s393 = smul.addr %s390, 2
      %s394 = sadd.s32 %s392, %s393
      %s395 = smul.addr %s394, 8
      %s396 = scalar_lea.vmem %s5, %s395
      %p397 = scmp.lt.s32.totalorder %s22, 1
      %s398 = scalar_select %p397, %s22, 1
      %p399 = scmp.lt.s32.totalorder %s23, 1
      %s400 = scalar_select %p399, %s23, 1
      %s401 = smul.addr %s398, 2
      %s402 = sadd.s32 %s400, %s401
      %s403 = smul.addr %s402, 8
      %s404 = scalar_lea.vmem %s6, %s403
      %v405 = vld [vmem:[%s358] sm:$0xff]
      %v406 = vld [vmem:[%s358 + $0x8] sm:$0xff]
      %v407 = vld [vmem:[%s358 + $0x10] sm:$0xff]
      %v408 = vld [vmem:[%s358 + $0x18] sm:$0xff]
      %v409 = vld [vmem:[%s358 + $0x20] sm:$0xff]
      %v410 = vld [vmem:[%s358 + $0x28] sm:$0xff]
      %v411 = vld [vmem:[%s358 + $0x30] sm:$0xff]
      %v412 = vld [vmem:[%s358 + $0x38] sm:$0xff]
      %v413 = vld [vmem:[%s358 + $0x40] sm:$0xff]
      %v414 = vld [vmem:[%s358 + $0x48] sm:$0xff]
      %v415 = vld [vmem:[%s358 + $0x50] sm:$0xff]
      %v416 = vld [vmem:[%s358 + $0x58] sm:$0xff]
      %v417 = vld [vmem:[%s358 + $0x60] sm:$0xff]
      %v418 = vld [vmem:[%s358 + $0x68] sm:$0xff]
      %v419 = vld [vmem:[%s358 + $0x70] sm:$0xff]
      %v420 = vld [vmem:[%s358 + $0x78] sm:$0xff]
      %vm421 = vcmask 24576
      %422 = vst.msk [vmem:[#allocation2] sm:$0x1] %vm421, 0.0
      %423 = vst.msk [vmem:[#allocation2 + $0x18] sm:$0x1] %vm421, 0.0
      %424 = vst.msk [vmem:[#allocation2 + $0x30] sm:$0x1] %vm421, 0.0
      %425 = vst.msk [vmem:[#allocation2 + $0x48] sm:$0x1] %vm421, 0.0
      %426 = vst.msk [vmem:[#allocation2 + $0x60] sm:$0x1] %vm421, 0.0
      %427 = vst.msk [vmem:[#allocation2 + $0x78] sm:$0x1] %vm421, 0.0
      %428 = vst.msk [vmem:[#allocation2 + $0x90] sm:$0x1] %vm421, 0.0
      %429 = vst.msk [vmem:[#allocation2 + $0xa8] sm:$0x1] %vm421, 0.0
      %430 = vst.msk [vmem:[#allocation2 + $0xc0] sm:$0x1] %vm421, 0.0
      %431 = vst.msk [vmem:[#allocation2 + $0xd8] sm:$0x1] %vm421, 0.0
      %432 = vst.msk [vmem:[#allocation2 + $0x11] sm:$0x1] %vm421, 0.0
      %433 = vst.msk [vmem:[#allocation2 + $0x29] sm:$0x1] %vm421, 0.0
      %434 = vst.msk [vmem:[#allocation2 + $0x41] sm:$0x1] %vm421, 0.0
      %435 = vst.msk [vmem:[#allocation2 + $0x59] sm:$0x1] %vm421, 0.0
      %436 = vst.msk [vmem:[#allocation2 + $0x71] sm:$0x1] %vm421, 0.0
      %437 = vst.msk [vmem:[#allocation2 + $0x89] sm:$0x1] %vm421, 0.0
      %438 = vst.msk [vmem:[#allocation2 + $0xa1] sm:$0x1] %vm421, 0.0
      %439 = vst.msk [vmem:[#allocation2 + $0xb9] sm:$0x1] %vm421, 0.0
      %440 = vst.msk [vmem:[#allocation2 + $0xd1] sm:$0x1] %vm421, 0.0
      %441 = vst.msk [vmem:[#allocation2 + $0xe9] sm:$0x1] %vm421, 0.0
      %v442 = vld [vmem:[%s368] sm:$0xff]
      %v443 = vld [vmem:[%s368 + $0x8] sm:$0xff]
      %vm444 = vcmask 31744
      %445 = vst.msk [vmem:[#allocation2 + $0x1] sm:$0xff] %vm444, %v442
      %446 = vst.msk [vmem:[#allocation2 + $0x9] sm:$0xff] %vm444, %v443
      %v447 = vld [vmem:[%s377] sm:$0xff]
      %v448 = vld [vmem:[%s377 + $0x8] sm:$0xff]
      %s449 = scalar_lea.vmem [#allocation2], 216
      %450 = vst.msk [vmem:[%s449 + $0x1] sm:$0xff] %vm444, %v447
      %451 = vst.msk [vmem:[%s449 + $0x9] sm:$0xff] %vm444, %v448
      %s452 = scalar_lea.vmem [#allocation2], 24
      %453 = vst.msk [vmem:[%s452 + $0x1] sm:$0xff] %vm444, %v405
      %454 = vst.msk [vmem:[%s452 + $0x9] sm:$0xff] %vm444, %v406
      %455 = vst.msk [vmem:[%s452 + $0x19] sm:$0xff] %vm444, %v407
      %456 = vst.msk [vmem:[%s452 + $0x21] sm:$0xff] %vm444, %v408
      %457 = vst.msk [vmem:[%s452 + $0x31] sm:$0xff] %vm444, %v409
      %458 = vst.msk [vmem:[%s452 + $0x39] sm:$0xff] %vm444, %v410
      %459 = vst.msk [vmem:[%s452 + $0x49] sm:$0xff] %vm444, %v411
      %460 = vst.msk [vmem:[%s452 + $0x51] sm:$0xff] %vm444, %v412
      %461 = vst.msk [vmem:[%s452 + $0x61] sm:$0xff] %vm444, %v413
      %462 = vst.msk [vmem:[%s452 + $0x69] sm:$0xff] %vm444, %v414
      %463 = vst.msk [vmem:[%s452 + $0x79] sm:$0xff] %vm444, %v415
      %464 = vst.msk [vmem:[%s452 + $0x81] sm:$0xff] %vm444, %v416
      %465 = vst.msk [vmem:[%s452 + $0x91] sm:$0xff] %vm444, %v417
      %466 = vst.msk [vmem:[%s452 + $0x99] sm:$0xff] %vm444, %v418
      %467 = vst.msk [vmem:[%s452 + $0xa9] sm:$0xff] %vm444, %v419
      %468 = vst.msk [vmem:[%s452 + $0xb1] sm:$0xff] %vm444, %v420
      %vm469 = vcmask 1047840
      %470 = vst.msk [vmem:[#allocation3] sm:$0xff] %vm469, 0.0
      %471 = vst.msk [vmem:[#allocation3 + $0x8] sm:$0xff] %vm469, 0.0
      %472 = vst.msk [vmem:[#allocation3 + $0x10] sm:$0xff] %vm469, 0.0
      %473 = vst.msk [vmem:[#allocation3 + $0x18] sm:$0xff] %vm469, 0.0
      %474 = vst.msk [vmem:[#allocation3 + $0x20] sm:$0xff] %vm469, 0.0
      %475 = vst.msk [vmem:[#allocation3 + $0x28] sm:$0xff] %vm469, 0.0
      %476 = vst.msk [vmem:[#allocation3 + $0x30] sm:$0xff] %vm469, 0.0
      %477 = vst.msk [vmem:[#allocation3 + $0x38] sm:$0xff] %vm469, 0.0
      %v478 = vld [vmem:[%s3] sm:$0xff]
      %v479 = vld [vmem:[%s3 + $0x8] sm:$0xff]
      %v480 = vld [vmem:[%s3 + $0x10] sm:$0xff]
      %v481 = vld [vmem:[%s3 + $0x18] sm:$0xff]
      %v482 = vld [vmem:[%s3 + $0x20] sm:$0xff]
      %v483 = vld [vmem:[%s3 + $0x28] sm:$0xff]
      %v484 = vld [vmem:[%s3 + $0x30] sm:$0xff]
      %v485 = vld [vmem:[%s3 + $0x38] sm:$0xff]
      %v486 = vld [vmem:[%s3 + $0x40] sm:$0xff]
      %v487 = vld [vmem:[%s3 + $0x48] sm:$0xff]
      %v488 = vld [vmem:[%s3 + $0x50] sm:$0xff]
      %v489 = vld [vmem:[%s3 + $0x58] sm:$0xff]
      %v490 = vld [vmem:[%s3 + $0x60] sm:$0xff]
      %v491 = vld [vmem:[%s3 + $0x68] sm:$0xff]
      %v492 = vld [vmem:[%s3 + $0x70] sm:$0xff]
      %v493 = vld [vmem:[%s3 + $0x78] sm:$0xff]
      %v494 = vld [vmem:[#allocation2] sm:$0xff]
      %v495 = vld [vmem:[#allocation2 + $0x8] sm:$0xff]
      %v496 = vld [vmem:[#allocation2 + $0x18] sm:$0xff]
      %v497 = vld [vmem:[#allocation2 + $0x20] sm:$0xff]
      %v498 = vld [vmem:[#allocation2 + $0x30] sm:$0xff]
      %v499 = vld [vmem:[#allocation2 + $0x38] sm:$0xff]
      %v500 = vld [vmem:[#allocation2 + $0x48] sm:$0xff]
      %v501 = vld [vmem:[#allocation2 + $0x50] sm:$0xff]
      %502 = vst.msk [vmem:[#allocation3] sm:$0xff] %vm444, %v494
      %503 = vst.msk [vmem:[#allocation3 + $0x8] sm:$0xff] %vm444, %v495
      %504 = vst.msk [vmem:[#allocation3 + $0x10] sm:$0xff] %vm444, %v496
      %505 = vst.msk [vmem:[#allocation3 + $0x18] sm:$0xff] %vm444, %v497
      %506 = vst.msk [vmem:[#allocation3 + $0x20] sm:$0xff] %vm444, %v498
      %507 = vst.msk [vmem:[#allocation3 + $0x28] sm:$0xff] %vm444, %v499
      %508 = vst.msk [vmem:[#allocation3 + $0x30] sm:$0xff] %vm444, %v500
      %509 = vst.msk [vmem:[#allocation3 + $0x38] sm:$0xff] %vm444, %v501
      %v510 = vld [vmem:[#allocation2 + $0x1] sm:$0xff]
      %v511 = vld [vmem:[#allocation2 + $0x9] sm:$0xff]
      %v512 = vld [vmem:[#allocation2 + $0x19] sm:$0xff]
      %v513 = vld [vmem:[#allocation2 + $0x21] sm:$0xff]
      %v514 = vld [vmem:[#allocation2 + $0x31] sm:$0xff]
      %v515 = vld [vmem:[#allocation2 + $0x39] sm:$0xff]
      %v516 = vld [vmem:[#allocation2 + $0x49] sm:$0xff]
      %v517 = vld [vmem:[#allocation2 + $0x51] sm:$0xff]
      %526 = vrot.lane.b32.xlu0 %v510, 4
      %v527 = vpop.permute.xlu0 %526
      %528 = vrot.lane.b32.xlu0 %v511, 4
      %v529 = vpop.permute.xlu0 %528
      %530 = vrot.lane.b32.xlu0 %v512, 4
      %v531 = vpop.permute.xlu0 %530
      %532 = vrot.lane.b32.xlu0 %v513, 4
      %v533 = vpop.permute.xlu0 %532
      %534 = vrot.lane.b32.xlu0 %v514, 4
      %v535 = vpop.permute.xlu0 %534
      %536 = vrot.lane.b32.xlu0 %v515, 4
      %v537 = vpop.permute.xlu0 %536
      %538 = vrot.lane.b32.xlu0 %v516, 4
      %v539 = vpop.permute.xlu0 %538
      %540 = vrot.lane.b32.xlu0 %v517, 4
      %v541 = vpop.permute.xlu0 %540
      %vm550 = vcmask 64544
      %551 = vst.msk [vmem:[#allocation3] sm:$0xff] %vm550, %v527
      %552 = vst.msk [vmem:[#allocation3 + $0x8] sm:$0xff] %vm550, %v529
      %553 = vst.msk [vmem:[#allocation3 + $0x10] sm:$0xff] %vm550, %v531
      %554 = vst.msk [vmem:[#allocation3 + $0x18] sm:$0xff] %vm550, %v533
      %555 = vst.msk [vmem:[#allocation3 + $0x20] sm:$0xff] %vm550, %v535
      %556 = vst.msk [vmem:[#allocation3 + $0x28] sm:$0xff] %vm550, %v537
      %557 = vst.msk [vmem:[#allocation3 + $0x30] sm:$0xff] %vm550, %v539
      %558 = vst.msk [vmem:[#allocation3 + $0x38] sm:$0xff] %vm550, %v541
      %v559 = vld [vmem:[#allocation2 + $0x2] sm:$0xff]
      %v560 = vld [vmem:[#allocation2 + $0xa] sm:$0xff]
      %v561 = vld [vmem:[#allocation2 + $0x1a] sm:$0xff]
      %v562 = vld [vmem:[#allocation2 + $0x22] sm:$0xff]
      %v563 = vld [vmem:[#allocation2 + $0x32] sm:$0xff]
      %v564 = vld [vmem:[#allocation2 + $0x3a] sm:$0xff]
      %v565 = vld [vmem:[#allocation2 + $0x4a] sm:$0xff]
      %v566 = vld [vmem:[#allocation2 + $0x52] sm:$0xff]
      %575 = vrot.lane.b32.xlu0 %v559, 8
      %v576 = vpop.permute.xlu0 %575
      %577 = vrot.lane.b32.xlu0 %v560, 8
      %v578 = vpop.permute.xlu0 %577
      %579 = vrot.lane.b32.xlu0 %v561, 8
      %v580 = vpop.permute.xlu0 %579
      %581 = vrot.lane.b32.xlu0 %v562, 8
      %v582 = vpop.permute.xlu0 %581
      %583 = vrot.lane.b32.xlu0 %v563, 8
      %v584 = vpop.permute.xlu0 %583
      %585 = vrot.lane.b32.xlu0 %v564, 8
      %v586 = vpop.permute.xlu0 %585
      %587 = vrot.lane.b32.xlu0 %v565, 8
      %v588 = vpop.permute.xlu0 %587
      %589 = vrot.lane.b32.xlu0 %v566, 8
      %v590 = vpop.permute.xlu0 %589
      %vm599 = vcmask 97344
      %600 = vst.msk [vmem:[#allocation3] sm:$0xff] %vm599, %v576
      %601 = vst.msk [vmem:[#allocation3 + $0x8] sm:$0xff] %vm599, %v578
      %602 = vst.msk [vmem:[#allocation3 + $0x10] sm:$0xff] %vm599, %v580
      %603 = vst.msk [vmem:[#allocation3 + $0x18] sm:$0xff] %vm599, %v582
      %604 = vst.msk [vmem:[#allocation3 + $0x20] sm:$0xff] %vm599, %v584
      %605 = vst.msk [vmem:[#allocation3 + $0x28] sm:$0xff] %vm599, %v586
      %606 = vst.msk [vmem:[#allocation3 + $0x30] sm:$0xff] %vm599, %v588
      %607 = vst.msk [vmem:[#allocation3 + $0x38] sm:$0xff] %vm599, %v590
      %v608 = vld [vmem:[%s452] sm:$0xff]
      %v609 = vld [vmem:[%s452 + $0x8] sm:$0xff]
      %v610 = vld [vmem:[%s452 + $0x18] sm:$0xff]
      %v611 = vld [vmem:[%s452 + $0x20] sm:$0xff]
      %v612 = vld [vmem:[%s452 + $0x30] sm:$0xff]
      %v613 = vld [vmem:[%s452 + $0x38] sm:$0xff]
      %v614 = vld [vmem:[%s452 + $0x48] sm:$0xff]
      %v615 = vld [vmem:[%s452 + $0x50] sm:$0xff]
      %624 = vrot.lane.b32.xlu0 %v608, 12
      %v625 = vpop.permute.xlu0 %624
      %626 = vrot.lane.b32.xlu0 %v609, 12
      %v627 = vpop.permute.xlu0 %626
      %628 = vrot.lane.b32.xlu0 %v610, 12
      %v629 = vpop.permute.xlu0 %628
      %630 = vrot.lane.b32.xlu0 %v611, 12
      %v631 = vpop.permute.xlu0 %630
      %632 = vrot.lane.b32.xlu0 %v612, 12
      %v633 = vpop.permute.xlu0 %632
      %634 = vrot.lane.b32.xlu0 %v613, 12
      %v635 = vpop.permute.xlu0 %634
      %636 = vrot.lane.b32.xlu0 %v614, 12
      %v637 = vpop.permute.xlu0 %636
      %638 = vrot.lane.b32.xlu0 %v615, 12
      %v639 = vpop.permute.xlu0 %638
      %vm648 = vcmask 130144
      %649 = vst.msk [vmem:[#allocation3] sm:$0xff] %vm648, %v625
      %650 = vst.msk [vmem:[#allocation3 + $0x8] sm:$0xff] %vm648, %v627
      %651 = vst.msk [vmem:[#allocation3 + $0x10] sm:$0xff] %vm648, %v629
      %652 = vst.msk [vmem:[#allocation3 + $0x18] sm:$0xff] %vm648, %v631
      %653 = vst.msk [vmem:[#allocation3 + $0x20] sm:$0xff] %vm648, %v633
      %654 = vst.msk [vmem:[#allocation3 + $0x28] sm:$0xff] %vm648, %v635
      %655 = vst.msk [vmem:[#allocation3 + $0x30] sm:$0xff] %vm648, %v637
      %656 = vst.msk [vmem:[#allocation3 + $0x38] sm:$0xff] %vm648, %v639
      %v657 = vld [vmem:[%s452 + $0x1] sm:$0xff]
      %v658 = vld [vmem:[%s452 + $0x9] sm:$0xff]
      %v659 = vld [vmem:[%s452 + $0x19] sm:$0xff]
      %v660 = vld [vmem:[%s452 + $0x21] sm:$0xff]
      %v661 = vld [vmem:[%s452 + $0x31] sm:$0xff]
      %v662 = vld [vmem:[%s452 + $0x39] sm:$0xff]
      %v663 = vld [vmem:[%s452 + $0x49] sm:$0xff]
      %v664 = vld [vmem:[%s452 + $0x51] sm:$0xff]
      %673 = vrot.lane.b32.xlu0 %v657, 16
      %v674 = vpop.permute.xlu0 %673
      %675 = vrot.lane.b32.xlu0 %v658, 16
      %v676 = vpop.permute.xlu0 %675
      %677 = vrot.lane.b32.xlu0 %v659, 16
      %v678 = vpop.permute.xlu0 %677
      %679 = vrot.lane.b32.xlu0 %v660, 16
      %v680 = vpop.permute.xlu0 %679
      %681 = vrot.lane.b32.xlu0 %v661, 16
      %v682 = vpop.permute.xlu0 %681
      %683 = vrot.lane.b32.xlu0 %v662, 16
      %v684 = vpop.permute.xlu0 %683
      %685 = vrot.lane.b32.xlu0 %v663, 16
      %v686 = vpop.permute.xlu0 %685
      %687 = vrot.lane.b32.xlu0 %v664, 16
      %v688 = vpop.permute.xlu0 %687
      %vm697 = vcmask 162944
      %698 = vst.msk [vmem:[#allocation3] sm:$0xff] %vm697, %v674
      %699 = vst.msk [vmem:[#allocation3 + $0x8] sm:$0xff] %vm697, %v676
      %700 = vst.msk [vmem:[#allocation3 + $0x10] sm:$0xff] %vm697, %v678
      %701 = vst.msk [vmem:[#allocation3 + $0x18] sm:$0xff] %vm697, %v680
      %702 = vst.msk [vmem:[#allocation3 + $0x20] sm:$0xff] %vm697, %v682
      %703 = vst.msk [vmem:[#allocation3 + $0x28] sm:$0xff] %vm697, %v684
      %704 = vst.msk [vmem:[#allocation3 + $0x30] sm:$0xff] %vm697, %v686
      %705 = vst.msk [vmem:[#allocation3 + $0x38] sm:$0xff] %vm697, %v688
      %v706 = vld [vmem:[%s452 + $0x2] sm:$0xff]
      %v707 = vld [vmem:[%s452 + $0xa] sm:$0xff]
      %v708 = vld [vmem:[%s452 + $0x1a] sm:$0xff]
      %v709 = vld [vmem:[%s452 + $0x22] sm:$0xff]
      %v710 = vld [vmem:[%s452 + $0x32] sm:$0xff]
      %v711 = vld [vmem:[%s452 + $0x3a] sm:$0xff]
      %v712 = vld [vmem:[%s452 + $0x4a] sm:$0xff]
      %v713 = vld [vmem:[%s452 + $0x52] sm:$0xff]
      %722 = vrot.lane.b32.xlu0 %v706, 20
      %v723 = vpop.permute.xlu0 %722
      %724 = vrot.lane.b32.xlu0 %v707, 20
      %v725 = vpop.permute.xlu0 %724
      %726 = vrot.lane.b32.xlu0 %v708, 20
      %v727 = vpop.permute.xlu0 %726
      %728 = vrot.lane.b32.xlu0 %v709, 20
      %v729 = vpop.permute.xlu0 %728
      %730 = vrot.lane.b32.xlu0 %v710, 20
      %v731 = vpop.permute.xlu0 %730
      %732 = vrot.lane.b32.xlu0 %v711, 20
      %v733 = vpop.permute.xlu0 %732
      %734 = vrot.lane.b32.xlu0 %v712, 20
      %v735 = vpop.permute.xlu0 %734
      %736 = vrot.lane.b32.xlu0 %v713, 20
      %v737 = vpop.permute.xlu0 %736
      %vm746 = vcmask 195744
      %747 = vst.msk [vmem:[#allocation3] sm:$0xff] %vm746, %v723
      %748 = vst.msk [vmem:[#allocation3 + $0x8] sm:$0xff] %vm746, %v725
      %749 = vst.msk [vmem:[#allocation3 + $0x10] sm:$0xff] %vm746, %v727
      %750 = vst.msk [vmem:[#allocation3 + $0x18] sm:$0xff] %vm746, %v729
      %751 = vst.msk [vmem:[#allocation3 + $0x20] sm:$0xff] %vm746, %v731
      %752 = vst.msk [vmem:[#allocation3 + $0x28] sm:$0xff] %vm746, %v733
      %753 = vst.msk [vmem:[#allocation3 + $0x30] sm:$0xff] %vm746, %v735
      %754 = vst.msk [vmem:[#allocation3 + $0x38] sm:$0xff] %vm746, %v737
      %s755 = scalar_lea.vmem [#allocation2], 48
      %v756 = vld [vmem:[%s755] sm:$0xff]
      %v757 = vld [vmem:[%s755 + $0x8] sm:$0xff]
      %v758 = vld [vmem:[%s755 + $0x18] sm:$0xff]
      %v759 = vld [vmem:[%s755 + $0x20] sm:$0xff]
      %v760 = vld [vmem:[%s755 + $0x30] sm:$0xff]
      %v761 = vld [vmem:[%s755 + $0x38] sm:$0xff]
      %v762 = vld [vmem:[%s755 + $0x48] sm:$0xff]
      %v763 = vld [vmem:[%s755 + $0x50] sm:$0xff]
      %772 = vrot.lane.b32.xlu0 %v756, 24
      %v773 = vpop.permute.xlu0 %772
      %774 = vrot.lane.b32.xlu0 %v757, 24
      %v775 = vpop.permute.xlu0 %774
      %776 = vrot.lane.b32.xlu0 %v758, 24
      %v777 = vpop.permute.xlu0 %776
      %778 = vrot.lane.b32.xlu0 %v759, 24
      %v779 = vpop.permute.xlu0 %778
      %780 = vrot.lane.b32.xlu0 %v760, 24
      %v781 = vpop.permute.xlu0 %780
      %782 = vrot.lane.b32.xlu0 %v761, 24
      %v783 = vpop.permute.xlu0 %782
      %784 = vrot.lane.b32.xlu0 %v762, 24
      %v785 = vpop.permute.xlu0 %784
      %786 = vrot.lane.b32.xlu0 %v763, 24
      %v787 = vpop.permute.xlu0 %786
      %vm796 = vcmask 228544
      %797 = vst.msk [vmem:[#allocation3] sm:$0xff] %vm796, %v773
      %798 = vst.msk [vmem:[#allocation3 + $0x8] sm:$0xff] %vm796, %v775
      %799 = vst.msk [vmem:[#allocation3 + $0x10] sm:$0xff] %vm796, %v777
      %800 = vst.msk [vmem:[#allocation3 + $0x18] sm:$0xff] %vm796, %v779
      %801 = vst.msk [vmem:[#allocation3 + $0x20] sm:$0xff] %vm796, %v781
      %802 = vst.msk [vmem:[#allocation3 + $0x28] sm:$0xff] %vm796, %v783
      %803 = vst.msk [vmem:[#allocation3 + $0x30] sm:$0xff] %vm796, %v785
      %804 = vst.msk [vmem:[#allocation3 + $0x38] sm:$0xff] %vm796, %v787
      %v805 = vld [vmem:[%s755 + $0x1] sm:$0xff]
      %v806 = vld [vmem:[%s755 + $0x9] sm:$0xff]
      %v807 = vld [vmem:[%s755 + $0x19] sm:$0xff]
      %v808 = vld [vmem:[%s755 + $0x21] sm:$0xff]
      %v809 = vld [vmem:[%s755 + $0x31] sm:$0xff]
      %v810 = vld [vmem:[%s755 + $0x39] sm:$0xff]
      %v811 = vld [vmem:[%s755 + $0x49] sm:$0xff]
      %v812 = vld [vmem:[%s755 + $0x51] sm:$0xff]
      %821 = vrot.lane.b32.xlu0 %v805, 28
      %v822 = vpop.permute.xlu0 %821
      %823 = vrot.lane.b32.xlu0 %v806, 28
      %v824 = vpop.permute.xlu0 %823
      %825 = vrot.lane.b32.xlu0 %v807, 28
      %v826 = vpop.permute.xlu0 %825
      %827 = vrot.lane.b32.xlu0 %v808, 28
      %v828 = vpop.permute.xlu0 %827
      %829 = vrot.lane.b32.xlu0 %v809, 28
      %v830 = vpop.permute.xlu0 %829
      %831 = vrot.lane.b32.xlu0 %v810, 28
      %v832 = vpop.permute.xlu0 %831
      %833 = vrot.lane.b32.xlu0 %v811, 28
      %v834 = vpop.permute.xlu0 %833
      %835 = vrot.lane.b32.xlu0 %v812, 28
      %v836 = vpop.permute.xlu0 %835
      %vm845 = vcmask 261344
      %846 = vst.msk [vmem:[#allocation3] sm:$0xff] %vm845, %v822
      %847 = vst.msk [vmem:[#allocation3 + $0x8] sm:$0xff] %vm845, %v824
      %848 = vst.msk [vmem:[#allocation3 + $0x10] sm:$0xff] %vm845, %v826
      %849 = vst.msk [vmem:[#allocation3 + $0x18] sm:$0xff] %vm845, %v828
      %850 = vst.msk [vmem:[#allocation3 + $0x20] sm:$0xff] %vm845, %v830
      %851 = vst.msk [vmem:[#allocation3 + $0x28] sm:$0xff] %vm845, %v832
      %852 = vst.msk [vmem:[#allocation3 + $0x30] sm:$0xff] %vm845, %v834
      %853 = vst.msk [vmem:[#allocation3 + $0x38] sm:$0xff] %vm845, %v836
      %v854 = vld [vmem:[%s755 + $0x2] sm:$0xff]
      %v855 = vld [vmem:[%s755 + $0xa] sm:$0xff]
      %v856 = vld [vmem:[%s755 + $0x1a] sm:$0xff]
      %v857 = vld [vmem:[%s755 + $0x22] sm:$0xff]
      %v858 = vld [vmem:[%s755 + $0x32] sm:$0xff]
      %v859 = vld [vmem:[%s755 + $0x3a] sm:$0xff]
      %v860 = vld [vmem:[%s755 + $0x4a] sm:$0xff]
      %v861 = vld [vmem:[%s755 + $0x52] sm:$0xff]
      %870 = vrot.lane.b32.xlu0 %v854, 32
      %v871 = vpop.permute.xlu0 %870
      %872 = vrot.lane.b32.xlu0 %v855, 32
      %v873 = vpop.permute.xlu0 %872
      %874 = vrot.lane.b32.xlu0 %v856, 32
      %v875 = vpop.permute.xlu0 %874
      %876 = vrot.lane.b32.xlu0 %v857, 32
      %v877 = vpop.permute.xlu0 %876
      %878 = vrot.lane.b32.xlu0 %v858, 32
      %v879 = vpop.permute.xlu0 %878
      %880 = vrot.lane.b32.xlu0 %v859, 32
      %v881 = vpop.permute.xlu0 %880
      %882 = vrot.lane.b32.xlu0 %v860, 32
      %v883 = vpop.permute.xlu0 %882
      %884 = vrot.lane.b32.xlu0 %v861, 32
      %v885 = vpop.permute.xlu0 %884
      %vm894 = vcmask 294144
      %895 = vst.msk [vmem:[#allocation3] sm:$0xff] %vm894, %v871
      %896 = vst.msk [vmem:[#allocation3 + $0x8] sm:$0xff] %vm894, %v873
      %897 = vst.msk [vmem:[#allocation3 + $0x10] sm:$0xff] %vm894, %v875
      %898 = vst.msk [vmem:[#allocation3 + $0x18] sm:$0xff] %vm894, %v877
      %899 = vst.msk [vmem:[#allocation3 + $0x20] sm:$0xff] %vm894, %v879
      %900 = vst.msk [vmem:[#allocation3 + $0x28] sm:$0xff] %vm894, %v881
      %901 = vst.msk [vmem:[#allocation3 + $0x30] sm:$0xff] %vm894, %v883
      %902 = vst.msk [vmem:[#allocation3 + $0x38] sm:$0xff] %vm894, %v885
      %v903 = vld [vmem:[#allocation3] sm:$0xff]
      %v904 = vld [vmem:[#allocation3 + $0x8] sm:$0xff]
      %v905 = vld [vmem:[#allocation3 + $0x10] sm:$0xff]
      %v906 = vld [vmem:[#allocation3 + $0x18] sm:$0xff]
      %v907 = vld [vmem:[#allocation3 + $0x20] sm:$0xff]
      %v908 = vld [vmem:[#allocation3 + $0x28] sm:$0xff]
      %v909 = vld [vmem:[#allocation3 + $0x30] sm:$0xff]
      %v910 = vld [vmem:[#allocation3 + $0x38] sm:$0xff]
      %911 = vmatprep.subr.mxu0 0.0
      %912 = vmatpush1.msra.mxu0 %v478
      %913 = vmatprep.subr.mxu0 0.0
      %914 = vmatpush1.msra.mxu0 %v479
      %915 = vmatprep.subr.mxu0 0.0
      %916 = vmatpush1.msra.mxu0 %v480
      %917 = vmatprep.subr.mxu0 0.0
      %918 = vmatpush1.msra.mxu0 %v481
      %919 = vmatprep.subr.mxu0 0.0
      %920 = vmatpush1.msra.mxu0 %v482
      %921 = vmatprep.subr.mxu0 0.0
      %922 = vmatpush1.msra.mxu0 %v483
      %923 = vmatprep.subr.mxu0 0.0
      %924 = vmatpush1.msra.mxu0 %v484
      %925 = vmatprep.subr.mxu0 0.0
      %926 = vmatpush1.msra.mxu0 %v485
      %927 = vmatprep.subr.mxu0 0.0
      %928 = vmatpush1.msra.mxu0 %v486
      %929 = vmatprep.subr.mxu0 0.0
      %930 = vmatpush1.msra.mxu0 %v487
      %931 = vmatprep.subr.mxu0 0.0
      %932 = vmatpush1.msra.mxu0 %v488
      %933 = vmatprep.subr.mxu0 0.0
      %934 = vmatpush1.msra.mxu0 %v489
      %935 = vmatprep.subr.mxu0 0.0
      %936 = vmatpush1.msra.mxu0 %v490
      %937 = vmatprep.subr.mxu0 0.0
      %938 = vmatpush1.msra.mxu0 %v491
      %939 = vmatprep.subr.mxu0 0.0
      %940 = vmatpush1.msra.mxu0 %v492
      %941 = vmatprep.subr.mxu0 0.0
      %942 = vmatpush1.msra.mxu0 %v493
      %943 = vmatprep.subr.mxu0 0.0
      %944 = vmatpush1.msra.mxu0 0.0
      %945 = vmatprep.subr.mxu0 0.0
      %946 = vmatpush1.msra.mxu0 0.0
      %947 = vmatprep.subr.mxu0 0.0
      %948 = vmatpush1.msra.mxu0 0.0
      %949 = vmatprep.subr.mxu0 0.0
      %950 = vmatpush1.msra.mxu0 0.0
      %951 = vmatprep.subr.mxu0 0.0
      %952 = vmatpush1.msra.mxu0 0.0
      %953 = vmatprep.subr.mxu0 0.0
      %954 = vmatpush1.msra.mxu0 0.0
      %955 = vmatprep.subr.mxu0 0.0
      %956 = vmatpush1.msra.mxu0 0.0
      %957 = vmatprep.subr.mxu0 0.0
      %958 = vmatpush1.msra.mxu0 0.0
      %959 = vmatprep.subr.mxu0 0.0
      %960 = vmatpush1.msra.mxu0 0.0
      %961 = vmatprep.subr.mxu0 0.0
      %962 = vmatpush1.msra.mxu0 0.0
      %963 = vmatprep.subr.mxu0 0.0
      %964 = vmatpush1.msra.mxu0 0.0
      %965 = vmatprep.subr.mxu0 0.0
      %966 = vmatpush1.msra.mxu0 0.0
      %967 = vmatprep.subr.mxu0 0.0
      %968 = vmatpush1.msra.mxu0 0.0
      %969 = vmatprep.subr.mxu0 0.0
      %970 = vmatpush1.msra.mxu0 0.0
      %971 = vmatprep.subr.mxu0 0.0
      %972 = vmatpush1.msra.mxu0 0.0
      %973 = vmatprep.subr.mxu0 0.0
      %974 = vmatpush1.msra.mxu0 0.0
      %975 = vmatprep.mubr.f32.mxu0 0.0
      %976 = vmatmul.mubr.f32.gmra.mrb[0].mxu0 %v903
      %v977 = vpop.f32.mrb[0].mxu0
      %v978 = vadd.f32 0.0, %v977
      %v979 = vpop.f32.mrb[0].mxu0
      %980 = vmatprep.mubr.f32.mxu0 0.0
      %981 = vmatmul.mubr.f32.gmra.mrb[0].mxu0 %v904
      %v982 = vpop.f32.mrb[0].mxu0
      %v983 = vadd.f32 0.0, %v982
      %v984 = vpop.f32.mrb[0].mxu0
      %985 = vmatprep.mubr.f32.mxu0 0.0
      %986 = vmatmul.mubr.f32.gmra.mrb[0].mxu0 %v905
      %v987 = vpop.f32.mrb[0].mxu0
      %v988 = vadd.f32 0.0, %v987
      %v989 = vpop.f32.mrb[0].mxu0
      %990 = vmatprep.mubr.f32.mxu0 0.0
      %991 = vmatmul.mubr.f32.gmra.mrb[0].mxu0 %v906
      %v992 = vpop.f32.mrb[0].mxu0
      %v993 = vadd.f32 0.0, %v992
      %v994 = vpop.f32.mrb[0].mxu0
      %995 = vmatprep.mubr.f32.mxu0 0.0
      %996 = vmatmul.mubr.f32.gmra.mrb[0].mxu0 %v907
      %v997 = vpop.f32.mrb[0].mxu0
      %v998 = vadd.f32 0.0, %v997
      %v999 = vpop.f32.mrb[0].mxu0
      %1000 = vmatprep.mubr.f32.mxu0 0.0
      %1001 = vmatmul.mubr.f32.gmra.mrb[0].mxu0 %v908
      %v1002 = vpop.f32.mrb[0].mxu0
      %v1003 = vadd.f32 0.0, %v1002
      %v1004 = vpop.f32.mrb[0].mxu0
      %1005 = vmatprep.mubr.f32.mxu0 0.0
      %1006 = vmatmul.mubr.f32.gmra.mrb[0].mxu0 %v909
      %v1007 = vpop.f32.mrb[0].mxu0
      %v1008 = vadd.f32 0.0, %v1007
      %v1009 = vpop.f32.mrb[0].mxu0
      %1010 = vmatprep.mubr.f32.mxu0 0.0
      %1011 = vmatmul.mubr.f32.gmra.mrb[0].mxu0 %v910
      %v1012 = vpop.f32.mrb[0].mxu0
      %v1013 = vadd.f32 0.0, %v1012
      %v1014 = vpop.f32.mrb[0].mxu0
      %1015 = vdwg.mxu0
      %1016 = vst [vmem:[%s387] sm:$0xff] %v978
      %1017 = vst [vmem:[%s387 + $0x8] sm:$0xff] %v983
      %1018 = vst [vmem:[%s387 + $0x10] sm:$0xff] %v988
      %1019 = vst [vmem:[%s387 + $0x18] sm:$0xff] %v993
      %1020 = vst [vmem:[%s387 + $0x20] sm:$0xff] %v998
      %1021 = vst [vmem:[%s387 + $0x28] sm:$0xff] %v1003
      %1022 = vst [vmem:[%s387 + $0x30] sm:$0xff] %v1008
      %1023 = vst [vmem:[%s387 + $0x38] sm:$0xff] %v1013
      %v1024 = vadd.f32 %v978, %v983
      %v1025 = vadd.f32 %v1024, %v988
      %v1026 = vadd.f32 %v1025, %v993
      %v1027 = vadd.f32 %v1026, %v998
      %v1028 = vadd.f32 %v1027, %v1003
      %v1029 = vadd.f32 %v1028, %v1008
      %v1030 = vadd.f32 %v1029, %v1013
      %v1031 = vrot.slane %v1030, 4
      %v1032 = vadd.f32 %v1030, %v1031
      %v1033 = vrot.slane %v1032, 2
      %v1034 = vadd.f32 %v1032, %v1033
      %v1035 = vrot.slane %v1034, 1
      %v1036 = vadd.f32 %v1034, %v1035
      %v1037 = vadd.f32 %v1036, 0.0
      %v1038 = vmul.f32 %v978, %v978
      %v1039 = vmul.f32 %v983, %v983
      %v1040 = vmul.f32 %v988, %v988
      %v1041 = vmul.f32 %v993, %v993
      %v1042 = vmul.f32 %v998, %v998
      %v1043 = vmul.f32 %v1003, %v1003
      %v1044 = vmul.f32 %v1008, %v1008
      %v1045 = vmul.f32 %v1013, %v1013
      %v1046 = vadd.f32 %v1038, %v1039
      %v1047 = vadd.f32 %v1046, %v1040
      %v1048 = vadd.f32 %v1047, %v1041
      %v1049 = vadd.f32 %v1048, %v1042
      %v1050 = vadd.f32 %v1049, %v1043
      %v1051 = vadd.f32 %v1050, %v1044
      %v1052 = vadd.f32 %v1051, %v1045
      %v1053 = vrot.slane %v1052, 4
      %v1054 = vadd.f32 %v1052, %v1053
      %v1055 = vrot.slane %v1054, 2
      %v1056 = vadd.f32 %v1054, %v1055
      %v1057 = vrot.slane %v1056, 1
      %v1058 = vadd.f32 %v1056, %v1057
      %v1059 = vadd.f32 %v1058, 0.0
      %s1060 = scalar_lea.vmem [#allocation2], 96
      %v1061 = vld [vmem:[%s1060] sm:$0xff]
      %v1062 = vld [vmem:[%s1060 + $0x8] sm:$0xff]
      %v1063 = vld [vmem:[%s1060 + $0x18] sm:$0xff]
      %v1064 = vld [vmem:[%s1060 + $0x20] sm:$0xff]
      %v1065 = vld [vmem:[%s1060 + $0x30] sm:$0xff]
      %v1066 = vld [vmem:[%s1060 + $0x38] sm:$0xff]
      %v1067 = vld [vmem:[%s1060 + $0x48] sm:$0xff]
      %v1068 = vld [vmem:[%s1060 + $0x50] sm:$0xff]
      %1069 = vst.msk [vmem:[#allocation3] sm:$0xff] %vm444, %v1061
      %1070 = vst.msk [vmem:[#allocation3 + $0x8] sm:$0xff] %vm444, %v1062
      %1071 = vst.msk [vmem:[#allocation3 + $0x10] sm:$0xff] %vm444, %v1063
      %1072 = vst.msk [vmem:[#allocation3 + $0x18] sm:$0xff] %vm444, %v1064
      %1073 = vst.msk [vmem:[#allocation3 + $0x20] sm:$0xff] %vm444, %v1065
      %1074 = vst.msk [vmem:[#allocation3 + $0x28] sm:$0xff] %vm444, %v1066
      %1075 = vst.msk [vmem:[#allocation3 + $0x30] sm:$0xff] %vm444, %v1067
      %1076 = vst.msk [vmem:[#allocation3 + $0x38] sm:$0xff] %vm444, %v1068
      %v1077 = vld [vmem:[%s1060 + $0x1] sm:$0xff]
      %v1078 = vld [vmem:[%s1060 + $0x9] sm:$0xff]
      %v1079 = vld [vmem:[%s1060 + $0x19] sm:$0xff]
      %v1080 = vld [vmem:[%s1060 + $0x21] sm:$0xff]
      %v1081 = vld [vmem:[%s1060 + $0x31] sm:$0xff]
      %v1082 = vld [vmem:[%s1060 + $0x39] sm:$0xff]
      %v1083 = vld [vmem:[%s1060 + $0x49] sm:$0xff]
      %v1084 = vld [vmem:[%s1060 + $0x51] sm:$0xff]
      %1093 = vrot.lane.b32.xlu0 %v1077, 4
      %v1094 = vpop.permute.xlu0 %1093
      %1095 = vrot.lane.b32.xlu0 %v1078, 4
      %v1096 = vpop.permute.xlu0 %1095
      %1097 = vrot.lane.b32.xlu0 %v1079, 4
      %v1098 = vpop.permute.xlu0 %1097
      %1099 = vrot.lane.b32.xlu0 %v1080, 4
      %v1100 = vpop.permute.xlu0 %1099
      %1101 = vrot.lane.b32.xlu0 %v1081, 4
      %v1102 = vpop.permute.xlu0 %1101
      %1103 = vrot.lane.b32.xlu0 %v1082, 4
      %v1104 = vpop.permute.xlu0 %1103
      %1105 = vrot.lane.b32.xlu0 %v1083, 4
      %v1106 = vpop.permute.xlu0 %1105
      %1107 = vrot.lane.b32.xlu0 %v1084, 4
      %v1108 = vpop.permute.xlu0 %1107
      %1117 = vst.msk [vmem:[#allocation3] sm:$0xff] %vm550, %v1094
      %1118 = vst.msk [vmem:[#allocation3 + $0x8] sm:$0xff] %vm550, %v1096
      %1119 = vst.msk [vmem:[#allocation3 + $0x10] sm:$0xff] %vm550, %v1098
      %1120 = vst.msk [vmem:[#allocation3 + $0x18] sm:$0xff] %vm550, %v1100
      %1121 = vst.msk [vmem:[#allocation3 + $0x20] sm:$0xff] %vm550, %v1102
      %1122 = vst.msk [vmem:[#allocation3 + $0x28] sm:$0xff] %vm550, %v1104
      %1123 = vst.msk [vmem:[#allocation3 + $0x30] sm:$0xff] %vm550, %v1106
      %1124 = vst.msk [vmem:[#allocation3 + $0x38] sm:$0xff] %vm550, %v1108
      %v1125 = vld [vmem:[%s1060 + $0x2] sm:$0xff]
      %v1126 = vld [vmem:[%s1060 + $0xa] sm:$0xff]
      %v1127 = vld [vmem:[%s1060 + $0x1a] sm:$0xff]
      %v1128 = vld [vmem:[%s1060 + $0x22] sm:$0xff]
      %v1129 = vld [vmem:[%s1060 + $0x32] sm:$0xff]
      %v1130 = vld [vmem:[%s1060 + $0x3a] sm:$0xff]
      %v1131 = vld [vmem:[%s1060 + $0x4a] sm:$0xff]
      %v1132 = vld [vmem:[%s1060 + $0x52] sm:$0xff]
      %1141 = vrot.lane.b32.xlu0 %v1125, 8
      %v1142 = vpop.permute.xlu0 %1141
      %1143 = vrot.lane.b32.xlu0 %v1126, 8
      %v1144 = vpop.permute.xlu0 %1143
      %1145 = vrot.lane.b32.xlu0 %v1127, 8
      %v1146 = vpop.permute.xlu0 %1145
      %1147 = vrot.lane.b32.xlu0 %v1128, 8
      %v1148 = vpop.permute.xlu0 %1147
      %1149 = vrot.lane.b32.xlu0 %v1129, 8
      %v1150 = vpop.permute.xlu0 %1149
      %1151 = vrot.lane.b32.xlu0 %v1130, 8
      %v1152 = vpop.permute.xlu0 %1151
      %1153 = vrot.lane.b32.xlu0 %v1131, 8
      %v1154 = vpop.permute.xlu0 %1153
      %1155 = vrot.lane.b32.xlu0 %v1132, 8
      %v1156 = vpop.permute.xlu0 %1155
      %1165 = vst.msk [vmem:[#allocation3] sm:$0xff] %vm599, %v1142
      %1166 = vst.msk [vmem:[#allocation3 + $0x8] sm:$0xff] %vm599, %v1144
      %1167 = vst.msk [vmem:[#allocation3 + $0x10] sm:$0xff] %vm599, %v1146
      %1168 = vst.msk [vmem:[#allocation3 + $0x18] sm:$0xff] %vm599, %v1148
      %1169 = vst.msk [vmem:[#allocation3 + $0x20] sm:$0xff] %vm599, %v1150
      %1170 = vst.msk [vmem:[#allocation3 + $0x28] sm:$0xff] %vm599, %v1152
      %1171 = vst.msk [vmem:[#allocation3 + $0x30] sm:$0xff] %vm599, %v1154
      %1172 = vst.msk [vmem:[#allocation3 + $0x38] sm:$0xff] %vm599, %v1156
      %s1173 = scalar_lea.vmem [#allocation2], 120
      %v1174 = vld [vmem:[%s1173] sm:$0xff]
      %v1175 = vld [vmem:[%s1173 + $0x8] sm:$0xff]
      %v1176 = vld [vmem:[%s1173 + $0x18] sm:$0xff]
      %v1177 = vld [vmem:[%s1173 + $0x20] sm:$0xff]
      %v1178 = vld [vmem:[%s1173 + $0x30] sm:$0xff]
      %v1179 = vld [vmem:[%s1173 + $0x38] sm:$0xff]
      %v1180 = vld [vmem:[%s1173 + $0x48] sm:$0xff]
      %v1181 = vld [vmem:[%s1173 + $0x50] sm:$0xff]
      %1190 = vrot.lane.b32.xlu0 %v1174, 12
      %v1191 = vpop.permute.xlu0 %1190
      %1192 = vrot.lane.b32.xlu0 %v1175, 12
      %v1193 = vpop.permute.xlu0 %1192
      %1194 = vrot.lane.b32.xlu0 %v1176, 12
      %v1195 = vpop.permute.xlu0 %1194
      %1196 = vrot.lane.b32.xlu0 %v1177, 12
      %v1197 = vpop.permute.xlu0 %1196
      %1198 = vrot.lane.b32.xlu0 %v1178, 12
      %v1199 = vpop.permute.xlu0 %1198
      %1200 = vrot.lane.b32.xlu0 %v1179, 12
      %v1201 = vpop.permute.xlu0 %1200
      %1202 = vrot.lane.b32.xlu0 %v1180, 12
      %v1203 = vpop.permute.xlu0 %1202
      %1204 = vrot.lane.b32.xlu0 %v1181, 12
      %v1205 = vpop.permute.xlu0 %1204
      %1214 = vst.msk [vmem:[#allocation3] sm:$0xff] %vm648, %v1191
      %1215 = vst.msk [vmem:[#allocation3 + $0x8] sm:$0xff] %vm648, %v1193
      %1216 = vst.msk [vmem:[#allocation3 + $0x10] sm:$0xff] %vm648, %v1195
      %1217 = vst.msk [vmem:[#allocation3 + $0x18] sm:$0xff] %vm648, %v1197
      %1218 = vst.msk [vmem:[#allocation3 + $0x20] sm:$0xff] %vm648, %v1199
      %1219 = vst.msk [vmem:[#allocation3 + $0x28] sm:$0xff] %vm648, %v1201
      %1220 = vst.msk [vmem:[#allocation3 + $0x30] sm:$0xff] %vm648, %v1203
      %1221 = vst.msk [vmem:[#allocation3 + $0x38] sm:$0xff] %vm648, %v1205
      %v1222 = vld [vmem:[%s1173 + $0x1] sm:$0xff]
      %v1223 = vld [vmem:[%s1173 + $0x9] sm:$0xff]
      %v1224 = vld [vmem:[%s1173 + $0x19] sm:$0xff]
      %v1225 = vld [vmem:[%s1173 + $0x21] sm:$0xff]
      %v1226 = vld [vmem:[%s1173 + $0x31] sm:$0xff]
      %v1227 = vld [vmem:[%s1173 + $0x39] sm:$0xff]
      %v1228 = vld [vmem:[%s1173 + $0x49] sm:$0xff]
      %v1229 = vld [vmem:[%s1173 + $0x51] sm:$0xff]
      %1238 = vrot.lane.b32.xlu0 %v1222, 16
      %v1239 = vpop.permute.xlu0 %1238
      %1240 = vrot.lane.b32.xlu0 %v1223, 16
      %v1241 = vpop.permute.xlu0 %1240
      %1242 = vrot.lane.b32.xlu0 %v1224, 16
      %v1243 = vpop.permute.xlu0 %1242
      %1244 = vrot.lane.b32.xlu0 %v1225, 16
      %v1245 = vpop.permute.xlu0 %1244
      %1246 = vrot.lane.b32.xlu0 %v1226, 16
      %v1247 = vpop.permute.xlu0 %1246
      %1248 = vrot.lane.b32.xlu0 %v1227, 16
      %v1249 = vpop.permute.xlu0 %1248
      %1250 = vrot.lane.b32.xlu0 %v1228, 16
      %v1251 = vpop.permute.xlu0 %1250
      %1252 = vrot.lane.b32.xlu0 %v1229, 16
      %v1253 = vpop.permute.xlu0 %1252
      %1262 = vst.msk [vmem:[#allocation3] sm:$0xff] %vm697, %v1239
      %1263 = vst.msk [vmem:[#allocation3 + $0x8] sm:$0xff] %vm697, %v1241
      %1264 = vst.msk [vmem:[#allocation3 + $0x10] sm:$0xff] %vm697, %v1243
      %1265 = vst.msk [vmem:[#allocation3 + $0x18] sm:$0xff] %vm697, %v1245
      %1266 = vst.msk [vmem:[#allocation3 + $0x20] sm:$0xff] %vm697, %v1247
      %1267 = vst.msk [vmem:[#allocation3 + $0x28] sm:$0xff] %vm697, %v1249
      %1268 = vst.msk [vmem:[#allocation3 + $0x30] sm:$0xff] %vm697, %v1251
      %1269 = vst.msk [vmem:[#allocation3 + $0x38] sm:$0xff] %vm697, %v1253
      %v1270 = vld [vmem:[%s1173 + $0x2] sm:$0xff]
      %v1271 = vld [vmem:[%s1173 + $0xa] sm:$0xff]
      %v1272 = vld [vmem:[%s1173 + $0x1a] sm:$0xff]
      %v1273 = vld [vmem:[%s1173 + $0x22] sm:$0xff]
      %v1274 = vld [vmem:[%s1173 + $0x32] sm:$0xff]
      %v1275 = vld [vmem:[%s1173 + $0x3a] sm:$0xff]
      %v1276 = vld [vmem:[%s1173 + $0x4a] sm:$0xff]
      %v1277 = vld [vmem:[%s1173 + $0x52] sm:$0xff]
      %1286 = vrot.lane.b32.xlu0 %v1270, 20
      %v1287 = vpop.permute.xlu0 %1286
      %1288 = vrot.lane.b32.xlu0 %v1271, 20
      %v1289 = vpop.permute.xlu0 %1288
      %1290 = vrot.lane.b32.xlu0 %v1272, 20
      %v1291 = vpop.permute.xlu0 %1290
      %1292 = vrot.lane.b32.xlu0 %v1273, 20
      %v1293 = vpop.permute.xlu0 %1292
      %1294 = vrot.lane.b32.xlu0 %v1274, 20
      %v1295 = vpop.permute.xlu0 %1294
      %1296 = vrot.lane.b32.xlu0 %v1275, 20
      %v1297 = vpop.permute.xlu0 %1296
      %1298 = vrot.lane.b32.xlu0 %v1276, 20
      %v1299 = vpop.permute.xlu0 %1298
      %1300 = vrot.lane.b32.xlu0 %v1277, 20
      %v1301 = vpop.permute.xlu0 %1300
      %1310 = vst.msk [vmem:[#allocation3] sm:$0xff] %vm746, %v1287
      %1311 = vst.msk [vmem:[#allocation3 + $0x8] sm:$0xff] %vm746, %v1289
      %1312 = vst.msk [vmem:[#allocation3 + $0x10] sm:$0xff] %vm746, %v1291
      %1313 = vst.msk [vmem:[#allocation3 + $0x18] sm:$0xff] %vm746, %v1293
      %1314 = vst.msk [vmem:[#allocation3 + $0x20] sm:$0xff] %vm746, %v1295
      %1315 = vst.msk [vmem:[#allocation3 + $0x28] sm:$0xff] %vm746, %v1297
      %1316 = vst.msk [vmem:[#allocation3 + $0x30] sm:$0xff] %vm746, %v1299
      %1317 = vst.msk [vmem:[#allocation3 + $0x38] sm:$0xff] %vm746, %v1301
      %s1318 = scalar_lea.vmem [#allocation2], 144
      %v1319 = vld [vmem:[%s1318] sm:$0xff]
      %v1320 = vld [vmem:[%s1318 + $0x8] sm:$0xff]
      %v1321 = vld [vmem:[%s1318 + $0x18] sm:$0xff]
      %v1322 = vld [vmem:[%s1318 + $0x20] sm:$0xff]
      %v1323 = vld [vmem:[%s1318 + $0x30] sm:$0xff]
      %v1324 = vld [vmem:[%s1318 + $0x38] sm:$0xff]
      %v1325 = vld [vmem:[%s1318 + $0x48] sm:$0xff]
      %v1326 = vld [vmem:[%s1318 + $0x50] sm:$0xff]
      %1335 = vrot.lane.b32.xlu0 %v1319, 24
      %v1336 = vpop.permute.xlu0 %1335
      %1337 = vrot.lane.b32.xlu0 %v1320, 24
      %v1338 = vpop.permute.xlu0 %1337
      %1339 = vrot.lane.b32.xlu0 %v1321, 24
      %v1340 = vpop.permute.xlu0 %1339
      %1341 = vrot.lane.b32.xlu0 %v1322, 24
      %v1342 = vpop.permute.xlu0 %1341
      %1343 = vrot.lane.b32.xlu0 %v1323, 24
      %v1344 = vpop.permute.xlu0 %1343
      %1345 = vrot.lane.b32.xlu0 %v1324, 24
      %v1346 = vpop.permute.xlu0 %1345
      %1347 = vrot.lane.b32.xlu0 %v1325, 24
      %v1348 = vpop.permute.xlu0 %1347
      %1349 = vrot.lane.b32.xlu0 %v1326, 24
      %v1350 = vpop.permute.xlu0 %1349
      %1359 = vst.msk [vmem:[#allocation3] sm:$0xff] %vm796, %v1336
      %1360 = vst.msk [vmem:[#allocation3 + $0x8] sm:$0xff] %vm796, %v1338
      %1361 = vst.msk [vmem:[#allocation3 + $0x10] sm:$0xff] %vm796, %v1340
      %1362 = vst.msk [vmem:[#allocation3 + $0x18] sm:$0xff] %vm796, %v1342
      %1363 = vst.msk [vmem:[#allocation3 + $0x20] sm:$0xff] %vm796, %v1344
      %1364 = vst.msk [vmem:[#allocation3 + $0x28] sm:$0xff] %vm796, %v1346
      %1365 = vst.msk [vmem:[#allocation3 + $0x30] sm:$0xff] %vm796, %v1348
      %1366 = vst.msk [vmem:[#allocation3 + $0x38] sm:$0xff] %vm796, %v1350
      %v1367 = vld [vmem:[%s1318 + $0x1] sm:$0xff]
      %v1368 = vld [vmem:[%s1318 + $0x9] sm:$0xff]
      %v1369 = vld [vmem:[%s1318 + $0x19] sm:$0xff]
      %v1370 = vld [vmem:[%s1318 + $0x21] sm:$0xff]
      %v1371 = vld [vmem:[%s1318 + $0x31] sm:$0xff]
      %v1372 = vld [vmem:[%s1318 + $0x39] sm:$0xff]
      %v1373 = vld [vmem:[%s1318 + $0x49] sm:$0xff]
      %v1374 = vld [vmem:[%s1318 + $0x51] sm:$0xff]
      %1383 = vrot.lane.b32.xlu0 %v1367, 28
      %v1384 = vpop.permute.xlu0 %1383
      %1385 = vrot.lane.b32.xlu0 %v1368, 28
      %v1386 = vpop.permute.xlu0 %1385
      %1387 = vrot.lane.b32.xlu0 %v1369, 28
      %v1388 = vpop.permute.xlu0 %1387
      %1389 = vrot.lane.b32.xlu0 %v1370, 28
      %v1390 = vpop.permute.xlu0 %1389
      %1391 = vrot.lane.b32.xlu0 %v1371, 28
      %v1392 = vpop.permute.xlu0 %1391
      %1393 = vrot.lane.b32.xlu0 %v1372, 28
      %v1394 = vpop.permute.xlu0 %1393
      %1395 = vrot.lane.b32.xlu0 %v1373, 28
      %v1396 = vpop.permute.xlu0 %1395
      %1397 = vrot.lane.b32.xlu0 %v1374, 28
      %v1398 = vpop.permute.xlu0 %1397
      %1407 = vst.msk [vmem:[#allocation3] sm:$0xff] %vm845, %v1384
      %1408 = vst.msk [vmem:[#allocation3 + $0x8] sm:$0xff] %vm845, %v1386
      %1409 = vst.msk [vmem:[#allocation3 + $0x10] sm:$0xff] %vm845, %v1388
      %1410 = vst.msk [vmem:[#allocation3 + $0x18] sm:$0xff] %vm845, %v1390
      %1411 = vst.msk [vmem:[#allocation3 + $0x20] sm:$0xff] %vm845, %v1392
      %1412 = vst.msk [vmem:[#allocation3 + $0x28] sm:$0xff] %vm845, %v1394
      %1413 = vst.msk [vmem:[#allocation3 + $0x30] sm:$0xff] %vm845, %v1396
      %1414 = vst.msk [vmem:[#allocation3 + $0x38] sm:$0xff] %vm845, %v1398
      %v1415 = vld [vmem:[%s1318 + $0x2] sm:$0xff]
      %v1416 = vld [vmem:[%s1318 + $0xa] sm:$0xff]
      %v1417 = vld [vmem:[%s1318 + $0x1a] sm:$0xff]
      %v1418 = vld [vmem:[%s1318 + $0x22] sm:$0xff]
      %v1419 = vld [vmem:[%s1318 + $0x32] sm:$0xff]
      %v1420 = vld [vmem:[%s1318 + $0x3a] sm:$0xff]
      %v1421 = vld [vmem:[%s1318 + $0x4a] sm:$0xff]
      %v1422 = vld [vmem:[%s1318 + $0x52] sm:$0xff]
      %1431 = vrot.lane.b32.xlu0 %v1415, 32
      %v1432 = vpop.permute.xlu0 %1431
      %1433 = vrot.lane.b32.xlu0 %v1416, 32
      %v1434 = vpop.permute.xlu0 %1433
      %1435 = vrot.lane.b32.xlu0 %v1417, 32
      %v1436 = vpop.permute.xlu0 %1435
      %1437 = vrot.lane.b32.xlu0 %v1418, 32
      %v1438 = vpop.permute.xlu0 %1437
      %1439 = vrot.lane.b32.xlu0 %v1419, 32
      %v1440 = vpop.permute.xlu0 %1439
      %1441 = vrot.lane.b32.xlu0 %v1420, 32
      %v1442 = vpop.permute.xlu0 %1441
      %1443 = vrot.lane.b32.xlu0 %v1421, 32
      %v1444 = vpop.permute.xlu0 %1443
      %1445 = vrot.lane.b32.xlu0 %v1422, 32
      %v1446 = vpop.permute.xlu0 %1445
      %1455 = vst.msk [vmem:[#allocation3] sm:$0xff] %vm894, %v1432
      %1456 = vst.msk [vmem:[#allocation3 + $0x8] sm:$0xff] %vm894, %v1434
      %1457 = vst.msk [vmem:[#allocation3 + $0x10] sm:$0xff] %vm894, %v1436
      %1458 = vst.msk [vmem:[#allocation3 + $0x18] sm:$0xff] %vm894, %v1438
      %1459 = vst.msk [vmem:[#allocation3 + $0x20] sm:$0xff] %vm894, %v1440
      %1460 = vst.msk [vmem:[#allocation3 + $0x28] sm:$0xff] %vm894, %v1442
      %1461 = vst.msk [vmem:[#allocation3 + $0x30] sm:$0xff] %vm894, %v1444
      %1462 = vst.msk [vmem:[#allocation3 + $0x38] sm:$0xff] %vm894, %v1446
      %v1463 = vld [vmem:[#allocation3] sm:$0xff]
      %v1464 = vld [vmem:[#allocation3 + $0x8] sm:$0xff]
      %v1465 = vld [vmem:[#allocation3 + $0x10] sm:$0xff]
      %v1466 = vld [vmem:[#allocation3 + $0x18] sm:$0xff]
      %v1467 = vld [vmem:[#allocation3 + $0x20] sm:$0xff]
      %v1468 = vld [vmem:[#allocation3 + $0x28] sm:$0xff]
      %v1469 = vld [vmem:[#allocation3 + $0x30] sm:$0xff]
      %v1470 = vld [vmem:[#allocation3 + $0x38] sm:$0xff]
      %1471 = vmatprep.subr.mxu0 0.0
      %1472 = vmatpush1.msra.mxu0 %v478
      %1473 = vmatprep.subr.mxu0 0.0
      %1474 = vmatpush1.msra.mxu0 %v479
      %1475 = vmatprep.subr.mxu0 0.0
      %1476 = vmatpush1.msra.mxu0 %v480
      %1477 = vmatprep.subr.mxu0 0.0
      %1478 = vmatpush1.msra.mxu0 %v481
      %1479 = vmatprep.subr.mxu0 0.0
      %1480 = vmatpush1.msra.mxu0 %v482
      %1481 = vmatprep.subr.mxu0 0.0
      %1482 = vmatpush1.msra.mxu0 %v483
      %1483 = vmatprep.subr.mxu0 0.0
      %1484 = vmatpush1.msra.mxu0 %v484
      %1485 = vmatprep.subr.mxu0 0.0
      %1486 = vmatpush1.msra.mxu0 %v485
      %1487 = vmatprep.subr.mxu0 0.0
      %1488 = vmatpush1.msra.mxu0 %v486
      %1489 = vmatprep.subr.mxu0 0.0
      %1490 = vmatpush1.msra.mxu0 %v487
      %1491 = vmatprep.subr.mxu0 0.0
      %1492 = vmatpush1.msra.mxu0 %v488
      %1493 = vmatprep.subr.mxu0 0.0
      %1494 = vmatpush1.msra.mxu0 %v489
      %1495 = vmatprep.subr.mxu0 0.0
      %1496 = vmatpush1.msra.mxu0 %v490
      %1497 = vmatprep.subr.mxu0 0.0
      %1498 = vmatpush1.msra.mxu0 %v491
      %1499 = vmatprep.subr.mxu0 0.0
      %1500 = vmatpush1.msra.mxu0 %v492
      %1501 = vmatprep.subr.mxu0 0.0
      %1502 = vmatpush1.msra.mxu0 %v493
      %1503 = vmatprep.subr.mxu0 0.0
      %1504 = vmatpush1.msra.mxu0 0.0
      %1505 = vmatprep.subr.mxu0 0.0
      %1506 = vmatpush1.msra.mxu0 0.0
      %1507 = vmatprep.subr.mxu0 0.0
      %1508 = vmatpush1.msra.mxu0 0.0
      %1509 = vmatprep.subr.mxu0 0.0
      %1510 = vmatpush1.msra.mxu0 0.0
      %1511 = vmatprep.subr.mxu0 0.0
      %1512 = vmatpush1.msra.mxu0 0.0
      %1513 = vmatprep.subr.mxu0 0.0
      %1514 = vmatpush1.msra.mxu0 0.0
      %1515 = vmatprep.subr.mxu0 0.0
      %1516 = vmatpush1.msra.mxu0 0.0
      %1517 = vmatprep.subr.mxu0 0.0
      %1518 = vmatpush1.msra.mxu0 0.0
      %1519 = vmatprep.subr.mxu0 0.0
      %1520 = vmatpush1.msra.mxu0 0.0
      %1521 = vmatprep.subr.mxu0 0.0
      %1522 = vmatpush1.msra.mxu0 0.0
      %1523 = vmatprep.subr.mxu0 0.0
      %1524 = vmatpush1.msra.mxu0 0.0
      %1525 = vmatprep.subr.mxu0 0.0
      %1526 = vmatpush1.msra.mxu0 0.0
      %1527 = vmatprep.subr.mxu0 0.0
      %1528 = vmatpush1.msra.mxu0 0.0
      %1529 = vmatprep.subr.mxu0 0.0
      %1530 = vmatpush1.msra.mxu0 0.0
      %1531 = vmatprep.subr.mxu0 0.0
      %1532 = vmatpush1.msra.mxu0 0.0
      %1533 = vmatprep.subr.mxu0 0.0
      %1534 = vmatpush1.msra.mxu0 0.0
      %1535 = vmatprep.mubr.f32.mxu0 0.0
      %1536 = vmatmul.mubr.f32.gmra.mrb[0].mxu0 %v1463
      %v1537 = vpop.f32.mrb[0].mxu0
      %v1538 = vadd.f32 0.0, %v1537
      %v1539 = vpop.f32.mrb[0].mxu0
      %1540 = vmatprep.mubr.f32.mxu0 0.0
      %1541 = vmatmul.mubr.f32.gmra.mrb[0].mxu0 %v1464
      %v1542 = vpop.f32.mrb[0].mxu0
      %v1543 = vadd.f32 0.0, %v1542
      %v1544 = vpop.f32.mrb[0].mxu0
      %1545 = vmatprep.mubr.f32.mxu0 0.0
      %1546 = vmatmul.mubr.f32.gmra.mrb[0].mxu0 %v1465
      %v1547 = vpop.f32.mrb[0].mxu0
      %v1548 = vadd.f32 0.0, %v1547
      %v1549 = vpop.f32.mrb[0].mxu0
      %1550 = vmatprep.mubr.f32.mxu0 0.0
      %1551 = vmatmul.mubr.f32.gmra.mrb[0].mxu0 %v1466
      %v1552 = vpop.f32.mrb[0].mxu0
      %v1553 = vadd.f32 0.0, %v1552
      %v1554 = vpop.f32.mrb[0].mxu0
      %1555 = vmatprep.mubr.f32.mxu0 0.0
      %1556 = vmatmul.mubr.f32.gmra.mrb[0].mxu0 %v1467
      %v1557 = vpop.f32.mrb[0].mxu0
      %v1558 = vadd.f32 0.0, %v1557
      %v1559 = vpop.f32.mrb[0].mxu0
      %1560 = vmatprep.mubr.f32.mxu0 0.0
      %1561 = vmatmul.mubr.f32.gmra.mrb[0].mxu0 %v1468
      %v1562 = vpop.f32.mrb[0].mxu0
      %v1563 = vadd.f32 0.0, %v1562
      %v1564 = vpop.f32.mrb[0].mxu0
      %1565 = vmatprep.mubr.f32.mxu0 0.0
      %1566 = vmatmul.mubr.f32.gmra.mrb[0].mxu0 %v1469
      %v1567 = vpop.f32.mrb[0].mxu0
      %v1568 = vadd.f32 0.0, %v1567
      %v1569 = vpop.f32.mrb[0].mxu0
      %1570 = vmatprep.mubr.f32.mxu0 0.0
      %1571 = vmatmul.mubr.f32.gmra.mrb[0].mxu0 %v1470
      %v1572 = vpop.f32.mrb[0].mxu0
      %v1573 = vadd.f32 0.0, %v1572
      %v1574 = vpop.f32.mrb[0].mxu0
      %1575 = vdwg.mxu0
      %s1576 = scalar_lea.vmem %s387, 64
      %1577 = vst [vmem:[%s1576] sm:$0xff] %v1538
      %1578 = vst [vmem:[%s1576 + $0x8] sm:$0xff] %v1543
      %1579 = vst [vmem:[%s1576 + $0x10] sm:$0xff] %v1548
      %1580 = vst [vmem:[%s1576 + $0x18] sm:$0xff] %v1553
      %1581 = vst [vmem:[%s1576 + $0x20] sm:$0xff] %v1558
      %1582 = vst [vmem:[%s1576 + $0x28] sm:$0xff] %v1563
      %1583 = vst [vmem:[%s1576 + $0x30] sm:$0xff] %v1568
      %1584 = vst [vmem:[%s1576 + $0x38] sm:$0xff] %v1573
      %v1585 = vadd.f32 %v1538, %v1543
      %v1586 = vadd.f32 %v1585, %v1548
      %v1587 = vadd.f32 %v1586, %v1553
      %v1588 = vadd.f32 %v1587, %v1558
      %v1589 = vadd.f32 %v1588, %v1563
      %v1590 = vadd.f32 %v1589, %v1568
      %v1591 = vadd.f32 %v1590, %v1573
      %v1592 = vrot.slane %v1591, 4
      %v1593 = vadd.f32 %v1591, %v1592
      %v1594 = vrot.slane %v1593, 2
      %v1595 = vadd.f32 %v1593, %v1594
      %v1596 = vrot.slane %v1595, 1
      %v1597 = vadd.f32 %v1595, %v1596
      %v1598 = vadd.f32 %v1037, %v1597
      %v1599 = vmul.f32 %v1538, %v1538
      %v1600 = vmul.f32 %v1543, %v1543
      %v1601 = vmul.f32 %v1548, %v1548
      %v1602 = vmul.f32 %v1553, %v1553
      %v1603 = vmul.f32 %v1558, %v1558
      %v1604 = vmul.f32 %v1563, %v1563
      %v1605 = vmul.f32 %v1568, %v1568
      %v1606 = vmul.f32 %v1573, %v1573
      %v1607 = vadd.f32 %v1599, %v1600
      %v1608 = vadd.f32 %v1607, %v1601
      %v1609 = vadd.f32 %v1608, %v1602
      %v1610 = vadd.f32 %v1609, %v1603
      %v1611 = vadd.f32 %v1610, %v1604
      %v1612 = vadd.f32 %v1611, %v1605
      %v1613 = vadd.f32 %v1612, %v1606
      %v1614 = vrot.slane %v1613, 4
      %v1615 = vadd.f32 %v1613, %v1614
      %v1616 = vrot.slane %v1615, 2
      %v1617 = vadd.f32 %v1615, %v1616
      %v1618 = vrot.slane %v1617, 1
      %v1619 = vadd.f32 %v1617, %v1618
      %v1620 = vadd.f32 %v1059, %v1619
      %1621 = vst [vmem:[%s396] sm:$0x1] %v1598
      %1622 = vst [vmem:[%s404] sm:$0x1] %v1620
      %s1623 = smul.u32 8, %s23
      %p1624 = scmp.lt.s32.totalorder %s22, 1
      %s1625 = scalar_select %p1624, %s22, 1
      %p1626 = scmp.lt.s32.totalorder %s1623, 15
      %s1627 = scalar_select %p1626, %s1623, 15
      %s1628 = smul.addr %s1627, 2
      %s1629 = smul.addr %s1625, 32
      %s1630 = sadd.s32 %s1628, %s1629
      %s1631 = smul.addr %s1630, 8
      %s1632 = scalar_lea.vmem %s4, %s1631
      %p1633 = scmp.lt.s32.totalorder %s22, 1
      %s1634 = scalar_select %p1633, %s22, 1
      %p1635 = scmp.lt.s32.totalorder %s23, 1
      %s1636 = scalar_select %p1635, %s23, 1
      %s1637 = smul.addr %s1634, 2
      %s1638 = sadd.s32 %s1636, %s1637
      %s1639 = smul.addr %s1638, 8
      %s1640 = scalar_lea.vmem %s5, %s1639
      %p1641 = scmp.lt.s32.totalorder %s22, 1
      %s1642 = scalar_select %p1641, %s22, 1
      %p1643 = scmp.lt.s32.totalorder %s23, 1
      %s1644 = scalar_select %p1643, %s23, 1
      %s1645 = smul.addr %s1642, 2
      %s1646 = sadd.s32 %s1644, %s1645
      %s1647 = smul.addr %s1646, 8
      %s1648 = scalar_lea.vmem %s6, %s1647
      // Predicated region
      $region37: #{_lambda_.3} parent=35 // pred_check
        %p1649 = pneg %p155
      $region38: #{_lambda_.3} parent=35 // pred_check_branch
        %1651 = sbr.rel (%p1649) target = $region40
      $region39: #{_lambda_.3} parent=35 // pred_region
        %s1652 = smul.u32 8, %s23
      $region40: #{_lambda_.3} parent=35 // pred_fallthru
        _
      // Predicated region
      $region41: #{_lambda_.3} parent=35 // pred_check
        %p1653 = pneg %p183
      $region42: #{_lambda_.3} parent=35 // pred_check_branch
        %1655 = sbr.rel (%p1653) target = $region44
      $region43: #{_lambda_.3} parent=35 // pred_region
        _
      $region44: #{_lambda_.3} parent=35 // pred_fallthru
        _
      // Predicated region
      $region45: #{_lambda_.3} parent=35 // pred_check
        %p1656 = pneg %p211
      $region46: #{_lambda_.3} parent=35 // pred_check_branch
        %1658 = sbr.rel (%p1656) target = $region48
      $region47: #{_lambda_.3} parent=35 // pred_region
        _
      $region48: #{_lambda_.3} parent=35 // pred_fallthru
        _
    $region36: #{_lambda_.3} parent=5 // pred_fallthru
      _
    %p1659 = scmp.le.s32.totalorder 2, %s13
    // Predicated region
    $region49: #{_lambda_.3} parent=5 // pred_check
      %p1660 = pneg %p1659
    $region50: #{_lambda_.3} parent=5 // pred_check_branch
      %1662 = sbr.rel (%p1660) target = $region52
    $region51: #{_lambda_.3} parent=5 // pred_region
      %s1663 = ssub.s32 %s13, 2
      // Predicated region
      $region53: #{_lambda_.3} parent=51 // pred_check
        %p1664 = pneg %p161
      $region54: #{_lambda_.3} parent=51 // pred_check_branch
        %1666 = sbr.rel (%p1664) target = $region56
      $region55: #{_lambda_.3} parent=51 // pred_region
        %s1667 = smul.u32 8, %s25
        %p1668 = scmp.lt.s32.totalorder %s24, 1
        %s1669 = scalar_select %p1668, %s24, 1
        %p1670 = scmp.lt.s32.totalorder %s1667, 15
        %s1671 = scalar_select %p1670, %s1667, 15
        %s1672 = smul.addr %s1671, 2
        %s1673 = smul.addr %s1669, 32
        %s1674 = sadd.s32 %s1672, %s1673
        %s1675 = smul.addr %s1674, 8
        %s1676 = scalar_lea.vmem %s4, %s1675
      $region56: #{_lambda_.3} parent=51 // pred_fallthru
        _
      // Predicated region
      $region57: #{_lambda_.3} parent=51 // pred_check
        %p1677 = pneg %p189
      $region58: #{_lambda_.3} parent=51 // pred_check_branch
        %1679 = sbr.rel (%p1677) target = $region60
      $region59: #{_lambda_.3} parent=51 // pred_region
        %p1680 = scmp.lt.s32.totalorder %s24, 1
        %s1681 = scalar_select %p1680, %s24, 1
        %p1682 = scmp.lt.s32.totalorder %s25, 1
        %s1683 = scalar_select %p1682, %s25, 1
        %s1684 = smul.addr %s1681, 2
        %s1685 = sadd.s32 %s1683, %s1684
        %s1686 = smul.addr %s1685, 8
        %s1687 = scalar_lea.vmem %s5, %s1686
      $region60: #{_lambda_.3} parent=51 // pred_fallthru
        _
      // Predicated region
      $region61: #{_lambda_.3} parent=51 // pred_check
        %p1688 = pneg %p217
      $region62: #{_lambda_.3} parent=51 // pred_check_branch
        %1690 = sbr.rel (%p1688) target = $region64
      $region63: #{_lambda_.3} parent=51 // pred_region
        %p1691 = scmp.lt.s32.totalorder %s24, 1
        %s1692 = scalar_select %p1691, %s24, 1
        %p1693 = scmp.lt.s32.totalorder %s25, 1
        %s1694 = scalar_select %p1693, %s25, 1
        %s1695 = smul.addr %s1692, 2
        %s1696 = sadd.s32 %s1694, %s1695
        %s1697 = smul.addr %s1696, 8
        %s1698 = scalar_lea.vmem %s6, %s1697
      $region64: #{_lambda_.3} parent=51 // pred_fallthru
        _
    $region52: #{_lambda_.3} parent=5 // pred_fallthru
      _
  $region6: #{_lambda_.3} parent=0 // loop_footer
    %s17 = sadd.s32 1, %s13
  $region7: #{_lambda_.3} parent=0 // loop_footer_branch
    %12 = sbr.rel target = $region3
  $region8: #{_lambda_.3} parent=0 // loop_exit
    _

</llo_original>
